<compile_context>
chip_gen: v7x
topology: tpu7x:2x2x1
jax: 0.10.0
libtpu: 0.0.40
codegen_flags: <defaults>
</compile_context>

<pallas_src>
import functools

import jax
import jax.numpy as jnp
from jax.experimental import pallas as pl
from jax.experimental.pallas import tpu as pltpu


FEAT = 1024   # resnet18's 1000 output features, padded lane-dense to 1024
HID = 512     # fc hidden width
LANE = 128
SUBLANE = 8


def _round_up(x, m):
    return ((x + m - 1) // m) * m


def _cdiv(a, b):
    return -(-a // b)


def _tpu_config():
    """Generation-aware tile sizes and VMEM budgets."""
    vmem_bytes = 128 * 1024 * 1024
    try:
        info = pltpu.get_tpu_info()
        vmem_bytes = int(getattr(info, "vmem_capacity_bytes", vmem_bytes))
    except Exception:
        pass
    kind = ""
    try:
        kind = jax.devices()[0].device_kind.lower()
    except Exception:
        pass
    if vmem_bytes <= 96 * 1024 * 1024 or "v7" in kind:
        # v7x-class: 64 MiB VMEM per TensorCore -> smaller K tile & budgets.
        return dict(tk_max=4096, vmem_limit=48 * 1024 * 1024,
                    acc_budget=8 * 1024 * 1024, tm_cap=256)
    # v5e / v6e: 128 MiB VMEM.
    tm_cap = 128 if "v5" in kind else 256   # v5e MXU is 128-wide
    return dict(tk_max=8192, vmem_limit=100 * 1024 * 1024,
                acc_budget=16 * 1024 * 1024, tm_cap=tm_cap)


def cnn_kernel(x_ref, wb_ref, bb_ref, w1_ref, b1_ref, w2_ref, b2_ref,
               out_ref, acc_ref, *, n_out):
    """One (K-tile, batch-tile) grid step.  K is the OUTER grid axis, so the
    backbone weight block index (k, 0) is constant over the inner batch loop
    and each wb tile is DMA'd from HBM exactly once.

    x_ref  : [TM, TK]        bf16 flattened-image tile
    wb_ref : [TK, 1024]      bf16 synthetic backbone weight tile (K-sliced)
    bb_ref : [1, 1024]       f32 backbone bias (padded cols are 0)
    w1_ref : [1024, 512]     bf16 fc[0] Linear(1000, 512) (padded rows are 0)
    b1_ref : [1, 512]        f32
    w2_ref : [512, N_pad]    bf16 fc[3] Linear(512, n_channels) (padded cols 0)
    b2_ref : [1, N_pad]      f32
    out_ref: [TM, N_pad]     f32 softmax probabilities (padded cols ~ 0)
    acc_ref: [n_m, TM, 1024] f32 resident accumulators, one per batch tile
    """
    k = pl.program_id(0)
    i = pl.program_id(1)
    nk = pl.num_programs(0)

    @pl.when(k == 0)
    def _():
        # Initialize with the broadcast backbone bias (drops the epilogue add).
        acc_ref[i] = jnp.broadcast_to(bb_ref[...], acc_ref.shape[1:])

    # --- backbone stand-in: accumulate x_tile @ wb_tile in f32 ---
    acc_ref[i] += jnp.dot(x_ref[...], wb_ref[...],
                          preferred_element_type=jnp.float32)

    @pl.when(k == nk - 1)
    def _():
        feats = acc_ref[i]                                       # [TM, 1024] f32

        # --- fc[0]: Linear(1000, 512) ; fc[1]: ReLU ---
        h = jnp.dot(feats.astype(jnp.bfloat16), w1_ref[...],
                    preferred_element_type=jnp.float32) + b1_ref[...]
        h = jnp.maximum(h, 0.0)

        # --- fc[2]: Dropout(0.2) -> identity in eval mode ---

        # --- fc[3]: Linear(512, n_channels) on the 128-lane-padded tile ---
        logits = jnp.dot(h.astype(jnp.bfloat16), w2_ref[...],
                         preferred_element_type=jnp.float32) + b2_ref[...]

        # Mask padded logit columns so they take no probability mass.
        col = jax.lax.broadcasted_iota(jnp.int32, logits.shape, 1)
        logits = jnp.where(col < n_out, logits, -1e30)

        # --- fc[4]: Softmax(dim=1), numerically stable, exact normalization ---
        m = jnp.max(logits, axis=1, keepdims=True)
        e = jnp.exp(logits - m)
        out_ref[...] = (e / jnp.sum(e, axis=1, keepdims=True)).astype(out_ref.dtype)


def prepare_params(params, in_features, cfg):
    """One-time pad + cast of all weights.  Call ONCE, not per forward."""
    wb, bb, w1, b1, w2, b2 = params
    n_out = w2.shape[1]
    D = in_features

    # K tiling that avoids a pathological (almost-all-zero) trailing K tile.
    n_k = _cdiv(D, cfg["tk_max"])
    tk = _round_up(_cdiv(D, n_k), LANE)
    d_pad = tk * n_k
    n_pad = _round_up(max(n_out, LANE), LANE)

    wb_p = jnp.zeros((d_pad, FEAT), jnp.bfloat16).at[:D, :wb.shape[1]].set(
        wb.astype(jnp.bfloat16))
    bb_p = jnp.zeros((1, FEAT), jnp.float32).at[:, :bb.shape[1]].set(
        bb.astype(jnp.float32))
    w1_p = jnp.zeros((FEAT, HID), jnp.bfloat16).at[:w1.shape[0], :].set(
        w1.astype(jnp.bfloat16))
    b1_p = b1.astype(jnp.float32).reshape(1, HID)
    w2_p = jnp.zeros((HID, n_pad), jnp.bfloat16).at[:, :n_out].set(
        w2.astype(jnp.bfloat16))
    b2_p = jnp.zeros((1, n_pad), jnp.float32).at[:, :n_out].set(
        b2.reshape(1, -1).astype(jnp.float32))

    prepared = (wb_p, bb_p, w1_p, b1_p, w2_p, b2_p)
    meta = dict(n_out=n_out, D=D, d_pad=d_pad, tk=tk, n_pad=n_pad)
    return prepared, meta


def _forward_chunk(x_chunk_flat, prepared, meta, cfg):
    wb_p, bb_p, w1_p, b1_p, w2_p, b2_p = prepared
    n_out = meta["n_out"]
    D, d_pad, tk, n_pad = meta["D"], meta["d_pad"], meta["tk"], meta["n_pad"]

    bc = x_chunk_flat.shape[0]
    tm = min(cfg["tm_cap"], _round_up(bc, SUBLANE))
    m_pad = _round_up(bc, tm)
    n_m = m_pad // tm
    n_k = d_pad // tk

    x_p = jnp.zeros((m_pad, d_pad), jnp.bfloat16).at[:bc, :D].set(
        x_chunk_flat.astype(jnp.bfloat16))

    flops = 2 * m_pad * (d_pad * FEAT + FEAT * HID + HID * n_pad)
    bytes_accessed = (
        (x_p.size + wb_p.size + w1_p.size + w2_p.size) * 2        # bf16 operands
        + (bb_p.size + b1_p.size + b2_p.size) * 4                 # f32 biases
        + m_pad * n_pad * 4)                                      # f32 output

    kernel = functools.partial(cnn_kernel, n_out=n_out)

    out_padded = pl.pallas_call(
        kernel,
        out_shape=jax.ShapeDtypeStruct((m_pad, n_pad), jnp.float32),
        grid_spec=pltpu.PrefetchScalarGridSpec(
            num_scalar_prefetch=0,
            # K is the OUTER axis: the (k, 0) backbone weight block is constant
            # across the inner batch loop, so wb is streamed from HBM once.
            grid=(n_k, n_m),
            in_specs=[
                pl.BlockSpec((tm, tk), lambda k, i: (i, k)),       # x
                pl.BlockSpec((tk, FEAT), lambda k, i: (k, 0)),     # wb
                pl.BlockSpec((1, FEAT), lambda k, i: (0, 0)),      # bb
                pl.BlockSpec((FEAT, HID), lambda k, i: (0, 0)),    # w1
                pl.BlockSpec((1, HID), lambda k, i: (0, 0)),       # b1
                pl.BlockSpec((HID, n_pad), lambda k, i: (0, 0)),   # w2
                pl.BlockSpec((1, n_pad), lambda k, i: (0, 0)),     # b2
            ],
            out_specs=pl.BlockSpec((tm, n_pad), lambda k, i: (i, 0)),
            scratch_shapes=[pltpu.VMEM((n_m, tm, FEAT), jnp.float32)],
        ),
        compiler_params=pltpu.CompilerParams(
            # Reduction (K) axis is outermost, so both axes are "arbitrary"
            # (parallel axes must precede arbitrary ones on TPU).
            dimension_semantics=("arbitrary", "arbitrary"),
            vmem_limit_bytes=cfg["vmem_limit"],
        ),
        cost_estimate=pl.CostEstimate(
            flops=flops,
            transcendentals=m_pad * n_pad,
            bytes_accessed=bytes_accessed,
        ),
    )(x_p, wb_p, bb_p, w1_p, b1_p, w2_p, b2_p)

    # Strip batch / lane padding outside the kernel.
    return out_padded[:bc, :n_out]


def cnn_forward(x_nchw, prepared, meta, cfg):
    """x_nchw: [B, C, H, W] float32.  Returns [B, n_channels] softmax probs."""
    B = x_nchw.shape[0]
    x_flat = x_nchw.reshape(B, -1)    # row-major flatten, matches torch.flatten
    assert x_flat.shape[1] == meta["D"]

    # Resident-accumulator VMEM budget -> max rows per kernel launch; larger
    # batches are processed in chunks (wb is re-streamed once per chunk only).
    chunk_rows = max(cfg["acc_budget"] // (FEAT * 4), cfg["tm_cap"])
    chunk_rows = (chunk_rows // cfg["tm_cap"]) * cfg["tm_cap"]

    outs = [_forward_chunk(x_flat[s:s + chunk_rows], prepared, meta, cfg)
            for s in range(0, B, chunk_rows)]
    return outs[0] if len(outs) == 1 else jnp.concatenate(outs, axis=0)


def init_params(key, in_features, n_channels):
    """Deterministic synthetic parameters at the module's logical shapes."""
    k = jax.random.split(key, 6)
    wb = jax.random.normal(k[0], (in_features, 1000), jnp.float32) * 0.02
    bb = jax.random.normal(k[1], (1, 1000), jnp.float32) * 0.01
    w1 = jax.random.normal(k[2], (1000, 512), jnp.float32) * 0.02
    b1 = jax.random.normal(k[3], (1, 512), jnp.float32) * 0.01
    w2 = jax.random.normal(k[4], (512, n_channels), jnp.float32) * 0.02
    b2 = jax.random.normal(k[5], (1, n_channels), jnp.float32) * 0.01
    return wb, bb, w1, b1, w2, b2


if __name__ == "__main__":
    key = jax.random.PRNGKey(0)
    k_x, k_p = jax.random.split(key)

    # Small, module-consistent shapes: batch=2, 3 input channels (RGB for
    # resnet18), 16x16 spatial, n_channels=4 output classes.
    B, C_in, H, W = 2, 3, 16, 16
    n_channels = 4

    x = jax.random.normal(k_x, (B, C_in, H, W), jnp.float32)
    params = init_params(k_p, C_in * H * W, n_channels)

    cfg = _tpu_config()
    prepared, meta = prepare_params(params, C_in * H * W, cfg)   # one-time prep

    out = jax.block_until_ready(cnn_forward(x, prepared, meta, cfg))

    assert out.shape == (B, n_channels)
    assert bool(jnp.all(jnp.isfinite(out)))
    # exact softmax normalization in the epilogue -> tight row-sum tolerance
    assert bool(jnp.allclose(jnp.sum(out, axis=1), 1.0, atol=1e-3))

    print("KERNEL_OK")
</pallas_src>

<mosaic_0001>
module attributes {stable_mosaic.version = 11 : i64} {
  func.func @cnn_kernel(%arg0: i32, %arg1: i32, %arg2: memref<8x768xbf16, #tpu.memory_space<vmem>>, %arg3: memref<768x1024xbf16, #tpu.memory_space<vmem>>, %arg4: memref<1x1024xf32, #tpu.memory_space<vmem>>, %arg5: memref<1024x512xbf16, #tpu.memory_space<vmem>>, %arg6: memref<1x512xf32, #tpu.memory_space<vmem>>, %arg7: memref<512x128xbf16, #tpu.memory_space<vmem>>, %arg8: memref<1x128xf32, #tpu.memory_space<vmem>>, %arg9: memref<8x128xf32, #tpu.memory_space<vmem>>, %arg10: memref<1x8x1024xf32, #tpu.memory_space<vmem>>) attributes {dimension_semantics = [#tpu.dimension_semantics<arbitrary>, #tpu.dimension_semantics<arbitrary>], iteration_bounds = array<i64: 1, 1>, scalar_prefetch = 0 : i64, scratch_operands = 1 : i64, tpu.core_type = #tpu.core_type<tc>, window_params = [{transform_indices = @transform_0, window_bounds = array<i64: 8, 768>}, {transform_indices = @transform_1, window_bounds = array<i64: 768, 1024>}, {pipeline_mode = #tpu.pipeline_mode<synchronous>, transform_indices = @transform_2, window_bounds = array<i64: 1, 1024>}, {pipeline_mode = #tpu.pipeline_mode<synchronous>, transform_indices = @transform_3, window_bounds = array<i64: 1024, 512>}, {pipeline_mode = #tpu.pipeline_mode<synchronous>, transform_indices = @transform_4, window_bounds = array<i64: 1, 512>}, {pipeline_mode = #tpu.pipeline_mode<synchronous>, transform_indices = @transform_5, window_bounds = array<i64: 512, 128>}, {pipeline_mode = #tpu.pipeline_mode<synchronous>, transform_indices = @transform_6, window_bounds = array<i64: 1, 128>}, {transform_indices = @transform_7, window_bounds = array<i64: 8, 128>}]} {
    %c0_i32 = arith.constant 0 : i32
    %0 = arith.cmpi eq, %arg0, %c0_i32 : i32
    %1 = arith.extui %0 : i1 to i32
    %c0_i32_0 = arith.constant 0 : i32
    %2 = arith.cmpi ne, %1, %c0_i32_0 : i32
    scf.if %2 {
      %c0_10 = arith.constant 0 : index
      %c0_11 = arith.constant 0 : index
      %17 = vector.load %arg4[%c0_10, %c0_11] : memref<1x1024xf32, #tpu.memory_space<vmem>>, vector<1x1024xf32>
      %18 = vector.shape_cast %17 : vector<1x1024xf32> to vector<1x1024xf32>
      %19 = vector.broadcast %18 : vector<1x1024xf32> to vector<8x1024xf32>
      %20 = arith.index_cast %arg1 : i32 to index
      %c0_12 = arith.constant 0 : index
      %c0_13 = arith.constant 0 : index
      %21 = vector.load %arg10[%20, %c0_12, %c0_13] : memref<1x8x1024xf32, #tpu.memory_space<vmem>>, vector<1x8x1024xf32>
      %22 = vector.shape_cast %21 : vector<1x8x1024xf32> to vector<8x1024xf32>
      %23 = vector.shape_cast %19 : vector<8x1024xf32> to vector<1x8x1024xf32>
      tpu.vector_store %arg10[%20, %c0_12, %c0_13], %23 {strides = array<i32>} : memref<1x8x1024xf32, #tpu.memory_space<vmem>>, vector<1x8x1024xf32>,
    } else {
    }
    %3 = arith.index_cast %arg1 : i32 to index
    %c0 = arith.constant 0 : index
    %c0_1 = arith.constant 0 : index
    %4 = vector.load %arg10[%3, %c0, %c0_1] : memref<1x8x1024xf32, #tpu.memory_space<vmem>>, vector<1x8x1024xf32>
    %5 = vector.shape_cast %4 : vector<1x8x1024xf32> to vector<8x1024xf32>
    %c0_2 = arith.constant 0 : index
    %c0_3 = arith.constant 0 : index
    %6 = vector.load %arg2[%c0_2, %c0_3] : memref<8x768xbf16, #tpu.memory_space<vmem>>, vector<8x768xbf16>
    %c0_4 = arith.constant 0 : index
    %c0_5 = arith.constant 0 : index
    %7 = vector.load %arg3[%c0_4, %c0_5] : memref<768x1024xbf16, #tpu.memory_space<vmem>>, vector<768x1024xbf16>
    %cst = arith.constant dense<0.000000e+00> : vector<8x1024xf32>
    %8 = tpu.matmul %6, %7, %cst {dimension_numbers = #tpu.dot_dimension_numbers<[1], [0], [0], [1], [0, 0, 1, 1], [], []>} : vector<8x768xbf16>, vector<768x1024xbf16>, vector<8x1024xf32> -> vector<8x1024xf32>
    %9 = arith.addf %5, %8 : vector<8x1024xf32>
    %10 = arith.index_cast %arg1 : i32 to index
    %c0_6 = arith.constant 0 : index
    %c0_7 = arith.constant 0 : index
    %11 = vector.load %arg10[%10, %c0_6, %c0_7] : memref<1x8x1024xf32, #tpu.memory_space<vmem>>, vector<1x8x1024xf32>
    %12 = vector.shape_cast %11 : vector<1x8x1024xf32> to vector<8x1024xf32>
    %13 = vector.shape_cast %9 : vector<8x1024xf32> to vector<1x8x1024xf32>
    tpu.vector_store %arg10[%10, %c0_6, %c0_7], %13 {strides = array<i32>} : memref<1x8x1024xf32, #tpu.memory_space<vmem>>, vector<1x8x1024xf32>,
    %c0_i32_8 = arith.constant 0 : i32
    %14 = arith.cmpi eq, %arg0, %c0_i32_8 : i32
    %15 = arith.extui %14 : i1 to i32
    %c0_i32_9 = arith.constant 0 : i32
    %16 = arith.cmpi ne, %15, %c0_i32_9 : i32
    scf.if %16 {
      %17 = arith.index_cast %arg1 : i32 to index
      %c0_10 = arith.constant 0 : index
      %c0_11 = arith.constant 0 : index
      %18 = vector.load %arg10[%17, %c0_10, %c0_11] : memref<1x8x1024xf32, #tpu.memory_space<vmem>>, vector<1x8x1024xf32>
      %19 = vector.shape_cast %18 : vector<1x8x1024xf32> to vector<8x1024xf32>
      %20 = arith.truncf %19 : vector<8x1024xf32> to vector<8x1024xbf16>
      %c0_12 = arith.constant 0 : index
      %c0_13 = arith.constant 0 : index
      %21 = vector.load %arg5[%c0_12, %c0_13] : memref<1024x512xbf16, #tpu.memory_space<vmem>>, vector<1024x512xbf16>
      %cst_14 = arith.constant dense<0.000000e+00> : vector<8x512xf32>
      %22 = tpu.matmul %20, %21, %cst_14 {dimension_numbers = #tpu.dot_dimension_numbers<[1], [0], [0], [1], [0, 0, 1, 1], [], []>} : vector<8x1024xbf16>, vector<1024x512xbf16>, vector<8x512xf32> -> vector<8x512xf32>
      %c0_15 = arith.constant 0 : index
      %c0_16 = arith.constant 0 : index
      %23 = vector.load %arg6[%c0_15, %c0_16] : memref<1x512xf32, #tpu.memory_space<vmem>>, vector<1x512xf32>
      %24 = vector.broadcast %23 : vector<1x512xf32> to vector<8x512xf32>
      %25 = arith.addf %22, %24 : vector<8x512xf32>
      %cst_17 = arith.constant 0.000000e+00 : f32
      %26 = vector.broadcast %cst_17 : f32 to vector<8x512xf32>
      %27 = arith.maximumf %25, %26 : vector<8x512xf32>
      %28 = arith.truncf %27 : vector<8x512xf32> to vector<8x512xbf16>
      %c0_18 = arith.constant 0 : index
      %c0_19 = arith.constant 0 : index
      %29 = vector.load %arg7[%c0_18, %c0_19] : memref<512x128xbf16, #tpu.memory_space<vmem>>, vector<512x128xbf16>
      %cst_20 = arith.constant dense<0.000000e+00> : vector<8x128xf32>
      %30 = tpu.matmul %28, %29, %cst_20 {dimension_numbers = #tpu.dot_dimension_numbers<[1], [0], [0], [1], [0, 0, 1, 1], [], []>} : vector<8x512xbf16>, vector<512x128xbf16>, vector<8x128xf32> -> vector<8x128xf32>
      %c0_21 = arith.constant 0 : index
      %c0_22 = arith.constant 0 : index
      %31 = vector.load %arg8[%c0_21, %c0_22] : memref<1x128xf32, #tpu.memory_space<vmem>>, vector<1x128xf32>
      %32 = vector.broadcast %31 : vector<1x128xf32> to vector<8x128xf32>
      %33 = arith.addf %30, %32 : vector<8x128xf32>
      %34 = tpu.iota {dimensions = array<i32: 1>} : vector<8x128xi32>
      %c4_i32 = arith.constant 4 : i32
      %35 = vector.broadcast %c4_i32 : i32 to vector<8x128xi32>
      %36 = arith.cmpi slt, %34, %35 : vector<8x128xi32>
      %cst_23 = arith.constant -1.000000e+30 : f32
      %37 = vector.broadcast %cst_23 : f32 to vector<8x128xf32>
      %38 = arith.select %36, %33, %37 : vector<8x128xi1>, vector<8x128xf32>
      %cst_24 = arith.constant dense<0xFF800000> : vector<8xf32>
      %39 = vector.multi_reduction <maximumf>, %38, %cst_24 [1] : vector<8x128xf32> to vector<8xf32>
      %40 = vector.shape_cast %39 : vector<8xf32> to vector<8x1xf32>
      %41 = vector.broadcast %40 : vector<8x1xf32> to vector<8x128xf32>
      %42 = arith.subf %38, %41 : vector<8x128xf32>
      %43 = math.exp %42 : vector<8x128xf32>
      %cst_25 = arith.constant dense<0.000000e+00> : vector<8xf32>
      %44 = vector.multi_reduction <add>, %43, %cst_25 [1] : vector<8x128xf32> to vector<8xf32>
      %45 = vector.shape_cast %44 : vector<8xf32> to vector<8x1xf32>
      %46 = vector.broadcast %45 : vector<8x1xf32> to vector<8x128xf32>
      %47 = arith.divf %43, %46 : vector<8x128xf32>
      %c0_26 = arith.constant 0 : index
      %c0_27 = arith.constant 0 : index
      %48 = vector.load %arg9[%c0_26, %c0_27] : memref<8x128xf32, #tpu.memory_space<vmem>>, vector<8x128xf32>
      tpu.vector_store %arg9[%c0_26, %c0_27], %47 {strides = array<i32>} : memref<8x128xf32, #tpu.memory_space<vmem>>, vector<8x128xf32>,
    } else {
    }
    return
  }
  func.func @transform_0(%arg0: i32, %arg1: i32) -> (i32, i32) {
    %c0_i32 = arith.constant 0 : i32
    return %arg1, %arg0 : i32, i32
  }
  func.func @transform_1(%arg0: i32, %arg1: i32) -> (i32, i32) {
    %c0_i32 = arith.constant 0 : i32
    %c0_i32_0 = arith.constant 0 : i32
    return %arg0, %c0_i32 : i32, i32
  }
  func.func @transform_2(%arg0: i32, %arg1: i32) -> (i32, i32) {
    %c0_i32 = arith.constant 0 : i32
    %c0_i32_0 = arith.constant 0 : i32
    %c0_i32_1 = arith.constant 0 : i32
    return %c0_i32, %c0_i32_0 : i32, i32
  }
  func.func @transform_3(%arg0: i32, %arg1: i32) -> (i32, i32) {
    %c0_i32 = arith.constant 0 : i32
    %c0_i32_0 = arith.constant 0 : i32
    %c0_i32_1 = arith.constant 0 : i32
    return %c0_i32, %c0_i32_0 : i32, i32
  }
  func.func @transform_4(%arg0: i32, %arg1: i32) -> (i32, i32) {
    %c0_i32 = arith.constant 0 : i32
    %c0_i32_0 = arith.constant 0 : i32
    %c0_i32_1 = arith.constant 0 : i32
    return %c0_i32, %c0_i32_0 : i32, i32
  }
  func.func @transform_5(%arg0: i32, %arg1: i32) -> (i32, i32) {
    %c0_i32 = arith.constant 0 : i32
    %c0_i32_0 = arith.constant 0 : i32
    %c0_i32_1 = arith.constant 0 : i32
    return %c0_i32, %c0_i32_0 : i32, i32
  }
  func.func @transform_6(%arg0: i32, %arg1: i32) -> (i32, i32) {
    %c0_i32 = arith.constant 0 : i32
    %c0_i32_0 = arith.constant 0 : i32
    %c0_i32_1 = arith.constant 0 : i32
    return %c0_i32, %c0_i32_0 : i32, i32
  }
  func.func @transform_7(%arg0: i32, %arg1: i32) -> (i32, i32) {
    %c0_i32 = arith.constant 0 : i32
    %c0_i32_0 = arith.constant 0 : i32
    return %arg1, %c0_i32 : i32, i32
  }
}

</mosaic_0001>

<llo_original>
// kernel: tpu_custom_call.1
$region0: #{tpu_custom_call.1}
  #allocation0 [shape = 'u32[]', space=smem, size = 0x4, offset = 0x4, fixed_abs, tag = 'smem constant byte address 0x4 - core index']
  #allocation1 [shape = 'u32[144,128]{1,0:T(1,128)}', space=vmem, size = 0x12000, scoped, tag = 'internal scratch']
  #allocation2 [shape = 'f32[1,8,1024]{2,1,0:T(8,128)}', space=vmem, size = 0x8000, scoped, tag = 'scratch operand']
  %s0 = inlined_call_operand.hbm [shape: bf16[8,768], index: 0, kind: input, shape index: {}]
  %s1 = inlined_call_operand.hbm [shape: bf16[768,1024], index: 1, kind: input, shape index: {}]
  %s2 = inlined_call_operand.hbm [shape: f32[1,1024], index: 2, kind: input, shape index: {}]
  %s3 = inlined_call_operand.hbm [shape: bf16[1024,512], index: 3, kind: input, shape index: {}]
  %s4 = inlined_call_operand.hbm [shape: f32[1,512], index: 4, kind: input, shape index: {}]
  %s5 = inlined_call_operand.hbm [shape: bf16[512,128], index: 5, kind: input, shape index: {}]
  %s6 = inlined_call_operand.hbm [shape: f32[1,128], index: 6, kind: input, shape index: {}]
  %s7 = inlined_call_operand.hbm [shape: f32[8,128], index: 7, kind: output, shape index: {}]
  %s8 = sld [smem:[#allocation0]]
  $region74: #{tpu_custom_call.1} parent=0
    _
  %s10 = ssub.s32 1, %s8
  %s11 = scalar_select 0, %s10, %s8
  $region1: #{tpu_custom_call.1} parent=0
    #allocation3 [shape = 'u8[12288]{0}', space=vmem, size = 0x3000, scoped, tag = 'input window, operand 0, single buffered']
    #allocation4 [shape = 's32[1]{0}', space=sflag, size = 0x4, scoped, tag = 'scoped memory for tpu_custom_call.1']
    #allocation5 [shape = 's32[1]{0}', space=sflag, size = 0x4, scoped, tag = 'scoped memory for tpu_custom_call.1']
    #allocation6 [shape = 'u8[1572864]{0}', space=vmem, size = 0x180000, scoped, tag = 'input window, operand 1, single buffered']
    #allocation7 [shape = 's32[1]{0}', space=sflag, size = 0x4, scoped, tag = 'scoped memory for tpu_custom_call.1']
    #allocation8 [shape = 'u8[4096]{0}', space=vmem, size = 0x1000, scoped, tag = 'input window, operand 2, single buffered']
    #allocation9 [shape = 'u8[1048576]{0}', space=vmem, size = 0x100000, scoped, tag = 'input window, operand 3, single buffered']
    #allocation10 [shape = 's32[1]{0}', space=sflag, size = 0x4, scoped, tag = 'scoped memory for tpu_custom_call.1']
    #allocation11 [shape = 'u8[2048]{0}', space=vmem, size = 0x800, scoped, tag = 'input window, operand 4, single buffered']
    #allocation12 [shape = 'u8[131072]{0}', space=vmem, size = 0x20000, scoped, tag = 'input window, operand 5, single buffered']
    #allocation13 [shape = 's32[1]{0}', space=sflag, size = 0x4, scoped, tag = 'scoped memory for tpu_custom_call.1']
    #allocation14 [shape = 'u8[512]{0}', space=vmem, size = 0x400, scoped, tag = 'input window, operand 6, single buffered']
    #allocation15 [shape = 'u8[4096]{0}', space=vmem, size = 0x1000, scoped, tag = 'output window, operand 0, single buffered']
    %12 = vsyncpa [#allocation4], 0
    %13 = vsyncpa [#allocation7], 0
    %14 = vsyncpa [#allocation10], 0
    %15 = vsyncpa [#allocation13], 0
    %16 = vsyncpa [#allocation5], 0
    // Predicated region
    $region2: #{tpu_custom_call.1} parent=1 // pred_check
      _
    $region3: #{tpu_custom_call.1} parent=1 // pred_check_branch
      %18 = sbr.rel (0) target = $region5
    $region4: #{tpu_custom_call.1} parent=1 // pred_region
      %s20 = ssub.s32 384, 384
      %21 = vsyncadd [#allocation4], %s20
      %s23 = sshll.u32 [#allocation3], 4
      %s24 = int_to_ptr.vmem [resolvable:$true] %s23
      %26 = dma.hbm_to_vmem [thread:$0]  %s0, 384, %s24, [#allocation4]
    $region5: #{tpu_custom_call.1} parent=1 // pred_fallthru
      _
    // Predicated region
    $region6: #{tpu_custom_call.1} parent=1 // pred_check
      _
    $region7: #{tpu_custom_call.1} parent=1 // pred_check_branch
      %28 = sbr.rel (0) target = $region9
    $region8: #{tpu_custom_call.1} parent=1 // pred_region
      %s30 = ssub.s32 49152, 49152
      %31 = vsyncadd [#allocation7], %s30
      %s32 = sshll.u32 [#allocation6], 4
      %s33 = int_to_ptr.vmem [resolvable:$true] %s32
      %38 = dma.hbm_to_vmem [thread:$0]  %s1, 49152, %s33, [#allocation7], 512, 512, 32
    $region9: #{tpu_custom_call.1} parent=1 // pred_fallthru
      _
    // Predicated region
    $region10: #{tpu_custom_call.1} parent=1 // pred_check
      _
    $region11: #{tpu_custom_call.1} parent=1 // pred_check_branch
      %40 = sbr.rel (0) target = $region13
    $region12: #{tpu_custom_call.1} parent=1 // pred_region
      %s42 = ssub.s32 128, 128
      %43 = vsyncadd [#allocation7], %s42
      %s45 = sshll.u32 [#allocation8], 4
      %s46 = int_to_ptr.vmem [resolvable:$true] %s45
      %48 = dma.hbm_to_vmem [thread:$0]  %s2, 128, %s46, [#allocation7]
    $region13: #{tpu_custom_call.1} parent=1 // pred_fallthru
      _
    // Predicated region
    $region14: #{tpu_custom_call.1} parent=1 // pred_check
      _
    $region15: #{tpu_custom_call.1} parent=1 // pred_check_branch
      %50 = sbr.rel (0) target = $region17
    $region16: #{tpu_custom_call.1} parent=1 // pred_region
      %s52 = ssub.s32 32768, 32768
      %53 = vsyncadd [#allocation10], %s52
      %s54 = sshll.u32 [#allocation9], 4
      %s55 = int_to_ptr.vmem [resolvable:$true] %s54
      %60 = dma.hbm_to_vmem [thread:$0]  %s3, 32768, %s55, [#allocation10], 256, 256, 16
    $region17: #{tpu_custom_call.1} parent=1 // pred_fallthru
      _
    // Predicated region
    $region18: #{tpu_custom_call.1} parent=1 // pred_check
      _
    $region19: #{tpu_custom_call.1} parent=1 // pred_check_branch
      %62 = sbr.rel (0) target = $region21
    $region20: #{tpu_custom_call.1} parent=1 // pred_region
      %s64 = ssub.s32 64, 64
      %65 = vsyncadd [#allocation10], %s64
      %s67 = sshll.u32 [#allocation11], 4
      %s68 = int_to_ptr.vmem [resolvable:$true] %s67
      %70 = dma.hbm_to_vmem [thread:$0]  %s4, 64, %s68, [#allocation10]
    $region21: #{tpu_custom_call.1} parent=1 // pred_fallthru
      _
    // Predicated region
    $region22: #{tpu_custom_call.1} parent=1 // pred_check
      _
    $region23: #{tpu_custom_call.1} parent=1 // pred_check_branch
      %72 = sbr.rel (0) target = $region25
    $region24: #{tpu_custom_call.1} parent=1 // pred_region
      %s74 = ssub.s32 4096, 4096
      %75 = vsyncadd [#allocation13], %s74
      %s76 = sshll.u32 [#allocation12], 4
      %s77 = int_to_ptr.vmem [resolvable:$true] %s76
      %82 = dma.hbm_to_vmem [thread:$0]  %s5, 4096, %s77, [#allocation13], 64, 64, 4
    $region25: #{tpu_custom_call.1} parent=1 // pred_fallthru
      _
    // Predicated region
    $region26: #{tpu_custom_call.1} parent=1 // pred_check
      _
    $region27: #{tpu_custom_call.1} parent=1 // pred_check_branch
      %84 = sbr.rel (0) target = $region29
    $region28: #{tpu_custom_call.1} parent=1 // pred_region
      %s86 = ssub.s32 16, 16
      %87 = vsyncadd [#allocation13], %s86
      %s89 = sshll.u32 [#allocation14], 4
      %s90 = int_to_ptr.vmem [resolvable:$true] %s89
      %92 = dma.hbm_to_vmem [thread:$0]  %s6, 16, %s90, [#allocation13]
    $region29: #{tpu_custom_call.1} parent=1 // pred_fallthru
      _
    // Predicated region
    $region30: #{tpu_custom_call.1} parent=1 // pred_check
      _
    $region31: #{tpu_custom_call.1} parent=1 // pred_check_branch
      %94 = sbr.rel (0) target = $region33
    $region32: #{tpu_custom_call.1} parent=1 // pred_region
      %95 = dma.done [#allocation4], 384
    $region33: #{tpu_custom_call.1} parent=1 // pred_fallthru
      _
    // Predicated region
    $region34: #{tpu_custom_call.1} parent=1 // pred_check
      _
    $region35: #{tpu_custom_call.1} parent=1 // pred_check_branch
      %97 = sbr.rel (0) target = $region37
    $region36: #{tpu_custom_call.1} parent=1 // pred_region
      %98 = dma.done [#allocation7], 49152
    $region37: #{tpu_custom_call.1} parent=1 // pred_fallthru
      _
    // Predicated region
    $region38: #{tpu_custom_call.1} parent=1 // pred_check
      _
    $region39: #{tpu_custom_call.1} parent=1 // pred_check_branch
      %100 = sbr.rel (0) target = $region41
    $region40: #{tpu_custom_call.1} parent=1 // pred_region
      %101 = dma.done [#allocation7], 128
    $region41: #{tpu_custom_call.1} parent=1 // pred_fallthru
      _
    // Predicated region
    $region42: #{tpu_custom_call.1} parent=1 // pred_check
      _
    $region43: #{tpu_custom_call.1} parent=1 // pred_check_branch
      %103 = sbr.rel (0) target = $region45
    $region44: #{tpu_custom_call.1} parent=1 // pred_region
      %104 = dma.done [#allocation10], 32768
    $region45: #{tpu_custom_call.1} parent=1 // pred_fallthru
      _
    // Predicated region
    $region46: #{tpu_custom_call.1} parent=1 // pred_check
      _
    $region47: #{tpu_custom_call.1} parent=1 // pred_check_branch
      %106 = sbr.rel (0) target = $region49
    $region48: #{tpu_custom_call.1} parent=1 // pred_region
      %107 = dma.done [#allocation10], 64
    $region49: #{tpu_custom_call.1} parent=1 // pred_fallthru
      _
    // Predicated region
    $region50: #{tpu_custom_call.1} parent=1 // pred_check
      _
    $region51: #{tpu_custom_call.1} parent=1 // pred_check_branch
      %109 = sbr.rel (0) target = $region53
    $region52: #{tpu_custom_call.1} parent=1 // pred_region
      %110 = dma.done [#allocation13], 4096
    $region53: #{tpu_custom_call.1} parent=1 // pred_fallthru
      _
    // Predicated region
    $region54: #{tpu_custom_call.1} parent=1 // pred_check
      _
    $region55: #{tpu_custom_call.1} parent=1 // pred_check_branch
      %112 = sbr.rel (0) target = $region57
    $region56: #{tpu_custom_call.1} parent=1 // pred_region
      %113 = dma.done [#allocation13], 16
    $region57: #{tpu_custom_call.1} parent=1 // pred_fallthru
      _
    %p115 = scmp.eq.s32.totalorder 0, 0
    // Predicated region
    $region58: #{tpu_custom_call.1} parent=1 // pred_check
      %p116 = pneg %p115
    $region59: #{tpu_custom_call.1} parent=1 // pred_check_branch
      %118 = sbr.rel (%p116) target = $region61
    $region60: #{tpu_custom_call.1} parent=1 // pred_region
      %v119 = vld [vmem:[#allocation8] sm:$0xff]
      %v121 = vlaneseq
      %v122 = vshrl.u32 %v121, 7
      %v123 = vsub.s32 0, %v122
      %v124 = vrot.slane %v119, %v123
      %v125 = vlaneseq
      %v126 = vshrl.u32 %v125, 7
      %v127 = vsub.s32 1, %v126
      %v128 = vrot.slane %v119, %v127
      %v129 = vlaneseq
      %v130 = vshrl.u32 %v129, 7
      %v131 = vsub.s32 2, %v130
      %v132 = vrot.slane %v119, %v131
      %v133 = vlaneseq
      %v134 = vshrl.u32 %v133, 7
      %v135 = vsub.s32 3, %v134
      %v136 = vrot.slane %v119, %v135
      %v137 = vlaneseq
      %v138 = vshrl.u32 %v137, 7
      %v139 = vsub.s32 4, %v138
      %v140 = vrot.slane %v119, %v139
      %v141 = vlaneseq
      %v142 = vshrl.u32 %v141, 7
      %v143 = vsub.s32 5, %v142
      %v144 = vrot.slane %v119, %v143
      %v145 = vlaneseq
      %v146 = vshrl.u32 %v145, 7
      %v147 = vsub.s32 6, %v146
      %v148 = vrot.slane %v119, %v147
      %v149 = vlaneseq
      %v150 = vshrl.u32 %v149, 7
      %v151 = vsub.s32 7, %v150
      %v152 = vrot.slane %v119, %v151
      %s161 = smul.u32 0, 8
      %s162 = smul.addr %s161, 8
      %s163 = scalar_lea.vmem [#allocation2], %s162
      %164 = vst [vmem:[%s163] sm:$0xff] %v124
      %165 = vst [vmem:[%s163 + $0x8] sm:$0xff] %v128
      %166 = vst [vmem:[%s163 + $0x10] sm:$0xff] %v132
      %167 = vst [vmem:[%s163 + $0x18] sm:$0xff] %v136
      %168 = vst [vmem:[%s163 + $0x20] sm:$0xff] %v140
      %169 = vst [vmem:[%s163 + $0x28] sm:$0xff] %v144
      %170 = vst [vmem:[%s163 + $0x30] sm:$0xff] %v148
      %171 = vst [vmem:[%s163 + $0x38] sm:$0xff] %v152
    $region61: #{tpu_custom_call.1} parent=1 // pred_fallthru
      _
    %s172 = smul.u32 0, 8
    %s173 = smul.addr %s172, 8
    %s174 = scalar_lea.vmem [#allocation2], %s173
    %v175 = vld [vmem:[%s174] sm:$0xff]
    %v176 = vld [vmem:[%s174 + $0x8] sm:$0xff]
    %v177 = vld [vmem:[%s174 + $0x10] sm:$0xff]
    %v178 = vld [vmem:[%s174 + $0x18] sm:$0xff]
    %v179 = vld [vmem:[%s174 + $0x20] sm:$0xff]
    %v180 = vld [vmem:[%s174 + $0x28] sm:$0xff]
    %v181 = vld [vmem:[%s174 + $0x30] sm:$0xff]
    %v182 = vld [vmem:[%s174 + $0x38] sm:$0xff]
    %v183 = vld [vmem:[#allocation3] sm:$0xff]
    %v184 = vld [vmem:[#allocation3 + $0x8] sm:$0xff]
    %v185 = vld [vmem:[#allocation3 + $0x10] sm:$0xff]
    %v186 = vld [vmem:[#allocation6] sm:$0xff]
    %v187 = vld [vmem:[#allocation6 + $0x8] sm:$0xff]
    %v188 = vld [vmem:[#allocation6 + $0x10] sm:$0xff]
    %v189 = vld [vmem:[#allocation6 + $0x18] sm:$0xff]
    %v190 = vld [vmem:[#allocation6 + $0x20] sm:$0xff]
    %v191 = vld [vmem:[#allocation6 + $0x28] sm:$0xff]
    %v192 = vld [vmem:[#allocation6 + $0x30] sm:$0xff]
    %v193 = vld [vmem:[#allocation6 + $0x38] sm:$0xff]
    %v194 = vld [vmem:[#allocation6 + $0x40] sm:$0xff]
    %v195 = vld [vmem:[#allocation6 + $0x48] sm:$0xff]
    %v196 = vld [vmem:[#allocation6 + $0x50] sm:$0xff]
    %v197 = vld [vmem:[#allocation6 + $0x58] sm:$0xff]
    %v198 = vld [vmem:[#allocation6 + $0x60] sm:$0xff]
    %v199 = vld [vmem:[#allocation6 + $0x68] sm:$0xff]
    %v200 = vld [vmem:[#allocation6 + $0x70] sm:$0xff]
    %v201 = vld [vmem:[#allocation6 + $0x78] sm:$0xff]
    %v202 = vld [vmem:[#allocation6 + $0x80] sm:$0xff]
    %v203 = vld [vmem:[#allocation6 + $0x88] sm:$0xff]
    %v204 = vld [vmem:[#allocation6 + $0x90] sm:$0xff]
    %v205 = vld [vmem:[#allocation6 + $0x98] sm:$0xff]
    %v206 = vld [vmem:[#allocation6 + $0xa0] sm:$0xff]
    %v207 = vld [vmem:[#allocation6 + $0xa8] sm:$0xff]
    %v208 = vld [vmem:[#allocation6 + $0xb0] sm:$0xff]
    %v209 = vld [vmem:[#allocation6 + $0xb8] sm:$0xff]
    %v210 = vld [vmem:[#allocation6 + $0xc0] sm:$0xff]
    %v211 = vld [vmem:[#allocation6 + $0xc8] sm:$0xff]
    %v212 = vld [vmem:[#allocation6 + $0xd0] sm:$0xff]
    %v213 = vld [vmem:[#allocation6 + $0xd8] sm:$0xff]
    %v214 = vld [vmem:[#allocation6 + $0xe0] sm:$0xff]
    %v215 = vld [vmem:[#allocation6 + $0xe8] sm:$0xff]
    %v216 = vld [vmem:[#allocation6 + $0xf0] sm:$0xff]
    %v217 = vld [vmem:[#allocation6 + $0xf8] sm:$0xff]
    %v218 = vld [vmem:[#allocation6 + $0x100] sm:$0xff]
    %v219 = vld [vmem:[#allocation6 + $0x108] sm:$0xff]
    %v220 = vld [vmem:[#allocation6 + $0x110] sm:$0xff]
    %v221 = vld [vmem:[#allocation6 + $0x118] sm:$0xff]
    %v222 = vld [vmem:[#allocation6 + $0x120] sm:$0xff]
    %v223 = vld [vmem:[#allocation6 + $0x128] sm:$0xff]
    %v224 = vld [vmem:[#allocation6 + $0x130] sm:$0xff]
    %v225 = vld [vmem:[#allocation6 + $0x138] sm:$0xff]
    %v226 = vld [vmem:[#allocation6 + $0x140] sm:$0xff]
    %v227 = vld [vmem:[#allocation6 + $0x148] sm:$0xff]
    %v228 = vld [vmem:[#allocation6 + $0x150] sm:$0xff]
    %v229 = vld [vmem:[#allocation6 + $0x158] sm:$0xff]
    %v230 = vld [vmem:[#allocation6 + $0x160] sm:$0xff]
    %v231 = vld [vmem:[#allocation6 + $0x168] sm:$0xff]
    %v232 = vld [vmem:[#allocation6 + $0x170] sm:$0xff]
    %v233 = vld [vmem:[#allocation6 + $0x178] sm:$0xff]
    %v234 = vld [vmem:[#allocation6 + $0x180] sm:$0xff]
    %v235 = vld [vmem:[#allocation6 + $0x188] sm:$0xff]
    %v236 = vld [vmem:[#allocation6 + $0x190] sm:$0xff]
    %v237 = vld [vmem:[#allocation6 + $0x198] sm:$0xff]
    %v238 = vld [vmem:[#allocation6 + $0x1a0] sm:$0xff]
    %v239 = vld [vmem:[#allocation6 + $0x1a8] sm:$0xff]
    %v240 = vld [vmem:[#allocation6 + $0x1b0] sm:$0xff]
    %v241 = vld [vmem:[#allocation6 + $0x1b8] sm:$0xff]
    %v242 = vld [vmem:[#allocation6 + $0x1c0] sm:$0xff]
    %v243 = vld [vmem:[#allocation6 + $0x1c8] sm:$0xff]
    %v244 = vld [vmem:[#allocation6 + $0x1d0] sm:$0xff]
    %v245 = vld [vmem:[#allocation6 + $0x1d8] sm:$0xff]
    %v246 = vld [vmem:[#allocation6 + $0x1e0] sm:$0xff]
    %v247 = vld [vmem:[#allocation6 + $0x1e8] sm:$0xff]
    %v248 = vld [vmem:[#allocation6 + $0x1f0] sm:$0xff]
    %v249 = vld [vmem:[#allocation6 + $0x1f8] sm:$0xff]
    %v250 = vld [vmem:[#allocation6 + $0x200] sm:$0xff]
    %v251 = vld [vmem:[#allocation6 + $0x208] sm:$0xff]
    %v252 = vld [vmem:[#allocation6 + $0x210] sm:$0xff]
    %v253 = vld [vmem:[#allocation6 + $0x218] sm:$0xff]
    %v254 = vld [vmem:[#allocation6 + $0x220] sm:$0xff]
    %v255 = vld [vmem:[#allocation6 + $0x228] sm:$0xff]
    %v256 = vld [vmem:[#allocation6 + $0x230] sm:$0xff]
    %v257 = vld [vmem:[#allocation6 + $0x238] sm:$0xff]
    %v258 = vld [vmem:[#allocation6 + $0x240] sm:$0xff]
    %v259 = vld [vmem:[#allocation6 + $0x248] sm:$0xff]
    %v260 = vld [vmem:[#allocation6 + $0x250] sm:$0xff]
    %v261 = vld [vmem:[#allocation6 + $0x258] sm:$0xff]
    %v262 = vld [vmem:[#allocation6 + $0x260] sm:$0xff]
    %v263 = vld [vmem:[#allocation6 + $0x268] sm:$0xff]
    %v264 = vld [vmem:[#allocation6 + $0x270] sm:$0xff]
    %v265 = vld [vmem:[#allocation6 + $0x278] sm:$0xff]
    %v266 = vld [vmem:[#allocation6 + $0x280] sm:$0xff]
    %v267 = vld [vmem:[#allocation6 + $0x288] sm:$0xff]
    %v268 = vld [vmem:[#allocation6 + $0x290] sm:$0xff]
    %v269 = vld [vmem:[#allocation6 + $0x298] sm:$0xff]
    %v270 = vld [vmem:[#allocation6 + $0x2a0] sm:$0xff]
    %v271 = vld [vmem:[#allocation6 + $0x2a8] sm:$0xff]
    %v272 = vld [vmem:[#allocation6 + $0x2b0] sm:$0xff]
    %v273 = vld [vmem:[#allocation6 + $0x2b8] sm:$0xff]
    %v274 = vld [vmem:[#allocation6 + $0x2c0] sm:$0xff]
    %v275 = vld [vmem:[#allocation6 + $0x2c8] sm:$0xff]
    %v276 = vld [vmem:[#allocation6 + $0x2d0] sm:$0xff]
    %v277 = vld [vmem:[#allocation6 + $0x2d8] sm:$0xff]
    %v278 = vld [vmem:[#allocation6 + $0x2e0] sm:$0xff]
    %v279 = vld [vmem:[#allocation6 + $0x2e8] sm:$0xff]
    %v280 = vld [vmem:[#allocation6 + $0x2f0] sm:$0xff]
    %v281 = vld [vmem:[#allocation6 + $0x2f8] sm:$0xff]
    %v282 = vld [vmem:[#allocation6 + $0x300] sm:$0xff]
    %v283 = vld [vmem:[#allocation6 + $0x308] sm:$0xff]
    %v284 = vld [vmem:[#allocation6 + $0x310] sm:$0xff]
    %v285 = vld [vmem:[#allocation6 + $0x318] sm:$0xff]
    %v286 = vld [vmem:[#allocation6 + $0x320] sm:$0xff]
    %v287 = vld [vmem:[#allocation6 + $0x328] sm:$0xff]
    %v288 = vld [vmem:[#allocation6 + $0x330] sm:$0xff]
    %v289 = vld [vmem:[#allocation6 + $0x338] sm:$0xff]
    %v290 = vld [vmem:[#allocation6 + $0x340] sm:$0xff]
    %v291 = vld [vmem:[#allocation6 + $0x348] sm:$0xff]
    %v292 = vld [vmem:[#allocation6 + $0x350] sm:$0xff]
    %v293 = vld [vmem:[#allocation6 + $0x358] sm:$0xff]
    %v294 = vld [vmem:[#allocation6 + $0x360] sm:$0xff]
    %v295 = vld [vmem:[#allocation6 + $0x368] sm:$0xff]
    %v296 = vld [vmem:[#allocation6 + $0x370] sm:$0xff]
    %v297 = vld [vmem:[#allocation6 + $0x378] sm:$0xff]
    %v298 = vld [vmem:[#allocation6 + $0x380] sm:$0xff]
    %v299 = vld [vmem:[#allocation6 + $0x388] sm:$0xff]
    %v300 = vld [vmem:[#allocation6 + $0x390] sm:$0xff]
    %v301 = vld [vmem:[#allocation6 + $0x398] sm:$0xff]
    %v302 = vld [vmem:[#allocation6 + $0x3a0] sm:$0xff]
    %v303 = vld [vmem:[#allocation6 + $0x3a8] sm:$0xff]
    %v304 = vld [vmem:[#allocation6 + $0x3b0] sm:$0xff]
    %v305 = vld [vmem:[#allocation6 + $0x3b8] sm:$0xff]
    %v306 = vld [vmem:[#allocation6 + $0x3c0] sm:$0xff]
    %v307 = vld [vmem:[#allocation6 + $0x3c8] sm:$0xff]
    %v308 = vld [vmem:[#allocation6 + $0x3d0] sm:$0xff]
    %v309 = vld [vmem:[#allocation6 + $0x3d8] sm:$0xff]
    %v310 = vld [vmem:[#allocation6 + $0x3e0] sm:$0xff]
    %v311 = vld [vmem:[#allocation6 + $0x3e8] sm:$0xff]
    %v312 = vld [vmem:[#allocation6 + $0x3f0] sm:$0xff]
    %v313 = vld [vmem:[#allocation6 + $0x3f8] sm:$0xff]
    %v314 = vld [vmem:[#allocation6 + $0x400] sm:$0xff]
    %v315 = vld [vmem:[#allocation6 + $0x408] sm:$0xff]
    %v316 = vld [vmem:[#allocation6 + $0x410] sm:$0xff]
    %v317 = vld [vmem:[#allocation6 + $0x418] sm:$0xff]
    %v318 = vld [vmem:[#allocation6 + $0x420] sm:$0xff]
    %v319 = vld [vmem:[#allocation6 + $0x428] sm:$0xff]
    %v320 = vld [vmem:[#allocation6 + $0x430] sm:$0xff]
    %v321 = vld [vmem:[#allocation6 + $0x438] sm:$0xff]
    %v322 = vld [vmem:[#allocation6 + $0x440] sm:$0xff]
    %v323 = vld [vmem:[#allocation6 + $0x448] sm:$0xff]
    %v324 = vld [vmem:[#allocation6 + $0x450] sm:$0xff]
    %v325 = vld [vmem:[#allocation6 + $0x458] sm:$0xff]
    %v326 = vld [vmem:[#allocation6 + $0x460] sm:$0xff]
    %v327 = vld [vmem:[#allocation6 + $0x468] sm:$0xff]
    %v328 = vld [vmem:[#allocation6 + $0x470] sm:$0xff]
    %v329 = vld [vmem:[#allocation6 + $0x478] sm:$0xff]
    %v330 = vld [vmem:[#allocation6 + $0x480] sm:$0xff]
    %v331 = vld [vmem:[#allocation6 + $0x488] sm:$0xff]
    %v332 = vld [vmem:[#allocation6 + $0x490] sm:$0xff]
    %v333 = vld [vmem:[#allocation6 + $0x498] sm:$0xff]
    %v334 = vld [vmem:[#allocation6 + $0x4a0] sm:$0xff]
    %v335 = vld [vmem:[#allocation6 + $0x4a8] sm:$0xff]
    %v336 = vld [vmem:[#allocation6 + $0x4b0] sm:$0xff]
    %v337 = vld [vmem:[#allocation6 + $0x4b8] sm:$0xff]
    %v338 = vld [vmem:[#allocation6 + $0x4c0] sm:$0xff]
    %v339 = vld [vmem:[#allocation6 + $0x4c8] sm:$0xff]
    %v340 = vld [vmem:[#allocation6 + $0x4d0] sm:$0xff]
    %v341 = vld [vmem:[#allocation6 + $0x4d8] sm:$0xff]
    %v342 = vld [vmem:[#allocation6 + $0x4e0] sm:$0xff]
    %v343 = vld [vmem:[#allocation6 + $0x4e8] sm:$0xff]
    %v344 = vld [vmem:[#allocation6 + $0x4f0] sm:$0xff]
    %v345 = vld [vmem:[#allocation6 + $0x4f8] sm:$0xff]
    %v346 = vld [vmem:[#allocation6 + $0x500] sm:$0xff]
    %v347 = vld [vmem:[#allocation6 + $0x508] sm:$0xff]
    %v348 = vld [vmem:[#allocation6 + $0x510] sm:$0xff]
    %v349 = vld [vmem:[#allocation6 + $0x518] sm:$0xff]
    %v350 = vld [vmem:[#allocation6 + $0x520] sm:$0xff]
    %v351 = vld [vmem:[#allocation6 + $0x528] sm:$0xff]
    %v352 = vld [vmem:[#allocation6 + $0x530] sm:$0xff]
    %v353 = vld [vmem:[#allocation6 + $0x538] sm:$0xff]
    %v354 = vld [vmem:[#allocation6 + $0x540] sm:$0xff]
    %v355 = vld [vmem:[#allocation6 + $0x548] sm:$0xff]
    %v356 = vld [vmem:[#allocation6 + $0x550] sm:$0xff]
    %v357 = vld [vmem:[#allocation6 + $0x558] sm:$0xff]
    %v358 = vld [vmem:[#allocation6 + $0x560] sm:$0xff]
    %v359 = vld [vmem:[#allocation6 + $0x568] sm:$0xff]
    %v360 = vld [vmem:[#allocation6 + $0x570] sm:$0xff]
    %v361 = vld [vmem:[#allocation6 + $0x578] sm:$0xff]
    %v362 = vld [vmem:[#allocation6 + $0x580] sm:$0xff]
    %v363 = vld [vmem:[#allocation6 + $0x588] sm:$0xff]
    %v364 = vld [vmem:[#allocation6 + $0x590] sm:$0xff]
    %v365 = vld [vmem:[#allocation6 + $0x598] sm:$0xff]
    %v366 = vld [vmem:[#allocation6 + $0x5a0] sm:$0xff]
    %v367 = vld [vmem:[#allocation6 + $0x5a8] sm:$0xff]
    %v368 = vld [vmem:[#allocation6 + $0x5b0] sm:$0xff]
    %v369 = vld [vmem:[#allocation6 + $0x5b8] sm:$0xff]
    %v370 = vld [vmem:[#allocation6 + $0x5c0] sm:$0xff]
    %v371 = vld [vmem:[#allocation6 + $0x5c8] sm:$0xff]
    %v372 = vld [vmem:[#allocation6 + $0x5d0] sm:$0xff]
    %v373 = vld [vmem:[#allocation6 + $0x5d8] sm:$0xff]
    %v374 = vld [vmem:[#allocation6 + $0x5e0] sm:$0xff]
    %v375 = vld [vmem:[#allocation6 + $0x5e8] sm:$0xff]
    %v376 = vld [vmem:[#allocation6 + $0x5f0] sm:$0xff]
    %v377 = vld [vmem:[#allocation6 + $0x5f8] sm:$0xff]
    %v378 = vld [vmem:[#allocation6 + $0x600] sm:$0xff]
    %v379 = vld [vmem:[#allocation6 + $0x608] sm:$0xff]
    %v380 = vld [vmem:[#allocation6 + $0x610] sm:$0xff]
    %v381 = vld [vmem:[#allocation6 + $0x618] sm:$0xff]
    %v382 = vld [vmem:[#allocation6 + $0x620] sm:$0xff]
    %v383 = vld [vmem:[#allocation6 + $0x628] sm:$0xff]
    %v384 = vld [vmem:[#allocation6 + $0x630] sm:$0xff]
    %v385 = vld [vmem:[#allocation6 + $0x638] sm:$0xff]
    %v386 = vld [vmem:[#allocation6 + $0x640] sm:$0xff]
    %v387 = vld [vmem:[#allocation6 + $0x648] sm:$0xff]
    %v388 = vld [vmem:[#allocation6 + $0x650] sm:$0xff]
    %v389 = vld [vmem:[#allocation6 + $0x658] sm:$0xff]
    %v390 = vld [vmem:[#allocation6 + $0x660] sm:$0xff]
    %v391 = vld [vmem:[#allocation6 + $0x668] sm:$0xff]
    %v392 = vld [vmem:[#allocation6 + $0x670] sm:$0xff]
    %v393 = vld [vmem:[#allocation6 + $0x678] sm:$0xff]
    %v394 = vld [vmem:[#allocation6 + $0x680] sm:$0xff]
    %v395 = vld [vmem:[#allocation6 + $0x688] sm:$0xff]
    %v396 = vld [vmem:[#allocation6 + $0x690] sm:$0xff]
    %v397 = vld [vmem:[#allocation6 + $0x698] sm:$0xff]
    %v398 = vld [vmem:[#allocation6 + $0x6a0] sm:$0xff]
    %v399 = vld [vmem:[#allocation6 + $0x6a8] sm:$0xff]
    %v400 = vld [vmem:[#allocation6 + $0x6b0] sm:$0xff]
    %v401 = vld [vmem:[#allocation6 + $0x6b8] sm:$0xff]
    %v402 = vld [vmem:[#allocation6 + $0x6c0] sm:$0xff]
    %v403 = vld [vmem:[#allocation6 + $0x6c8] sm:$0xff]
    %v404 = vld [vmem:[#allocation6 + $0x6d0] sm:$0xff]
    %v405 = vld [vmem:[#allocation6 + $0x6d8] sm:$0xff]
    %v406 = vld [vmem:[#allocation6 + $0x6e0] sm:$0xff]
    %v407 = vld [vmem:[#allocation6 + $0x6e8] sm:$0xff]
    %v408 = vld [vmem:[#allocation6 + $0x6f0] sm:$0xff]
    %v409 = vld [vmem:[#allocation6 + $0x6f8] sm:$0xff]
    %v410 = vld [vmem:[#allocation6 + $0x700] sm:$0xff]
    %v411 = vld [vmem:[#allocation6 + $0x708] sm:$0xff]
    %v412 = vld [vmem:[#allocation6 + $0x710] sm:$0xff]
    %v413 = vld [vmem:[#allocation6 + $0x718] sm:$0xff]
    %v414 = vld [vmem:[#allocation6 + $0x720] sm:$0xff]
    %v415 = vld [vmem:[#allocation6 + $0x728] sm:$0xff]
    %v416 = vld [vmem:[#allocation6 + $0x730] sm:$0xff]
    %v417 = vld [vmem:[#allocation6 + $0x738] sm:$0xff]
    %v418 = vld [vmem:[#allocation6 + $0x740] sm:$0xff]
    %v419 = vld [vmem:[#allocation6 + $0x748] sm:$0xff]
    %v420 = vld [vmem:[#allocation6 + $0x750] sm:$0xff]
    %v421 = vld [vmem:[#allocation6 + $0x758] sm:$0xff]
    %v422 = vld [vmem:[#allocation6 + $0x760] sm:$0xff]
    %v423 = vld [vmem:[#allocation6 + $0x768] sm:$0xff]
    %v424 = vld [vmem:[#allocation6 + $0x770] sm:$0xff]
    %v425 = vld [vmem:[#allocation6 + $0x778] sm:$0xff]
    %v426 = vld [vmem:[#allocation6 + $0x780] sm:$0xff]
    %v427 = vld [vmem:[#allocation6 + $0x788] sm:$0xff]
    %v428 = vld [vmem:[#allocation6 + $0x790] sm:$0xff]
    %v429 = vld [vmem:[#allocation6 + $0x798] sm:$0xff]
    %v430 = vld [vmem:[#allocation6 + $0x7a0] sm:$0xff]
    %v431 = vld [vmem:[#allocation6 + $0x7a8] sm:$0xff]
    %v432 = vld [vmem:[#allocation6 + $0x7b0] sm:$0xff]
    %v433 = vld [vmem:[#allocation6 + $0x7b8] sm:$0xff]
    %v434 = vld [vmem:[#allocation6 + $0x7c0] sm:$0xff]
    %v435 = vld [vmem:[#allocation6 + $0x7c8] sm:$0xff]
    %v436 = vld [vmem:[#allocation6 + $0x7d0] sm:$0xff]
    %v437 = vld [vmem:[#allocation6 + $0x7d8] sm:$0xff]
    %v438 = vld [vmem:[#allocation6 + $0x7e0] sm:$0xff]
    %v439 = vld [vmem:[#allocation6 + $0x7e8] sm:$0xff]
    %v440 = vld [vmem:[#allocation6 + $0x7f0] sm:$0xff]
    %v441 = vld [vmem:[#allocation6 + $0x7f8] sm:$0xff]
    %v442 = vld [vmem:[#allocation6 + $0x800] sm:$0xff]
    %v443 = vld [vmem:[#allocation6 + $0x808] sm:$0xff]
    %v444 = vld [vmem:[#allocation6 + $0x810] sm:$0xff]
    %v445 = vld [vmem:[#allocation6 + $0x818] sm:$0xff]
    %v446 = vld [vmem:[#allocation6 + $0x820] sm:$0xff]
    %v447 = vld [vmem:[#allocation6 + $0x828] sm:$0xff]
    %v448 = vld [vmem:[#allocation6 + $0x830] sm:$0xff]
    %v449 = vld [vmem:[#allocation6 + $0x838] sm:$0xff]
    %v450 = vld [vmem:[#allocation6 + $0x840] sm:$0xff]
    %v451 = vld [vmem:[#allocation6 + $0x848] sm:$0xff]
    %v452 = vld [vmem:[#allocation6 + $0x850] sm:$0xff]
    %v453 = vld [vmem:[#allocation6 + $0x858] sm:$0xff]
    %v454 = vld [vmem:[#allocation6 + $0x860] sm:$0xff]
    %v455 = vld [vmem:[#allocation6 + $0x868] sm:$0xff]
    %v456 = vld [vmem:[#allocation6 + $0x870] sm:$0xff]
    %v457 = vld [vmem:[#allocation6 + $0x878] sm:$0xff]
    %v458 = vld [vmem:[#allocation6 + $0x880] sm:$0xff]
    %v459 = vld [vmem:[#allocation6 + $0x888] sm:$0xff]
    %v460 = vld [vmem:[#allocation6 + $0x890] sm:$0xff]
    %v461 = vld [vmem:[#allocation6 + $0x898] sm:$0xff]
    %v462 = vld [vmem:[#allocation6 + $0x8a0] sm:$0xff]
    %v463 = vld [vmem:[#allocation6 + $0x8a8] sm:$0xff]
    %v464 = vld [vmem:[#allocation6 + $0x8b0] sm:$0xff]
    %v465 = vld [vmem:[#allocation6 + $0x8b8] sm:$0xff]
    %v466 = vld [vmem:[#allocation6 + $0x8c0] sm:$0xff]
    %v467 = vld [vmem:[#allocation6 + $0x8c8] sm:$0xff]
    %v468 = vld [vmem:[#allocation6 + $0x8d0] sm:$0xff]
    %v469 = vld [vmem:[#allocation6 + $0x8d8] sm:$0xff]
    %v470 = vld [vmem:[#allocation6 + $0x8e0] sm:$0xff]
    %v471 = vld [vmem:[#allocation6 + $0x8e8] sm:$0xff]
    %v472 = vld [vmem:[#allocation6 + $0x8f0] sm:$0xff]
    %v473 = vld [vmem:[#allocation6 + $0x8f8] sm:$0xff]
    %v474 = vld [vmem:[#allocation6 + $0x900] sm:$0xff]
    %v475 = vld [vmem:[#allocation6 + $0x908] sm:$0xff]
    %v476 = vld [vmem:[#allocation6 + $0x910] sm:$0xff]
    %v477 = vld [vmem:[#allocation6 + $0x918] sm:$0xff]
    %v478 = vld [vmem:[#allocation6 + $0x920] sm:$0xff]
    %v479 = vld [vmem:[#allocation6 + $0x928] sm:$0xff]
    %v480 = vld [vmem:[#allocation6 + $0x930] sm:$0xff]
    %v481 = vld [vmem:[#allocation6 + $0x938] sm:$0xff]
    %v482 = vld [vmem:[#allocation6 + $0x940] sm:$0xff]
    %v483 = vld [vmem:[#allocation6 + $0x948] sm:$0xff]
    %v484 = vld [vmem:[#allocation6 + $0x950] sm:$0xff]
    %v485 = vld [vmem:[#allocation6 + $0x958] sm:$0xff]
    %v486 = vld [vmem:[#allocation6 + $0x960] sm:$0xff]
    %v487 = vld [vmem:[#allocation6 + $0x968] sm:$0xff]
    %v488 = vld [vmem:[#allocation6 + $0x970] sm:$0xff]
    %v489 = vld [vmem:[#allocation6 + $0x978] sm:$0xff]
    %v490 = vld [vmem:[#allocation6 + $0x980] sm:$0xff]
    %v491 = vld [vmem:[#allocation6 + $0x988] sm:$0xff]
    %v492 = vld [vmem:[#allocation6 + $0x990] sm:$0xff]
    %v493 = vld [vmem:[#allocation6 + $0x998] sm:$0xff]
    %v494 = vld [vmem:[#allocation6 + $0x9a0] sm:$0xff]
    %v495 = vld [vmem:[#allocation6 + $0x9a8] sm:$0xff]
    %v496 = vld [vmem:[#allocation6 + $0x9b0] sm:$0xff]
    %v497 = vld [vmem:[#allocation6 + $0x9b8] sm:$0xff]
    %v498 = vld [vmem:[#allocation6 + $0x9c0] sm:$0xff]
    %v499 = vld [vmem:[#allocation6 + $0x9c8] sm:$0xff]
    %v500 = vld [vmem:[#allocation6 + $0x9d0] sm:$0xff]
    %v501 = vld [vmem:[#allocation6 + $0x9d8] sm:$0xff]
    %v502 = vld [vmem:[#allocation6 + $0x9e0] sm:$0xff]
    %v503 = vld [vmem:[#allocation6 + $0x9e8] sm:$0xff]
    %v504 = vld [vmem:[#allocation6 + $0x9f0] sm:$0xff]
    %v505 = vld [vmem:[#allocation6 + $0x9f8] sm:$0xff]
    %v506 = vld [vmem:[#allocation6 + $0xa00] sm:$0xff]
    %v507 = vld [vmem:[#allocation6 + $0xa08] sm:$0xff]
    %v508 = vld [vmem:[#allocation6 + $0xa10] sm:$0xff]
    %v509 = vld [vmem:[#allocation6 + $0xa18] sm:$0xff]
    %v510 = vld [vmem:[#allocation6 + $0xa20] sm:$0xff]
    %v511 = vld [vmem:[#allocation6 + $0xa28] sm:$0xff]
    %v512 = vld [vmem:[#allocation6 + $0xa30] sm:$0xff]
    %v513 = vld [vmem:[#allocation6 + $0xa38] sm:$0xff]
    %v514 = vld [vmem:[#allocation6 + $0xa40] sm:$0xff]
    %v515 = vld [vmem:[#allocation6 + $0xa48] sm:$0xff]
    %v516 = vld [vmem:[#allocation6 + $0xa50] sm:$0xff]
    %v517 = vld [vmem:[#allocation6 + $0xa58] sm:$0xff]
    %v518 = vld [vmem:[#allocation6 + $0xa60] sm:$0xff]
    %v519 = vld [vmem:[#allocation6 + $0xa68] sm:$0xff]
    %v520 = vld [vmem:[#allocation6 + $0xa70] sm:$0xff]
    %v521 = vld [vmem:[#allocation6 + $0xa78] sm:$0xff]
    %v522 = vld [vmem:[#allocation6 + $0xa80] sm:$0xff]
    %v523 = vld [vmem:[#allocation6 + $0xa88] sm:$0xff]
    %v524 = vld [vmem:[#allocation6 + $0xa90] sm:$0xff]
    %v525 = vld [vmem:[#allocation6 + $0xa98] sm:$0xff]
    %v526 = vld [vmem:[#allocation6 + $0xaa0] sm:$0xff]
    %v527 = vld [vmem:[#allocation6 + $0xaa8] sm:$0xff]
    %v528 = vld [vmem:[#allocation6 + $0xab0] sm:$0xff]
    %v529 = vld [vmem:[#allocation6 + $0xab8] sm:$0xff]
    %v530 = vld [vmem:[#allocation6 + $0xac0] sm:$0xff]
    %v531 = vld [vmem:[#allocation6 + $0xac8] sm:$0xff]
    %v532 = vld [vmem:[#allocation6 + $0xad0] sm:$0xff]
    %v533 = vld [vmem:[#allocation6 + $0xad8] sm:$0xff]
    %v534 = vld [vmem:[#allocation6 + $0xae0] sm:$0xff]
    %v535 = vld [vmem:[#allocation6 + $0xae8] sm:$0xff]
    %v536 = vld [vmem:[#allocation6 + $0xaf0] sm:$0xff]
    %v537 = vld [vmem:[#allocation6 + $0xaf8] sm:$0xff]
    %v538 = vld [vmem:[#allocation6 + $0xb00] sm:$0xff]
    %v539 = vld [vmem:[#allocation6 + $0xb08] sm:$0xff]
    %v540 = vld [vmem:[#allocation6 + $0xb10] sm:$0xff]
    %v541 = vld [vmem:[#allocation6 + $0xb18] sm:$0xff]
    %v542 = vld [vmem:[#allocation6 + $0xb20] sm:$0xff]
    %v543 = vld [vmem:[#allocation6 + $0xb28] sm:$0xff]
    %v544 = vld [vmem:[#allocation6 + $0xb30] sm:$0xff]
    %v545 = vld [vmem:[#allocation6 + $0xb38] sm:$0xff]
    %v546 = vld [vmem:[#allocation6 + $0xb40] sm:$0xff]
    %v547 = vld [vmem:[#allocation6 + $0xb48] sm:$0xff]
    %v548 = vld [vmem:[#allocation6 + $0xb50] sm:$0xff]
    %v549 = vld [vmem:[#allocation6 + $0xb58] sm:$0xff]
    %v550 = vld [vmem:[#allocation6 + $0xb60] sm:$0xff]
    %v551 = vld [vmem:[#allocation6 + $0xb68] sm:$0xff]
    %v552 = vld [vmem:[#allocation6 + $0xb70] sm:$0xff]
    %v553 = vld [vmem:[#allocation6 + $0xb78] sm:$0xff]
    %v554 = vld [vmem:[#allocation6 + $0xb80] sm:$0xff]
    %v555 = vld [vmem:[#allocation6 + $0xb88] sm:$0xff]
    %v556 = vld [vmem:[#allocation6 + $0xb90] sm:$0xff]
    %v557 = vld [vmem:[#allocation6 + $0xb98] sm:$0xff]
    %v558 = vld [vmem:[#allocation6 + $0xba0] sm:$0xff]
    %v559 = vld [vmem:[#allocation6 + $0xba8] sm:$0xff]
    %v560 = vld [vmem:[#allocation6 + $0xbb0] sm:$0xff]
    %v561 = vld [vmem:[#allocation6 + $0xbb8] sm:$0xff]
    %v562 = vld [vmem:[#allocation6 + $0xbc0] sm:$0xff]
    %v563 = vld [vmem:[#allocation6 + $0xbc8] sm:$0xff]
    %v564 = vld [vmem:[#allocation6 + $0xbd0] sm:$0xff]
    %v565 = vld [vmem:[#allocation6 + $0xbd8] sm:$0xff]
    %v566 = vld [vmem:[#allocation6 + $0xbe0] sm:$0xff]
    %v567 = vld [vmem:[#allocation6 + $0xbe8] sm:$0xff]
    %v568 = vld [vmem:[#allocation6 + $0xbf0] sm:$0xff]
    %v569 = vld [vmem:[#allocation6 + $0xbf8] sm:$0xff]
    %v573 = vunpack.c.l.b16 %v183
    %v574 = vunpack.c.h.b16 %v183
    %v575 = vunpack.c.l.b16 %v184
    %v576 = vunpack.c.h.b16 %v184
    %v577 = vunpack.c.l.b16 %v185
    %v578 = vunpack.c.h.b16 %v185
    %v579 = vpack.c.b16 %v573, %v573
    %v580 = vpack.c.b16 %v574, %v574
    %v581 = vpack.c.b16 %v575, %v575
    %v582 = vpack.c.b16 %v576, %v576
    %v583 = vpack.c.b16 %v577, %v577
    %v584 = vpack.c.b16 %v578, %v578
    %v975 = vunpack.c.l.b16 %v186
    %v976 = vunpack.c.h.b16 %v186
    %v977 = vunpack.c.l.b16 %v187
    %v978 = vunpack.c.h.b16 %v187
    %v979 = vunpack.c.l.b16 %v188
    %v980 = vunpack.c.h.b16 %v188
    %v981 = vunpack.c.l.b16 %v189
    %v982 = vunpack.c.h.b16 %v189
    %v983 = vunpack.c.l.b16 %v190
    %v984 = vunpack.c.h.b16 %v190
    %v985 = vunpack.c.l.b16 %v191
    %v986 = vunpack.c.h.b16 %v191
    %v987 = vunpack.c.l.b16 %v192
    %v988 = vunpack.c.h.b16 %v192
    %v989 = vunpack.c.l.b16 %v193
    %v990 = vunpack.c.h.b16 %v193
    %v991 = vunpack.c.l.b16 %v194
    %v992 = vunpack.c.h.b16 %v194
    %v993 = vunpack.c.l.b16 %v195
    %v994 = vunpack.c.h.b16 %v195
    %v995 = vunpack.c.l.b16 %v196
    %v996 = vunpack.c.h.b16 %v196
    %v997 = vunpack.c.l.b16 %v197
    %v998 = vunpack.c.h.b16 %v197
    %v999 = vunpack.c.l.b16 %v198
    %v1000 = vunpack.c.h.b16 %v198
    %v1001 = vunpack.c.l.b16 %v199
    %v1002 = vunpack.c.h.b16 %v199
    %v1003 = vunpack.c.l.b16 %v200
    %v1004 = vunpack.c.h.b16 %v200
    %v1005 = vunpack.c.l.b16 %v201
    %v1006 = vunpack.c.h.b16 %v201
    %v1007 = vunpack.c.l.b16 %v202
    %v1008 = vunpack.c.h.b16 %v202
    %v1009 = vunpack.c.l.b16 %v203
    %v1010 = vunpack.c.h.b16 %v203
    %v1011 = vunpack.c.l.b16 %v204
    %v1012 = vunpack.c.h.b16 %v204
    %v1013 = vunpack.c.l.b16 %v205
    %v1014 = vunpack.c.h.b16 %v205
    %v1015 = vunpack.c.l.b16 %v206
    %v1016 = vunpack.c.h.b16 %v206
    %v1017 = vunpack.c.l.b16 %v207
    %v1018 = vunpack.c.h.b16 %v207
    %v1019 = vunpack.c.l.b16 %v208
    %v1020 = vunpack.c.h.b16 %v208
    %v1021 = vunpack.c.l.b16 %v209
    %v1022 = vunpack.c.h.b16 %v209
    %v1023 = vunpack.c.l.b16 %v210
    %v1024 = vunpack.c.h.b16 %v210
    %v1025 = vunpack.c.l.b16 %v211
    %v1026 = vunpack.c.h.b16 %v211
    %v1027 = vunpack.c.l.b16 %v212
    %v1028 = vunpack.c.h.b16 %v212
    %v1029 = vunpack.c.l.b16 %v213
    %v1030 = vunpack.c.h.b16 %v213
    %v1031 = vunpack.c.l.b16 %v214
    %v1032 = vunpack.c.h.b16 %v214
    %v1033 = vunpack.c.l.b16 %v215
    %v1034 = vunpack.c.h.b16 %v215
    %v1035 = vunpack.c.l.b16 %v216
    %v1036 = vunpack.c.h.b16 %v216
    %v1037 = vunpack.c.l.b16 %v217
    %v1038 = vunpack.c.h.b16 %v217
    %v1039 = vunpack.c.l.b16 %v218
    %v1040 = vunpack.c.h.b16 %v218
    %v1041 = vunpack.c.l.b16 %v219
    %v1042 = vunpack.c.h.b16 %v219
    %v1043 = vunpack.c.l.b16 %v220
    %v1044 = vunpack.c.h.b16 %v220
    %v1045 = vunpack.c.l.b16 %v221
    %v1046 = vunpack.c.h.b16 %v221
    %v1047 = vunpack.c.l.b16 %v222
    %v1048 = vunpack.c.h.b16 %v222
    %v1049 = vunpack.c.l.b16 %v223
    %v1050 = vunpack.c.h.b16 %v223
    %v1051 = vunpack.c.l.b16 %v224
    %v1052 = vunpack.c.h.b16 %v224
    %v1053 = vunpack.c.l.b16 %v225
    %v1054 = vunpack.c.h.b16 %v225
    %v1055 = vunpack.c.l.b16 %v226
    %v1056 = vunpack.c.h.b16 %v226
    %v1057 = vunpack.c.l.b16 %v227
    %v1058 = vunpack.c.h.b16 %v227
    %v1059 = vunpack.c.l.b16 %v228
    %v1060 = vunpack.c.h.b16 %v228
    %v1061 = vunpack.c.l.b16 %v229
    %v1062 = vunpack.c.h.b16 %v229
    %v1063 = vunpack.c.l.b16 %v230
    %v1064 = vunpack.c.h.b16 %v230
    %v1065 = vunpack.c.l.b16 %v231
    %v1066 = vunpack.c.h.b16 %v231
    %v1067 = vunpack.c.l.b16 %v232
    %v1068 = vunpack.c.h.b16 %v232
    %v1069 = vunpack.c.l.b16 %v233
    %v1070 = vunpack.c.h.b16 %v233
    %v1071 = vunpack.c.l.b16 %v234
    %v1072 = vunpack.c.h.b16 %v234
    %v1073 = vunpack.c.l.b16 %v235
    %v1074 = vunpack.c.h.b16 %v235
    %v1075 = vunpack.c.l.b16 %v236
    %v1076 = vunpack.c.h.b16 %v236
    %v1077 = vunpack.c.l.b16 %v237
    %v1078 = vunpack.c.h.b16 %v237
    %v1079 = vunpack.c.l.b16 %v238
    %v1080 = vunpack.c.h.b16 %v238
    %v1081 = vunpack.c.l.b16 %v239
    %v1082 = vunpack.c.h.b16 %v239
    %v1083 = vunpack.c.l.b16 %v240
    %v1084 = vunpack.c.h.b16 %v240
    %v1085 = vunpack.c.l.b16 %v241
    %v1086 = vunpack.c.h.b16 %v241
    %v1087 = vunpack.c.l.b16 %v242
    %v1088 = vunpack.c.h.b16 %v242
    %v1089 = vunpack.c.l.b16 %v243
    %v1090 = vunpack.c.h.b16 %v243
    %v1091 = vunpack.c.l.b16 %v244
    %v1092 = vunpack.c.h.b16 %v244
    %v1093 = vunpack.c.l.b16 %v245
    %v1094 = vunpack.c.h.b16 %v245
    %v1095 = vunpack.c.l.b16 %v246
    %v1096 = vunpack.c.h.b16 %v246
    %v1097 = vunpack.c.l.b16 %v247
    %v1098 = vunpack.c.h.b16 %v247
    %v1099 = vunpack.c.l.b16 %v248
    %v1100 = vunpack.c.h.b16 %v248
    %v1101 = vunpack.c.l.b16 %v249
    %v1102 = vunpack.c.h.b16 %v249
    %v1103 = vunpack.c.l.b16 %v250
    %v1104 = vunpack.c.h.b16 %v250
    %v1105 = vunpack.c.l.b16 %v251
    %v1106 = vunpack.c.h.b16 %v251
    %v1107 = vunpack.c.l.b16 %v252
    %v1108 = vunpack.c.h.b16 %v252
    %v1109 = vunpack.c.l.b16 %v253
    %v1110 = vunpack.c.h.b16 %v253
    %v1111 = vunpack.c.l.b16 %v254
    %v1112 = vunpack.c.h.b16 %v254
    %v1113 = vunpack.c.l.b16 %v255
    %v1114 = vunpack.c.h.b16 %v255
    %v1115 = vunpack.c.l.b16 %v256
    %v1116 = vunpack.c.h.b16 %v256
    %v1117 = vunpack.c.l.b16 %v257
    %v1118 = vunpack.c.h.b16 %v257
    %v1119 = vunpack.c.l.b16 %v258
    %v1120 = vunpack.c.h.b16 %v258
    %v1121 = vunpack.c.l.b16 %v259
    %v1122 = vunpack.c.h.b16 %v259
    %v1123 = vunpack.c.l.b16 %v260
    %v1124 = vunpack.c.h.b16 %v260
    %v1125 = vunpack.c.l.b16 %v261
    %v1126 = vunpack.c.h.b16 %v261
    %v1127 = vunpack.c.l.b16 %v262
    %v1128 = vunpack.c.h.b16 %v262
    %v1129 = vunpack.c.l.b16 %v263
    %v1130 = vunpack.c.h.b16 %v263
    %v1131 = vunpack.c.l.b16 %v264
    %v1132 = vunpack.c.h.b16 %v264
    %v1133 = vunpack.c.l.b16 %v265
    %v1134 = vunpack.c.h.b16 %v265
    %v1135 = vunpack.c.l.b16 %v266
    %v1136 = vunpack.c.h.b16 %v266
    %v1137 = vunpack.c.l.b16 %v267
    %v1138 = vunpack.c.h.b16 %v267
    %v1139 = vunpack.c.l.b16 %v268
    %v1140 = vunpack.c.h.b16 %v268
    %v1141 = vunpack.c.l.b16 %v269
    %v1142 = vunpack.c.h.b16 %v269
    %v1143 = vunpack.c.l.b16 %v270
    %v1144 = vunpack.c.h.b16 %v270
    %v1145 = vunpack.c.l.b16 %v271
    %v1146 = vunpack.c.h.b16 %v271
    %v1147 = vunpack.c.l.b16 %v272
    %v1148 = vunpack.c.h.b16 %v272
    %v1149 = vunpack.c.l.b16 %v273
    %v1150 = vunpack.c.h.b16 %v273
    %v1151 = vunpack.c.l.b16 %v274
    %v1152 = vunpack.c.h.b16 %v274
    %v1153 = vunpack.c.l.b16 %v275
    %v1154 = vunpack.c.h.b16 %v275
    %v1155 = vunpack.c.l.b16 %v276
    %v1156 = vunpack.c.h.b16 %v276
    %v1157 = vunpack.c.l.b16 %v277
    %v1158 = vunpack.c.h.b16 %v277
    %v1159 = vunpack.c.l.b16 %v278
    %v1160 = vunpack.c.h.b16 %v278
    %v1161 = vunpack.c.l.b16 %v279
    %v1162 = vunpack.c.h.b16 %v279
    %v1163 = vunpack.c.l.b16 %v280
    %v1164 = vunpack.c.h.b16 %v280
    %v1165 = vunpack.c.l.b16 %v281
    %v1166 = vunpack.c.h.b16 %v281
    %v1167 = vunpack.c.l.b16 %v282
    %v1168 = vunpack.c.h.b16 %v282
    %v1169 = vunpack.c.l.b16 %v283
    %v1170 = vunpack.c.h.b16 %v283
    %v1171 = vunpack.c.l.b16 %v284
    %v1172 = vunpack.c.h.b16 %v284
    %v1173 = vunpack.c.l.b16 %v285
    %v1174 = vunpack.c.h.b16 %v285
    %v1175 = vunpack.c.l.b16 %v286
    %v1176 = vunpack.c.h.b16 %v286
    %v1177 = vunpack.c.l.b16 %v287
    %v1178 = vunpack.c.h.b16 %v287
    %v1179 = vunpack.c.l.b16 %v288
    %v1180 = vunpack.c.h.b16 %v288
    %v1181 = vunpack.c.l.b16 %v289
    %v1182 = vunpack.c.h.b16 %v289
    %v1183 = vunpack.c.l.b16 %v290
    %v1184 = vunpack.c.h.b16 %v290
    %v1185 = vunpack.c.l.b16 %v291
    %v1186 = vunpack.c.h.b16 %v291
    %v1187 = vunpack.c.l.b16 %v292
    %v1188 = vunpack.c.h.b16 %v292
    %v1189 = vunpack.c.l.b16 %v293
    %v1190 = vunpack.c.h.b16 %v293
    %v1191 = vunpack.c.l.b16 %v294
    %v1192 = vunpack.c.h.b16 %v294
    %v1193 = vunpack.c.l.b16 %v295
    %v1194 = vunpack.c.h.b16 %v295
    %v1195 = vunpack.c.l.b16 %v296
    %v1196 = vunpack.c.h.b16 %v296
    %v1197 = vunpack.c.l.b16 %v297
    %v1198 = vunpack.c.h.b16 %v297
    %v1199 = vunpack.c.l.b16 %v298
    %v1200 = vunpack.c.h.b16 %v298
    %v1201 = vunpack.c.l.b16 %v299
    %v1202 = vunpack.c.h.b16 %v299
    %v1203 = vunpack.c.l.b16 %v300
    %v1204 = vunpack.c.h.b16 %v300
    %v1205 = vunpack.c.l.b16 %v301
    %v1206 = vunpack.c.h.b16 %v301
    %v1207 = vunpack.c.l.b16 %v302
    %v1208 = vunpack.c.h.b16 %v302
    %v1209 = vunpack.c.l.b16 %v303
    %v1210 = vunpack.c.h.b16 %v303
    %v1211 = vunpack.c.l.b16 %v304
    %v1212 = vunpack.c.h.b16 %v304
    %v1213 = vunpack.c.l.b16 %v305
    %v1214 = vunpack.c.h.b16 %v305
    %v1215 = vunpack.c.l.b16 %v306
    %v1216 = vunpack.c.h.b16 %v306
    %v1217 = vunpack.c.l.b16 %v307
    %v1218 = vunpack.c.h.b16 %v307
    %v1219 = vunpack.c.l.b16 %v308
    %v1220 = vunpack.c.h.b16 %v308
    %v1221 = vunpack.c.l.b16 %v309
    %v1222 = vunpack.c.h.b16 %v309
    %v1223 = vunpack.c.l.b16 %v310
    %v1224 = vunpack.c.h.b16 %v310
    %v1225 = vunpack.c.l.b16 %v311
    %v1226 = vunpack.c.h.b16 %v311
    %v1227 = vunpack.c.l.b16 %v312
    %v1228 = vunpack.c.h.b16 %v312
    %v1229 = vunpack.c.l.b16 %v313
    %v1230 = vunpack.c.h.b16 %v313
    %v1231 = vunpack.c.l.b16 %v314
    %v1232 = vunpack.c.h.b16 %v314
    %v1233 = vunpack.c.l.b16 %v315
    %v1234 = vunpack.c.h.b16 %v315
    %v1235 = vunpack.c.l.b16 %v316
    %v1236 = vunpack.c.h.b16 %v316
    %v1237 = vunpack.c.l.b16 %v317
    %v1238 = vunpack.c.h.b16 %v317
    %v1239 = vunpack.c.l.b16 %v318
    %v1240 = vunpack.c.h.b16 %v318
    %v1241 = vunpack.c.l.b16 %v319
    %v1242 = vunpack.c.h.b16 %v319
    %v1243 = vunpack.c.l.b16 %v320
    %v1244 = vunpack.c.h.b16 %v320
    %v1245 = vunpack.c.l.b16 %v321
    %v1246 = vunpack.c.h.b16 %v321
    %v1247 = vunpack.c.l.b16 %v322
    %v1248 = vunpack.c.h.b16 %v322
    %v1249 = vunpack.c.l.b16 %v323
    %v1250 = vunpack.c.h.b16 %v323
    %v1251 = vunpack.c.l.b16 %v324
    %v1252 = vunpack.c.h.b16 %v324
    %v1253 = vunpack.c.l.b16 %v325
    %v1254 = vunpack.c.h.b16 %v325
    %v1255 = vunpack.c.l.b16 %v326
    %v1256 = vunpack.c.h.b16 %v326
    %v1257 = vunpack.c.l.b16 %v327
    %v1258 = vunpack.c.h.b16 %v327
    %v1259 = vunpack.c.l.b16 %v328
    %v1260 = vunpack.c.h.b16 %v328
    %v1261 = vunpack.c.l.b16 %v329
    %v1262 = vunpack.c.h.b16 %v329
    %v1263 = vunpack.c.l.b16 %v330
    %v1264 = vunpack.c.h.b16 %v330
    %v1265 = vunpack.c.l.b16 %v331
    %v1266 = vunpack.c.h.b16 %v331
    %v1267 = vunpack.c.l.b16 %v332
    %v1268 = vunpack.c.h.b16 %v332
    %v1269 = vunpack.c.l.b16 %v333
    %v1270 = vunpack.c.h.b16 %v333
    %v1271 = vunpack.c.l.b16 %v334
    %v1272 = vunpack.c.h.b16 %v334
    %v1273 = vunpack.c.l.b16 %v335
    %v1274 = vunpack.c.h.b16 %v335
    %v1275 = vunpack.c.l.b16 %v336
    %v1276 = vunpack.c.h.b16 %v336
    %v1277 = vunpack.c.l.b16 %v337
    %v1278 = vunpack.c.h.b16 %v337
    %v1279 = vunpack.c.l.b16 %v338
    %v1280 = vunpack.c.h.b16 %v338
    %v1281 = vunpack.c.l.b16 %v339
    %v1282 = vunpack.c.h.b16 %v339
    %v1283 = vunpack.c.l.b16 %v340
    %v1284 = vunpack.c.h.b16 %v340
    %v1285 = vunpack.c.l.b16 %v341
    %v1286 = vunpack.c.h.b16 %v341
    %v1287 = vunpack.c.l.b16 %v342
    %v1288 = vunpack.c.h.b16 %v342
    %v1289 = vunpack.c.l.b16 %v343
    %v1290 = vunpack.c.h.b16 %v343
    %v1291 = vunpack.c.l.b16 %v344
    %v1292 = vunpack.c.h.b16 %v344
    %v1293 = vunpack.c.l.b16 %v345
    %v1294 = vunpack.c.h.b16 %v345
    %v1295 = vunpack.c.l.b16 %v346
    %v1296 = vunpack.c.h.b16 %v346
    %v1297 = vunpack.c.l.b16 %v347
    %v1298 = vunpack.c.h.b16 %v347
    %v1299 = vunpack.c.l.b16 %v348
    %v1300 = vunpack.c.h.b16 %v348
    %v1301 = vunpack.c.l.b16 %v349
    %v1302 = vunpack.c.h.b16 %v349
    %v1303 = vunpack.c.l.b16 %v350
    %v1304 = vunpack.c.h.b16 %v350
    %v1305 = vunpack.c.l.b16 %v351
    %v1306 = vunpack.c.h.b16 %v351
    %v1307 = vunpack.c.l.b16 %v352
    %v1308 = vunpack.c.h.b16 %v352
    %v1309 = vunpack.c.l.b16 %v353
    %v1310 = vunpack.c.h.b16 %v353
    %v1311 = vunpack.c.l.b16 %v354
    %v1312 = vunpack.c.h.b16 %v354
    %v1313 = vunpack.c.l.b16 %v355
    %v1314 = vunpack.c.h.b16 %v355
    %v1315 = vunpack.c.l.b16 %v356
    %v1316 = vunpack.c.h.b16 %v356
    %v1317 = vunpack.c.l.b16 %v357
    %v1318 = vunpack.c.h.b16 %v357
    %v1319 = vunpack.c.l.b16 %v358
    %v1320 = vunpack.c.h.b16 %v358
    %v1321 = vunpack.c.l.b16 %v359
    %v1322 = vunpack.c.h.b16 %v359
    %v1323 = vunpack.c.l.b16 %v360
    %v1324 = vunpack.c.h.b16 %v360
    %v1325 = vunpack.c.l.b16 %v361
    %v1326 = vunpack.c.h.b16 %v361
    %v1327 = vunpack.c.l.b16 %v362
    %v1328 = vunpack.c.h.b16 %v362
    %v1329 = vunpack.c.l.b16 %v363
    %v1330 = vunpack.c.h.b16 %v363
    %v1331 = vunpack.c.l.b16 %v364
    %v1332 = vunpack.c.h.b16 %v364
    %v1333 = vunpack.c.l.b16 %v365
    %v1334 = vunpack.c.h.b16 %v365
    %v1335 = vunpack.c.l.b16 %v366
    %v1336 = vunpack.c.h.b16 %v366
    %v1337 = vunpack.c.l.b16 %v367
    %v1338 = vunpack.c.h.b16 %v367
    %v1339 = vunpack.c.l.b16 %v368
    %v1340 = vunpack.c.h.b16 %v368
    %v1341 = vunpack.c.l.b16 %v369
    %v1342 = vunpack.c.h.b16 %v369
    %v1343 = vunpack.c.l.b16 %v370
    %v1344 = vunpack.c.h.b16 %v370
    %v1345 = vunpack.c.l.b16 %v371
    %v1346 = vunpack.c.h.b16 %v371
    %v1347 = vunpack.c.l.b16 %v372
    %v1348 = vunpack.c.h.b16 %v372
    %v1349 = vunpack.c.l.b16 %v373
    %v1350 = vunpack.c.h.b16 %v373
    %v1351 = vunpack.c.l.b16 %v374
    %v1352 = vunpack.c.h.b16 %v374
    %v1353 = vunpack.c.l.b16 %v375
    %v1354 = vunpack.c.h.b16 %v375
    %v1355 = vunpack.c.l.b16 %v376
    %v1356 = vunpack.c.h.b16 %v376
    %v1357 = vunpack.c.l.b16 %v377
    %v1358 = vunpack.c.h.b16 %v377
    %v1359 = vunpack.c.l.b16 %v378
    %v1360 = vunpack.c.h.b16 %v378
    %v1361 = vunpack.c.l.b16 %v379
    %v1362 = vunpack.c.h.b16 %v379
    %v1363 = vunpack.c.l.b16 %v380
    %v1364 = vunpack.c.h.b16 %v380
    %v1365 = vunpack.c.l.b16 %v381
    %v1366 = vunpack.c.h.b16 %v381
    %v1367 = vunpack.c.l.b16 %v382
    %v1368 = vunpack.c.h.b16 %v382
    %v1369 = vunpack.c.l.b16 %v383
    %v1370 = vunpack.c.h.b16 %v383
    %v1371 = vunpack.c.l.b16 %v384
    %v1372 = vunpack.c.h.b16 %v384
    %v1373 = vunpack.c.l.b16 %v385
    %v1374 = vunpack.c.h.b16 %v385
    %v1375 = vunpack.c.l.b16 %v386
    %v1376 = vunpack.c.h.b16 %v386
    %v1377 = vunpack.c.l.b16 %v387
    %v1378 = vunpack.c.h.b16 %v387
    %v1379 = vunpack.c.l.b16 %v388
    %v1380 = vunpack.c.h.b16 %v388
    %v1381 = vunpack.c.l.b16 %v389
    %v1382 = vunpack.c.h.b16 %v389
    %v1383 = vunpack.c.l.b16 %v390
    %v1384 = vunpack.c.h.b16 %v390
    %v1385 = vunpack.c.l.b16 %v391
    %v1386 = vunpack.c.h.b16 %v391
    %v1387 = vunpack.c.l.b16 %v392
    %v1388 = vunpack.c.h.b16 %v392
    %v1389 = vunpack.c.l.b16 %v393
    %v1390 = vunpack.c.h.b16 %v393
    %v1391 = vunpack.c.l.b16 %v394
    %v1392 = vunpack.c.h.b16 %v394
    %v1393 = vunpack.c.l.b16 %v395
    %v1394 = vunpack.c.h.b16 %v395
    %v1395 = vunpack.c.l.b16 %v396
    %v1396 = vunpack.c.h.b16 %v396
    %v1397 = vunpack.c.l.b16 %v397
    %v1398 = vunpack.c.h.b16 %v397
    %v1399 = vunpack.c.l.b16 %v398
    %v1400 = vunpack.c.h.b16 %v398
    %v1401 = vunpack.c.l.b16 %v399
    %v1402 = vunpack.c.h.b16 %v399
    %v1403 = vunpack.c.l.b16 %v400
    %v1404 = vunpack.c.h.b16 %v400
    %v1405 = vunpack.c.l.b16 %v401
    %v1406 = vunpack.c.h.b16 %v401
    %v1407 = vunpack.c.l.b16 %v402
    %v1408 = vunpack.c.h.b16 %v402
    %v1409 = vunpack.c.l.b16 %v403
    %v1410 = vunpack.c.h.b16 %v403
    %v1411 = vunpack.c.l.b16 %v404
    %v1412 = vunpack.c.h.b16 %v404
    %v1413 = vunpack.c.l.b16 %v405
    %v1414 = vunpack.c.h.b16 %v405
    %v1415 = vunpack.c.l.b16 %v406
    %v1416 = vunpack.c.h.b16 %v406
    %v1417 = vunpack.c.l.b16 %v407
    %v1418 = vunpack.c.h.b16 %v407
    %v1419 = vunpack.c.l.b16 %v408
    %v1420 = vunpack.c.h.b16 %v408
    %v1421 = vunpack.c.l.b16 %v409
    %v1422 = vunpack.c.h.b16 %v409
    %v1423 = vunpack.c.l.b16 %v410
    %v1424 = vunpack.c.h.b16 %v410
    %v1425 = vunpack.c.l.b16 %v411
    %v1426 = vunpack.c.h.b16 %v411
    %v1427 = vunpack.c.l.b16 %v412
    %v1428 = vunpack.c.h.b16 %v412
    %v1429 = vunpack.c.l.b16 %v413
    %v1430 = vunpack.c.h.b16 %v413
    %v1431 = vunpack.c.l.b16 %v414
    %v1432 = vunpack.c.h.b16 %v414
    %v1433 = vunpack.c.l.b16 %v415
    %v1434 = vunpack.c.h.b16 %v415
    %v1435 = vunpack.c.l.b16 %v416
    %v1436 = vunpack.c.h.b16 %v416
    %v1437 = vunpack.c.l.b16 %v417
    %v1438 = vunpack.c.h.b16 %v417
    %v1439 = vunpack.c.l.b16 %v418
    %v1440 = vunpack.c.h.b16 %v418
    %v1441 = vunpack.c.l.b16 %v419
    %v1442 = vunpack.c.h.b16 %v419
    %v1443 = vunpack.c.l.b16 %v420
    %v1444 = vunpack.c.h.b16 %v420
    %v1445 = vunpack.c.l.b16 %v421
    %v1446 = vunpack.c.h.b16 %v421
    %v1447 = vunpack.c.l.b16 %v422
    %v1448 = vunpack.c.h.b16 %v422
    %v1449 = vunpack.c.l.b16 %v423
    %v1450 = vunpack.c.h.b16 %v423
    %v1451 = vunpack.c.l.b16 %v424
    %v1452 = vunpack.c.h.b16 %v424
    %v1453 = vunpack.c.l.b16 %v425
    %v1454 = vunpack.c.h.b16 %v425
    %v1455 = vunpack.c.l.b16 %v426
    %v1456 = vunpack.c.h.b16 %v426
    %v1457 = vunpack.c.l.b16 %v427
    %v1458 = vunpack.c.h.b16 %v427
    %v1459 = vunpack.c.l.b16 %v428
    %v1460 = vunpack.c.h.b16 %v428
    %v1461 = vunpack.c.l.b16 %v429
    %v1462 = vunpack.c.h.b16 %v429
    %v1463 = vunpack.c.l.b16 %v430
    %v1464 = vunpack.c.h.b16 %v430
    %v1465 = vunpack.c.l.b16 %v431
    %v1466 = vunpack.c.h.b16 %v431
    %v1467 = vunpack.c.l.b16 %v432
    %v1468 = vunpack.c.h.b16 %v432
    %v1469 = vunpack.c.l.b16 %v433
    %v1470 = vunpack.c.h.b16 %v433
    %v1471 = vunpack.c.l.b16 %v434
    %v1472 = vunpack.c.h.b16 %v434
    %v1473 = vunpack.c.l.b16 %v435
    %v1474 = vunpack.c.h.b16 %v435
    %v1475 = vunpack.c.l.b16 %v436
    %v1476 = vunpack.c.h.b16 %v436
    %v1477 = vunpack.c.l.b16 %v437
    %v1478 = vunpack.c.h.b16 %v437
    %v1479 = vunpack.c.l.b16 %v438
    %v1480 = vunpack.c.h.b16 %v438
    %v1481 = vunpack.c.l.b16 %v439
    %v1482 = vunpack.c.h.b16 %v439
    %v1483 = vunpack.c.l.b16 %v440
    %v1484 = vunpack.c.h.b16 %v440
    %v1485 = vunpack.c.l.b16 %v441
    %v1486 = vunpack.c.h.b16 %v441
    %v1487 = vunpack.c.l.b16 %v442
    %v1488 = vunpack.c.h.b16 %v442
    %v1489 = vunpack.c.l.b16 %v443
    %v1490 = vunpack.c.h.b16 %v443
    %v1491 = vunpack.c.l.b16 %v444
    %v1492 = vunpack.c.h.b16 %v444
    %v1493 = vunpack.c.l.b16 %v445
    %v1494 = vunpack.c.h.b16 %v445
    %v1495 = vunpack.c.l.b16 %v446
    %v1496 = vunpack.c.h.b16 %v446
    %v1497 = vunpack.c.l.b16 %v447
    %v1498 = vunpack.c.h.b16 %v447
    %v1499 = vunpack.c.l.b16 %v448
    %v1500 = vunpack.c.h.b16 %v448
    %v1501 = vunpack.c.l.b16 %v449
    %v1502 = vunpack.c.h.b16 %v449
    %v1503 = vunpack.c.l.b16 %v450
    %v1504 = vunpack.c.h.b16 %v450
    %v1505 = vunpack.c.l.b16 %v451
    %v1506 = vunpack.c.h.b16 %v451
    %v1507 = vunpack.c.l.b16 %v452
    %v1508 = vunpack.c.h.b16 %v452
    %v1509 = vunpack.c.l.b16 %v453
    %v1510 = vunpack.c.h.b16 %v453
    %v1511 = vunpack.c.l.b16 %v454
    %v1512 = vunpack.c.h.b16 %v454
    %v1513 = vunpack.c.l.b16 %v455
    %v1514 = vunpack.c.h.b16 %v455
    %v1515 = vunpack.c.l.b16 %v456
    %v1516 = vunpack.c.h.b16 %v456
    %v1517 = vunpack.c.l.b16 %v457
    %v1518 = vunpack.c.h.b16 %v457
    %v1519 = vunpack.c.l.b16 %v458
    %v1520 = vunpack.c.h.b16 %v458
    %v1521 = vunpack.c.l.b16 %v459
    %v1522 = vunpack.c.h.b16 %v459
    %v1523 = vunpack.c.l.b16 %v460
    %v1524 = vunpack.c.h.b16 %v460
    %v1525 = vunpack.c.l.b16 %v461
    %v1526 = vunpack.c.h.b16 %v461
    %v1527 = vunpack.c.l.b16 %v462
    %v1528 = vunpack.c.h.b16 %v462
    %v1529 = vunpack.c.l.b16 %v463
    %v1530 = vunpack.c.h.b16 %v463
    %v1531 = vunpack.c.l.b16 %v464
    %v1532 = vunpack.c.h.b16 %v464
    %v1533 = vunpack.c.l.b16 %v465
    %v1534 = vunpack.c.h.b16 %v465
    %v1535 = vunpack.c.l.b16 %v466
    %v1536 = vunpack.c.h.b16 %v466
    %v1537 = vunpack.c.l.b16 %v467
    %v1538 = vunpack.c.h.b16 %v467
    %v1539 = vunpack.c.l.b16 %v468
    %v1540 = vunpack.c.h.b16 %v468
    %v1541 = vunpack.c.l.b16 %v469
    %v1542 = vunpack.c.h.b16 %v469
    %v1543 = vunpack.c.l.b16 %v470
    %v1544 = vunpack.c.h.b16 %v470
    %v1545 = vunpack.c.l.b16 %v471
    %v1546 = vunpack.c.h.b16 %v471
    %v1547 = vunpack.c.l.b16 %v472
    %v1548 = vunpack.c.h.b16 %v472
    %v1549 = vunpack.c.l.b16 %v473
    %v1550 = vunpack.c.h.b16 %v473
    %v1551 = vunpack.c.l.b16 %v474
    %v1552 = vunpack.c.h.b16 %v474
    %v1553 = vunpack.c.l.b16 %v475
    %v1554 = vunpack.c.h.b16 %v475
    %v1555 = vunpack.c.l.b16 %v476
    %v1556 = vunpack.c.h.b16 %v476
    %v1557 = vunpack.c.l.b16 %v477
    %v1558 = vunpack.c.h.b16 %v477
    %v1559 = vunpack.c.l.b16 %v478
    %v1560 = vunpack.c.h.b16 %v478
    %v1561 = vunpack.c.l.b16 %v479
    %v1562 = vunpack.c.h.b16 %v479
    %v1563 = vunpack.c.l.b16 %v480
    %v1564 = vunpack.c.h.b16 %v480
    %v1565 = vunpack.c.l.b16 %v481
    %v1566 = vunpack.c.h.b16 %v481
    %v1567 = vunpack.c.l.b16 %v482
    %v1568 = vunpack.c.h.b16 %v482
    %v1569 = vunpack.c.l.b16 %v483
    %v1570 = vunpack.c.h.b16 %v483
    %v1571 = vunpack.c.l.b16 %v484
    %v1572 = vunpack.c.h.b16 %v484
    %v1573 = vunpack.c.l.b16 %v485
    %v1574 = vunpack.c.h.b16 %v485
    %v1575 = vunpack.c.l.b16 %v486
    %v1576 = vunpack.c.h.b16 %v486
    %v1577 = vunpack.c.l.b16 %v487
    %v1578 = vunpack.c.h.b16 %v487
    %v1579 = vunpack.c.l.b16 %v488
    %v1580 = vunpack.c.h.b16 %v488
    %v1581 = vunpack.c.l.b16 %v489
    %v1582 = vunpack.c.h.b16 %v489
    %v1583 = vunpack.c.l.b16 %v490
    %v1584 = vunpack.c.h.b16 %v490
    %v1585 = vunpack.c.l.b16 %v491
    %v1586 = vunpack.c.h.b16 %v491
    %v1587 = vunpack.c.l.b16 %v492
    %v1588 = vunpack.c.h.b16 %v492
    %v1589 = vunpack.c.l.b16 %v493
    %v1590 = vunpack.c.h.b16 %v493
    %v1591 = vunpack.c.l.b16 %v494
    %v1592 = vunpack.c.h.b16 %v494
    %v1593 = vunpack.c.l.b16 %v495
    %v1594 = vunpack.c.h.b16 %v495
    %v1595 = vunpack.c.l.b16 %v496
    %v1596 = vunpack.c.h.b16 %v496
    %v1597 = vunpack.c.l.b16 %v497
    %v1598 = vunpack.c.h.b16 %v497
    %v1599 = vunpack.c.l.b16 %v498
    %v1600 = vunpack.c.h.b16 %v498
    %v1601 = vunpack.c.l.b16 %v499
    %v1602 = vunpack.c.h.b16 %v499
    %v1603 = vunpack.c.l.b16 %v500
    %v1604 = vunpack.c.h.b16 %v500
    %v1605 = vunpack.c.l.b16 %v501
    %v1606 = vunpack.c.h.b16 %v501
    %v1607 = vunpack.c.l.b16 %v502
    %v1608 = vunpack.c.h.b16 %v502
    %v1609 = vunpack.c.l.b16 %v503
    %v1610 = vunpack.c.h.b16 %v503
    %v1611 = vunpack.c.l.b16 %v504
    %v1612 = vunpack.c.h.b16 %v504
    %v1613 = vunpack.c.l.b16 %v505
    %v1614 = vunpack.c.h.b16 %v505
    %v1615 = vunpack.c.l.b16 %v506
    %v1616 = vunpack.c.h.b16 %v506
    %v1617 = vunpack.c.l.b16 %v507
    %v1618 = vunpack.c.h.b16 %v507
    %v1619 = vunpack.c.l.b16 %v508
    %v1620 = vunpack.c.h.b16 %v508
    %v1621 = vunpack.c.l.b16 %v509
    %v1622 = vunpack.c.h.b16 %v509
    %v1623 = vunpack.c.l.b16 %v510
    %v1624 = vunpack.c.h.b16 %v510
    %v1625 = vunpack.c.l.b16 %v511
    %v1626 = vunpack.c.h.b16 %v511
    %v1627 = vunpack.c.l.b16 %v512
    %v1628 = vunpack.c.h.b16 %v512
    %v1629 = vunpack.c.l.b16 %v513
    %v1630 = vunpack.c.h.b16 %v513
    %v1631 = vunpack.c.l.b16 %v514
    %v1632 = vunpack.c.h.b16 %v514
    %v1633 = vunpack.c.l.b16 %v515
    %v1634 = vunpack.c.h.b16 %v515
    %v1635 = vunpack.c.l.b16 %v516
    %v1636 = vunpack.c.h.b16 %v516
    %v1637 = vunpack.c.l.b16 %v517
    %v1638 = vunpack.c.h.b16 %v517
    %v1639 = vunpack.c.l.b16 %v518
    %v1640 = vunpack.c.h.b16 %v518
    %v1641 = vunpack.c.l.b16 %v519
    %v1642 = vunpack.c.h.b16 %v519
    %v1643 = vunpack.c.l.b16 %v520
    %v1644 = vunpack.c.h.b16 %v520
    %v1645 = vunpack.c.l.b16 %v521
    %v1646 = vunpack.c.h.b16 %v521
    %v1647 = vunpack.c.l.b16 %v522
    %v1648 = vunpack.c.h.b16 %v522
    %v1649 = vunpack.c.l.b16 %v523
    %v1650 = vunpack.c.h.b16 %v523
    %v1651 = vunpack.c.l.b16 %v524
    %v1652 = vunpack.c.h.b16 %v524
    %v1653 = vunpack.c.l.b16 %v525
    %v1654 = vunpack.c.h.b16 %v525
    %v1655 = vunpack.c.l.b16 %v526
    %v1656 = vunpack.c.h.b16 %v526
    %v1657 = vunpack.c.l.b16 %v527
    %v1658 = vunpack.c.h.b16 %v527
    %v1659 = vunpack.c.l.b16 %v528
    %v1660 = vunpack.c.h.b16 %v528
    %v1661 = vunpack.c.l.b16 %v529
    %v1662 = vunpack.c.h.b16 %v529
    %v1663 = vunpack.c.l.b16 %v530
    %v1664 = vunpack.c.h.b16 %v530
    %v1665 = vunpack.c.l.b16 %v531
    %v1666 = vunpack.c.h.b16 %v531
    %v1667 = vunpack.c.l.b16 %v532
    %v1668 = vunpack.c.h.b16 %v532
    %v1669 = vunpack.c.l.b16 %v533
    %v1670 = vunpack.c.h.b16 %v533
    %v1671 = vunpack.c.l.b16 %v534
    %v1672 = vunpack.c.h.b16 %v534
    %v1673 = vunpack.c.l.b16 %v535
    %v1674 = vunpack.c.h.b16 %v535
    %v1675 = vunpack.c.l.b16 %v536
    %v1676 = vunpack.c.h.b16 %v536
    %v1677 = vunpack.c.l.b16 %v537
    %v1678 = vunpack.c.h.b16 %v537
    %v1679 = vunpack.c.l.b16 %v538
    %v1680 = vunpack.c.h.b16 %v538
    %v1681 = vunpack.c.l.b16 %v539
    %v1682 = vunpack.c.h.b16 %v539
    %v1683 = vunpack.c.l.b16 %v540
    %v1684 = vunpack.c.h.b16 %v540
    %v1685 = vunpack.c.l.b16 %v541
    %v1686 = vunpack.c.h.b16 %v541
    %v1687 = vunpack.c.l.b16 %v542
    %v1688 = vunpack.c.h.b16 %v542
    %v1689 = vunpack.c.l.b16 %v543
    %v1690 = vunpack.c.h.b16 %v543
    %v1691 = vunpack.c.l.b16 %v544
    %v1692 = vunpack.c.h.b16 %v544
    %v1693 = vunpack.c.l.b16 %v545
    %v1694 = vunpack.c.h.b16 %v545
    %v1695 = vunpack.c.l.b16 %v546
    %v1696 = vunpack.c.h.b16 %v546
    %v1697 = vunpack.c.l.b16 %v547
    %v1698 = vunpack.c.h.b16 %v547
    %v1699 = vunpack.c.l.b16 %v548
    %v1700 = vunpack.c.h.b16 %v548
    %v1701 = vunpack.c.l.b16 %v549
    %v1702 = vunpack.c.h.b16 %v549
    %v1703 = vunpack.c.l.b16 %v550
    %v1704 = vunpack.c.h.b16 %v550
    %v1705 = vunpack.c.l.b16 %v551
    %v1706 = vunpack.c.h.b16 %v551
    %v1707 = vunpack.c.l.b16 %v552
    %v1708 = vunpack.c.h.b16 %v552
    %v1709 = vunpack.c.l.b16 %v553
    %v1710 = vunpack.c.h.b16 %v553
    %v1711 = vunpack.c.l.b16 %v554
    %v1712 = vunpack.c.h.b16 %v554
    %v1713 = vunpack.c.l.b16 %v555
    %v1714 = vunpack.c.h.b16 %v555
    %v1715 = vunpack.c.l.b16 %v556
    %v1716 = vunpack.c.h.b16 %v556
    %v1717 = vunpack.c.l.b16 %v557
    %v1718 = vunpack.c.h.b16 %v557
    %v1719 = vunpack.c.l.b16 %v558
    %v1720 = vunpack.c.h.b16 %v558
    %v1721 = vunpack.c.l.b16 %v559
    %v1722 = vunpack.c.h.b16 %v559
    %v1723 = vunpack.c.l.b16 %v560
    %v1724 = vunpack.c.h.b16 %v560
    %v1725 = vunpack.c.l.b16 %v561
    %v1726 = vunpack.c.h.b16 %v561
    %v1727 = vunpack.c.l.b16 %v562
    %v1728 = vunpack.c.h.b16 %v562
    %v1729 = vunpack.c.l.b16 %v563
    %v1730 = vunpack.c.h.b16 %v563
    %v1731 = vunpack.c.l.b16 %v564
    %v1732 = vunpack.c.h.b16 %v564
    %v1733 = vunpack.c.l.b16 %v565
    %v1734 = vunpack.c.h.b16 %v565
    %v1735 = vunpack.c.l.b16 %v566
    %v1736 = vunpack.c.h.b16 %v566
    %v1737 = vunpack.c.l.b16 %v567
    %v1738 = vunpack.c.h.b16 %v567
    %v1739 = vunpack.c.l.b16 %v568
    %v1740 = vunpack.c.h.b16 %v568
    %v1741 = vunpack.c.l.b16 %v569
    %v1742 = vunpack.c.h.b16 %v569
    %v1743 = vpack.c.b16 %v983, %v975
    %v1744 = vpack.c.b16 %v984, %v976
    %v1745 = vpack.c.b16 %v985, %v977
    %v1746 = vpack.c.b16 %v986, %v978
    %v1747 = vpack.c.b16 %v987, %v979
    %v1748 = vpack.c.b16 %v988, %v980
    %v1749 = vpack.c.b16 %v989, %v981
    %v1750 = vpack.c.b16 %v990, %v982
    %v1751 = vpack.c.b16 %v999, %v991
    %v1752 = vpack.c.b16 %v1000, %v992
    %v1753 = vpack.c.b16 %v1001, %v993
    %v1754 = vpack.c.b16 %v1002, %v994
    %v1755 = vpack.c.b16 %v1003, %v995
    %v1756 = vpack.c.b16 %v1004, %v996
    %v1757 = vpack.c.b16 %v1005, %v997
    %v1758 = vpack.c.b16 %v1006, %v998
    %v1759 = vpack.c.b16 %v1015, %v1007
    %v1760 = vpack.c.b16 %v1016, %v1008
    %v1761 = vpack.c.b16 %v1017, %v1009
    %v1762 = vpack.c.b16 %v1018, %v1010
    %v1763 = vpack.c.b16 %v1019, %v1011
    %v1764 = vpack.c.b16 %v1020, %v1012
    %v1765 = vpack.c.b16 %v1021, %v1013
    %v1766 = vpack.c.b16 %v1022, %v1014
    %v1767 = vpack.c.b16 %v1031, %v1023
    %v1768 = vpack.c.b16 %v1032, %v1024
    %v1769 = vpack.c.b16 %v1033, %v1025
    %v1770 = vpack.c.b16 %v1034, %v1026
    %v1771 = vpack.c.b16 %v1035, %v1027
    %v1772 = vpack.c.b16 %v1036, %v1028
    %v1773 = vpack.c.b16 %v1037, %v1029
    %v1774 = vpack.c.b16 %v1038, %v1030
    %v1775 = vpack.c.b16 %v1047, %v1039
    %v1776 = vpack.c.b16 %v1048, %v1040
    %v1777 = vpack.c.b16 %v1049, %v1041
    %v1778 = vpack.c.b16 %v1050, %v1042
    %v1779 = vpack.c.b16 %v1051, %v1043
    %v1780 = vpack.c.b16 %v1052, %v1044
    %v1781 = vpack.c.b16 %v1053, %v1045
    %v1782 = vpack.c.b16 %v1054, %v1046
    %v1783 = vpack.c.b16 %v1063, %v1055
    %v1784 = vpack.c.b16 %v1064, %v1056
    %v1785 = vpack.c.b16 %v1065, %v1057
    %v1786 = vpack.c.b16 %v1066, %v1058
    %v1787 = vpack.c.b16 %v1067, %v1059
    %v1788 = vpack.c.b16 %v1068, %v1060
    %v1789 = vpack.c.b16 %v1069, %v1061
    %v1790 = vpack.c.b16 %v1070, %v1062
    %v1791 = vpack.c.b16 %v1079, %v1071
    %v1792 = vpack.c.b16 %v1080, %v1072
    %v1793 = vpack.c.b16 %v1081, %v1073
    %v1794 = vpack.c.b16 %v1082, %v1074
    %v1795 = vpack.c.b16 %v1083, %v1075
    %v1796 = vpack.c.b16 %v1084, %v1076
    %v1797 = vpack.c.b16 %v1085, %v1077
    %v1798 = vpack.c.b16 %v1086, %v1078
    %v1799 = vpack.c.b16 %v1095, %v1087
    %v1800 = vpack.c.b16 %v1096, %v1088
    %v1801 = vpack.c.b16 %v1097, %v1089
    %v1802 = vpack.c.b16 %v1098, %v1090
    %v1803 = vpack.c.b16 %v1099, %v1091
    %v1804 = vpack.c.b16 %v1100, %v1092
    %v1805 = vpack.c.b16 %v1101, %v1093
    %v1806 = vpack.c.b16 %v1102, %v1094
    %v1807 = vpack.c.b16 %v1111, %v1103
    %v1808 = vpack.c.b16 %v1112, %v1104
    %v1809 = vpack.c.b16 %v1113, %v1105
    %v1810 = vpack.c.b16 %v1114, %v1106
    %v1811 = vpack.c.b16 %v1115, %v1107
    %v1812 = vpack.c.b16 %v1116, %v1108
    %v1813 = vpack.c.b16 %v1117, %v1109
    %v1814 = vpack.c.b16 %v1118, %v1110
    %v1815 = vpack.c.b16 %v1127, %v1119
    %v1816 = vpack.c.b16 %v1128, %v1120
    %v1817 = vpack.c.b16 %v1129, %v1121
    %v1818 = vpack.c.b16 %v1130, %v1122
    %v1819 = vpack.c.b16 %v1131, %v1123
    %v1820 = vpack.c.b16 %v1132, %v1124
    %v1821 = vpack.c.b16 %v1133, %v1125
    %v1822 = vpack.c.b16 %v1134, %v1126
    %v1823 = vpack.c.b16 %v1143, %v1135
    %v1824 = vpack.c.b16 %v1144, %v1136
    %v1825 = vpack.c.b16 %v1145, %v1137
    %v1826 = vpack.c.b16 %v1146, %v1138
    %v1827 = vpack.c.b16 %v1147, %v1139
    %v1828 = vpack.c.b16 %v1148, %v1140
    %v1829 = vpack.c.b16 %v1149, %v1141
    %v1830 = vpack.c.b16 %v1150, %v1142
    %v1831 = vpack.c.b16 %v1159, %v1151
    %v1832 = vpack.c.b16 %v1160, %v1152
    %v1833 = vpack.c.b16 %v1161, %v1153
    %v1834 = vpack.c.b16 %v1162, %v1154
    %v1835 = vpack.c.b16 %v1163, %v1155
    %v1836 = vpack.c.b16 %v1164, %v1156
    %v1837 = vpack.c.b16 %v1165, %v1157
    %v1838 = vpack.c.b16 %v1166, %v1158
    %v1839 = vpack.c.b16 %v1175, %v1167
    %v1840 = vpack.c.b16 %v1176, %v1168
    %v1841 = vpack.c.b16 %v1177, %v1169
    %v1842 = vpack.c.b16 %v1178, %v1170
    %v1843 = vpack.c.b16 %v1179, %v1171
    %v1844 = vpack.c.b16 %v1180, %v1172
    %v1845 = vpack.c.b16 %v1181, %v1173
    %v1846 = vpack.c.b16 %v1182, %v1174
    %v1847 = vpack.c.b16 %v1191, %v1183
    %v1848 = vpack.c.b16 %v1192, %v1184
    %v1849 = vpack.c.b16 %v1193, %v1185
    %v1850 = vpack.c.b16 %v1194, %v1186
    %v1851 = vpack.c.b16 %v1195, %v1187
    %v1852 = vpack.c.b16 %v1196, %v1188
    %v1853 = vpack.c.b16 %v1197, %v1189
    %v1854 = vpack.c.b16 %v1198, %v1190
    %v1855 = vpack.c.b16 %v1207, %v1199
    %v1856 = vpack.c.b16 %v1208, %v1200
    %v1857 = vpack.c.b16 %v1209, %v1201
    %v1858 = vpack.c.b16 %v1210, %v1202
    %v1859 = vpack.c.b16 %v1211, %v1203
    %v1860 = vpack.c.b16 %v1212, %v1204
    %v1861 = vpack.c.b16 %v1213, %v1205
    %v1862 = vpack.c.b16 %v1214, %v1206
    %v1863 = vpack.c.b16 %v1223, %v1215
    %v1864 = vpack.c.b16 %v1224, %v1216
    %v1865 = vpack.c.b16 %v1225, %v1217
    %v1866 = vpack.c.b16 %v1226, %v1218
    %v1867 = vpack.c.b16 %v1227, %v1219
    %v1868 = vpack.c.b16 %v1228, %v1220
    %v1869 = vpack.c.b16 %v1229, %v1221
    %v1870 = vpack.c.b16 %v1230, %v1222
    %v1871 = vpack.c.b16 %v1239, %v1231
    %v1872 = vpack.c.b16 %v1240, %v1232
    %v1873 = vpack.c.b16 %v1241, %v1233
    %v1874 = vpack.c.b16 %v1242, %v1234
    %v1875 = vpack.c.b16 %v1243, %v1235
    %v1876 = vpack.c.b16 %v1244, %v1236
    %v1877 = vpack.c.b16 %v1245, %v1237
    %v1878 = vpack.c.b16 %v1246, %v1238
    %v1879 = vpack.c.b16 %v1255, %v1247
    %v1880 = vpack.c.b16 %v1256, %v1248
    %v1881 = vpack.c.b16 %v1257, %v1249
    %v1882 = vpack.c.b16 %v1258, %v1250
    %v1883 = vpack.c.b16 %v1259, %v1251
    %v1884 = vpack.c.b16 %v1260, %v1252
    %v1885 = vpack.c.b16 %v1261, %v1253
    %v1886 = vpack.c.b16 %v1262, %v1254
    %v1887 = vpack.c.b16 %v1271, %v1263
    %v1888 = vpack.c.b16 %v1272, %v1264
    %v1889 = vpack.c.b16 %v1273, %v1265
    %v1890 = vpack.c.b16 %v1274, %v1266
    %v1891 = vpack.c.b16 %v1275, %v1267
    %v1892 = vpack.c.b16 %v1276, %v1268
    %v1893 = vpack.c.b16 %v1277, %v1269
    %v1894 = vpack.c.b16 %v1278, %v1270
    %v1895 = vpack.c.b16 %v1287, %v1279
    %v1896 = vpack.c.b16 %v1288, %v1280
    %v1897 = vpack.c.b16 %v1289, %v1281
    %v1898 = vpack.c.b16 %v1290, %v1282
    %v1899 = vpack.c.b16 %v1291, %v1283
    %v1900 = vpack.c.b16 %v1292, %v1284
    %v1901 = vpack.c.b16 %v1293, %v1285
    %v1902 = vpack.c.b16 %v1294, %v1286
    %v1903 = vpack.c.b16 %v1303, %v1295
    %v1904 = vpack.c.b16 %v1304, %v1296
    %v1905 = vpack.c.b16 %v1305, %v1297
    %v1906 = vpack.c.b16 %v1306, %v1298
    %v1907 = vpack.c.b16 %v1307, %v1299
    %v1908 = vpack.c.b16 %v1308, %v1300
    %v1909 = vpack.c.b16 %v1309, %v1301
    %v1910 = vpack.c.b16 %v1310, %v1302
    %v1911 = vpack.c.b16 %v1319, %v1311
    %v1912 = vpack.c.b16 %v1320, %v1312
    %v1913 = vpack.c.b16 %v1321, %v1313
    %v1914 = vpack.c.b16 %v1322, %v1314
    %v1915 = vpack.c.b16 %v1323, %v1315
    %v1916 = vpack.c.b16 %v1324, %v1316
    %v1917 = vpack.c.b16 %v1325, %v1317
    %v1918 = vpack.c.b16 %v1326, %v1318
    %v1919 = vpack.c.b16 %v1335, %v1327
    %v1920 = vpack.c.b16 %v1336, %v1328
    %v1921 = vpack.c.b16 %v1337, %v1329
    %v1922 = vpack.c.b16 %v1338, %v1330
    %v1923 = vpack.c.b16 %v1339, %v1331
    %v1924 = vpack.c.b16 %v1340, %v1332
    %v1925 = vpack.c.b16 %v1341, %v1333
    %v1926 = vpack.c.b16 %v1342, %v1334
    %v1927 = vpack.c.b16 %v1351, %v1343
    %v1928 = vpack.c.b16 %v1352, %v1344
    %v1929 = vpack.c.b16 %v1353, %v1345
    %v1930 = vpack.c.b16 %v1354, %v1346
    %v1931 = vpack.c.b16 %v1355, %v1347
    %v1932 = vpack.c.b16 %v1356, %v1348
    %v1933 = vpack.c.b16 %v1357, %v1349
    %v1934 = vpack.c.b16 %v1358, %v1350
    %v1935 = vpack.c.b16 %v1367, %v1359
    %v1936 = vpack.c.b16 %v1368, %v1360
    %v1937 = vpack.c.b16 %v1369, %v1361
    %v1938 = vpack.c.b16 %v1370, %v1362
    %v1939 = vpack.c.b16 %v1371, %v1363
    %v1940 = vpack.c.b16 %v1372, %v1364
    %v1941 = vpack.c.b16 %v1373, %v1365
    %v1942 = vpack.c.b16 %v1374, %v1366
    %v1943 = vpack.c.b16 %v1383, %v1375
    %v1944 = vpack.c.b16 %v1384, %v1376
    %v1945 = vpack.c.b16 %v1385, %v1377
    %v1946 = vpack.c.b16 %v1386, %v1378
    %v1947 = vpack.c.b16 %v1387, %v1379
    %v1948 = vpack.c.b16 %v1388, %v1380
    %v1949 = vpack.c.b16 %v1389, %v1381
    %v1950 = vpack.c.b16 %v1390, %v1382
    %v1951 = vpack.c.b16 %v1399, %v1391
    %v1952 = vpack.c.b16 %v1400, %v1392
    %v1953 = vpack.c.b16 %v1401, %v1393
    %v1954 = vpack.c.b16 %v1402, %v1394
    %v1955 = vpack.c.b16 %v1403, %v1395
    %v1956 = vpack.c.b16 %v1404, %v1396
    %v1957 = vpack.c.b16 %v1405, %v1397
    %v1958 = vpack.c.b16 %v1406, %v1398
    %v1959 = vpack.c.b16 %v1415, %v1407
    %v1960 = vpack.c.b16 %v1416, %v1408
    %v1961 = vpack.c.b16 %v1417, %v1409
    %v1962 = vpack.c.b16 %v1418, %v1410
    %v1963 = vpack.c.b16 %v1419, %v1411
    %v1964 = vpack.c.b16 %v1420, %v1412
    %v1965 = vpack.c.b16 %v1421, %v1413
    %v1966 = vpack.c.b16 %v1422, %v1414
    %v1967 = vpack.c.b16 %v1431, %v1423
    %v1968 = vpack.c.b16 %v1432, %v1424
    %v1969 = vpack.c.b16 %v1433, %v1425
    %v1970 = vpack.c.b16 %v1434, %v1426
    %v1971 = vpack.c.b16 %v1435, %v1427
    %v1972 = vpack.c.b16 %v1436, %v1428
    %v1973 = vpack.c.b16 %v1437, %v1429
    %v1974 = vpack.c.b16 %v1438, %v1430
    %v1975 = vpack.c.b16 %v1447, %v1439
    %v1976 = vpack.c.b16 %v1448, %v1440
    %v1977 = vpack.c.b16 %v1449, %v1441
    %v1978 = vpack.c.b16 %v1450, %v1442
    %v1979 = vpack.c.b16 %v1451, %v1443
    %v1980 = vpack.c.b16 %v1452, %v1444
    %v1981 = vpack.c.b16 %v1453, %v1445
    %v1982 = vpack.c.b16 %v1454, %v1446
    %v1983 = vpack.c.b16 %v1463, %v1455
    %v1984 = vpack.c.b16 %v1464, %v1456
    %v1985 = vpack.c.b16 %v1465, %v1457
    %v1986 = vpack.c.b16 %v1466, %v1458
    %v1987 = vpack.c.b16 %v1467, %v1459
    %v1988 = vpack.c.b16 %v1468, %v1460
    %v1989 = vpack.c.b16 %v1469, %v1461
    %v1990 = vpack.c.b16 %v1470, %v1462
    %v1991 = vpack.c.b16 %v1479, %v1471
    %v1992 = vpack.c.b16 %v1480, %v1472
    %v1993 = vpack.c.b16 %v1481, %v1473
    %v1994 = vpack.c.b16 %v1482, %v1474
    %v1995 = vpack.c.b16 %v1483, %v1475
    %v1996 = vpack.c.b16 %v1484, %v1476
    %v1997 = vpack.c.b16 %v1485, %v1477
    %v1998 = vpack.c.b16 %v1486, %v1478
    %v1999 = vpack.c.b16 %v1495, %v1487
    %v2000 = vpack.c.b16 %v1496, %v1488
    %v2001 = vpack.c.b16 %v1497, %v1489
    %v2002 = vpack.c.b16 %v1498, %v1490
    %v2003 = vpack.c.b16 %v1499, %v1491
    %v2004 = vpack.c.b16 %v1500, %v1492
    %v2005 = vpack.c.b16 %v1501, %v1493
    %v2006 = vpack.c.b16 %v1502, %v1494
    %v2007 = vpack.c.b16 %v1511, %v1503
    %v2008 = vpack.c.b16 %v1512, %v1504
    %v2009 = vpack.c.b16 %v1513, %v1505
    %v2010 = vpack.c.b16 %v1514, %v1506
    %v2011 = vpack.c.b16 %v1515, %v1507
    %v2012 = vpack.c.b16 %v1516, %v1508
    %v2013 = vpack.c.b16 %v1517, %v1509
    %v2014 = vpack.c.b16 %v1518, %v1510
    %v2015 = vpack.c.b16 %v1527, %v1519
    %v2016 = vpack.c.b16 %v1528, %v1520
    %v2017 = vpack.c.b16 %v1529, %v1521
    %v2018 = vpack.c.b16 %v1530, %v1522
    %v2019 = vpack.c.b16 %v1531, %v1523
    %v2020 = vpack.c.b16 %v1532, %v1524
    %v2021 = vpack.c.b16 %v1533, %v1525
    %v2022 = vpack.c.b16 %v1534, %v1526
    %v2023 = vpack.c.b16 %v1543, %v1535
    %v2024 = vpack.c.b16 %v1544, %v1536
    %v2025 = vpack.c.b16 %v1545, %v1537
    %v2026 = vpack.c.b16 %v1546, %v1538
    %v2027 = vpack.c.b16 %v1547, %v1539
    %v2028 = vpack.c.b16 %v1548, %v1540
    %v2029 = vpack.c.b16 %v1549, %v1541
    %v2030 = vpack.c.b16 %v1550, %v1542
    %v2031 = vpack.c.b16 %v1559, %v1551
    %v2032 = vpack.c.b16 %v1560, %v1552
    %v2033 = vpack.c.b16 %v1561, %v1553
    %v2034 = vpack.c.b16 %v1562, %v1554
    %v2035 = vpack.c.b16 %v1563, %v1555
    %v2036 = vpack.c.b16 %v1564, %v1556
    %v2037 = vpack.c.b16 %v1565, %v1557
    %v2038 = vpack.c.b16 %v1566, %v1558
    %v2039 = vpack.c.b16 %v1575, %v1567
    %v2040 = vpack.c.b16 %v1576, %v1568
    %v2041 = vpack.c.b16 %v1577, %v1569
    %v2042 = vpack.c.b16 %v1578, %v1570
    %v2043 = vpack.c.b16 %v1579, %v1571
    %v2044 = vpack.c.b16 %v1580, %v1572
    %v2045 = vpack.c.b16 %v1581, %v1573
    %v2046 = vpack.c.b16 %v1582, %v1574
    %v2047 = vpack.c.b16 %v1591, %v1583
    %v2048 = vpack.c.b16 %v1592, %v1584
    %v2049 = vpack.c.b16 %v1593, %v1585
    %v2050 = vpack.c.b16 %v1594, %v1586
    %v2051 = vpack.c.b16 %v1595, %v1587
    %v2052 = vpack.c.b16 %v1596, %v1588
    %v2053 = vpack.c.b16 %v1597, %v1589
    %v2054 = vpack.c.b16 %v1598, %v1590
    %v2055 = vpack.c.b16 %v1607, %v1599
    %v2056 = vpack.c.b16 %v1608, %v1600
    %v2057 = vpack.c.b16 %v1609, %v1601
    %v2058 = vpack.c.b16 %v1610, %v1602
    %v2059 = vpack.c.b16 %v1611, %v1603
    %v2060 = vpack.c.b16 %v1612, %v1604
    %v2061 = vpack.c.b16 %v1613, %v1605
    %v2062 = vpack.c.b16 %v1614, %v1606
    %v2063 = vpack.c.b16 %v1623, %v1615
    %v2064 = vpack.c.b16 %v1624, %v1616
    %v2065 = vpack.c.b16 %v1625, %v1617
    %v2066 = vpack.c.b16 %v1626, %v1618
    %v2067 = vpack.c.b16 %v1627, %v1619
    %v2068 = vpack.c.b16 %v1628, %v1620
    %v2069 = vpack.c.b16 %v1629, %v1621
    %v2070 = vpack.c.b16 %v1630, %v1622
    %v2071 = vpack.c.b16 %v1639, %v1631
    %v2072 = vpack.c.b16 %v1640, %v1632
    %v2073 = vpack.c.b16 %v1641, %v1633
    %v2074 = vpack.c.b16 %v1642, %v1634
    %v2075 = vpack.c.b16 %v1643, %v1635
    %v2076 = vpack.c.b16 %v1644, %v1636
    %v2077 = vpack.c.b16 %v1645, %v1637
    %v2078 = vpack.c.b16 %v1646, %v1638
    %v2079 = vpack.c.b16 %v1655, %v1647
    %v2080 = vpack.c.b16 %v1656, %v1648
    %v2081 = vpack.c.b16 %v1657, %v1649
    %v2082 = vpack.c.b16 %v1658, %v1650
    %v2083 = vpack.c.b16 %v1659, %v1651
    %v2084 = vpack.c.b16 %v1660, %v1652
    %v2085 = vpack.c.b16 %v1661, %v1653
    %v2086 = vpack.c.b16 %v1662, %v1654
    %v2087 = vpack.c.b16 %v1671, %v1663
    %v2088 = vpack.c.b16 %v1672, %v1664
    %v2089 = vpack.c.b16 %v1673, %v1665
    %v2090 = vpack.c.b16 %v1674, %v1666
    %v2091 = vpack.c.b16 %v1675, %v1667
    %v2092 = vpack.c.b16 %v1676, %v1668
    %v2093 = vpack.c.b16 %v1677, %v1669
    %v2094 = vpack.c.b16 %v1678, %v1670
    %v2095 = vpack.c.b16 %v1687, %v1679
    %v2096 = vpack.c.b16 %v1688, %v1680
    %v2097 = vpack.c.b16 %v1689, %v1681
    %v2098 = vpack.c.b16 %v1690, %v1682
    %v2099 = vpack.c.b16 %v1691, %v1683
    %v2100 = vpack.c.b16 %v1692, %v1684
    %v2101 = vpack.c.b16 %v1693, %v1685
    %v2102 = vpack.c.b16 %v1694, %v1686
    %v2103 = vpack.c.b16 %v1703, %v1695
    %v2104 = vpack.c.b16 %v1704, %v1696
    %v2105 = vpack.c.b16 %v1705, %v1697
    %v2106 = vpack.c.b16 %v1706, %v1698
    %v2107 = vpack.c.b16 %v1707, %v1699
    %v2108 = vpack.c.b16 %v1708, %v1700
    %v2109 = vpack.c.b16 %v1709, %v1701
    %v2110 = vpack.c.b16 %v1710, %v1702
    %v2111 = vpack.c.b16 %v1719, %v1711
    %v2112 = vpack.c.b16 %v1720, %v1712
    %v2113 = vpack.c.b16 %v1721, %v1713
    %v2114 = vpack.c.b16 %v1722, %v1714
    %v2115 = vpack.c.b16 %v1723, %v1715
    %v2116 = vpack.c.b16 %v1724, %v1716
    %v2117 = vpack.c.b16 %v1725, %v1717
    %v2118 = vpack.c.b16 %v1726, %v1718
    %v2119 = vpack.c.b16 %v1735, %v1727
    %v2120 = vpack.c.b16 %v1736, %v1728
    %v2121 = vpack.c.b16 %v1737, %v1729
    %v2122 = vpack.c.b16 %v1738, %v1730
    %v2123 = vpack.c.b16 %v1739, %v1731
    %v2124 = vpack.c.b16 %v1740, %v1732
    %v2125 = vpack.c.b16 %v1741, %v1733
    %v2126 = vpack.c.b16 %v1742, %v1734
    %2511 = vmatprep.subr.bf16.mxu0 %v1744
    %2512 = vmatpush1.bf16.msra.mxu0 %v1743
    %2513 = vmatprep.subr.bf16.mxu0 %v1752
    %2514 = vmatpush1.bf16.msra.mxu0 %v1751
    %2515 = vmatprep.subr.bf16.mxu0 %v1760
    %2516 = vmatpush1.bf16.msra.mxu0 %v1759
    %2517 = vmatprep.subr.bf16.mxu0 %v1768
    %2518 = vmatpush1.bf16.msra.mxu0 %v1767
    %2519 = vmatprep.subr.bf16.mxu0 %v1776
    %2520 = vmatpush1.bf16.msra.mxu0 %v1775
    %2521 = vmatprep.subr.bf16.mxu0 %v1784
    %2522 = vmatpush1.bf16.msra.mxu0 %v1783
    %2523 = vmatprep.subr.bf16.mxu0 %v1792
    %2524 = vmatpush1.bf16.msra.mxu0 %v1791
    %2525 = vmatprep.subr.bf16.mxu0 %v1800
    %2526 = vmatpush1.bf16.msra.mxu0 %v1799
    %2527 = vmatprep.subr.bf16.mxu0 %v1808
    %2528 = vmatpush1.bf16.msra.mxu0 %v1807
    %2529 = vmatprep.subr.bf16.mxu0 %v1816
    %2530 = vmatpush1.bf16.msra.mxu0 %v1815
    %2531 = vmatprep.subr.bf16.mxu0 %v1824
    %2532 = vmatpush1.bf16.msra.mxu0 %v1823
    %2533 = vmatprep.subr.bf16.mxu0 %v1832
    %2534 = vmatpush1.bf16.msra.mxu0 %v1831
    %2535 = vmatprep.subr.bf16.mxu0 %v1840
    %2536 = vmatpush1.bf16.msra.mxu0 %v1839
    %2537 = vmatprep.subr.bf16.mxu0 %v1848
    %2538 = vmatpush1.bf16.msra.mxu0 %v1847
    %2539 = vmatprep.subr.bf16.mxu0 %v1856
    %2540 = vmatpush1.bf16.msra.mxu0 %v1855
    %2541 = vmatprep.subr.bf16.mxu0 %v1864
    %2542 = vmatpush1.bf16.msra.mxu0 %v1863
    %2543 = vmatprep.mubr.bf16.mxu0 %v580
    %2544 = vmatmul.mubr.bf16.gmra.mrb[0].mxu0 %v579
    %v2545 = vpop.f32.mrb[0].mxu0
    %v2546 = vadd.f32 0.0, %v2545
    %v2547 = vpop.f32.mrb[0].mxu0
    %v2548 = vadd.f32 0.0, %v2547
    %v2549 = vpop.f32.mrb[0].mxu0
    %v2550 = vpop.f32.mrb[0].mxu0
    %2551 = vdwg.mxu0
    %2552 = vmatprep.subr.bf16.mxu0 %v1872
    %2553 = vmatpush1.bf16.msra.mxu0 %v1871
    %2554 = vmatprep.subr.bf16.mxu0 %v1880
    %2555 = vmatpush1.bf16.msra.mxu0 %v1879
    %2556 = vmatprep.subr.bf16.mxu0 %v1888
    %2557 = vmatpush1.bf16.msra.mxu0 %v1887
    %2558 = vmatprep.subr.bf16.mxu0 %v1896
    %2559 = vmatpush1.bf16.msra.mxu0 %v1895
    %2560 = vmatprep.subr.bf16.mxu0 %v1904
    %2561 = vmatpush1.bf16.msra.mxu0 %v1903
    %2562 = vmatprep.subr.bf16.mxu0 %v1912
    %2563 = vmatpush1.bf16.msra.mxu0 %v1911
    %2564 = vmatprep.subr.bf16.mxu0 %v1920
    %2565 = vmatpush1.bf16.msra.mxu0 %v1919
    %2566 = vmatprep.subr.bf16.mxu0 %v1928
    %2567 = vmatpush1.bf16.msra.mxu0 %v1927
    %2568 = vmatprep.subr.bf16.mxu0 %v1936
    %2569 = vmatpush1.bf16.msra.mxu0 %v1935
    %2570 = vmatprep.subr.bf16.mxu0 %v1944
    %2571 = vmatpush1.bf16.msra.mxu0 %v1943
    %2572 = vmatprep.subr.bf16.mxu0 %v1952
    %2573 = vmatpush1.bf16.msra.mxu0 %v1951
    %2574 = vmatprep.subr.bf16.mxu0 %v1960
    %2575 = vmatpush1.bf16.msra.mxu0 %v1959
    %2576 = vmatprep.subr.bf16.mxu0 %v1968
    %2577 = vmatpush1.bf16.msra.mxu0 %v1967
    %2578 = vmatprep.subr.bf16.mxu0 %v1976
    %2579 = vmatpush1.bf16.msra.mxu0 %v1975
    %2580 = vmatprep.subr.bf16.mxu0 %v1984
    %2581 = vmatpush1.bf16.msra.mxu0 %v1983
    %2582 = vmatprep.subr.bf16.mxu0 %v1992
    %2583 = vmatpush1.bf16.msra.mxu0 %v1991
    %2584 = vmatprep.mubr.bf16.mxu0 %v582
    %2585 = vmatmul.mubr.bf16.gmra.mrb[0].mxu0 %v581
    %v2586 = vpop.f32.mrb[0].mxu0
    %v2587 = vadd.f32 %v2546, %v2586
    %v2588 = vpop.f32.mrb[0].mxu0
    %v2589 = vadd.f32 %v2548, %v2588
    %v2590 = vpop.f32.mrb[0].mxu0
    %v2591 = vpop.f32.mrb[0].mxu0
    %2592 = vdwg.mxu0
    %2593 = vmatprep.subr.bf16.mxu0 %v2000
    %2594 = vmatpush1.bf16.msra.mxu0 %v1999
    %2595 = vmatprep.subr.bf16.mxu0 %v2008
    %2596 = vmatpush1.bf16.msra.mxu0 %v2007
    %2597 = vmatprep.subr.bf16.mxu0 %v2016
    %2598 = vmatpush1.bf16.msra.mxu0 %v2015
    %2599 = vmatprep.subr.bf16.mxu0 %v2024
    %2600 = vmatpush1.bf16.msra.mxu0 %v2023
    %2601 = vmatprep.subr.bf16.mxu0 %v2032
    %2602 = vmatpush1.bf16.msra.mxu0 %v2031
    %2603 = vmatprep.subr.bf16.mxu0 %v2040
    %2604 = vmatpush1.bf16.msra.mxu0 %v2039
    %2605 = vmatprep.subr.bf16.mxu0 %v2048
    %2606 = vmatpush1.bf16.msra.mxu0 %v2047
    %2607 = vmatprep.subr.bf16.mxu0 %v2056
    %2608 = vmatpush1.bf16.msra.mxu0 %v2055
    %2609 = vmatprep.subr.bf16.mxu0 %v2064
    %2610 = vmatpush1.bf16.msra.mxu0 %v2063
    %2611 = vmatprep.subr.bf16.mxu0 %v2072
    %2612 = vmatpush1.bf16.msra.mxu0 %v2071
    %2613 = vmatprep.subr.bf16.mxu0 %v2080
    %2614 = vmatpush1.bf16.msra.mxu0 %v2079
    %2615 = vmatprep.subr.bf16.mxu0 %v2088
    %2616 = vmatpush1.bf16.msra.mxu0 %v2087
    %2617 = vmatprep.subr.bf16.mxu0 %v2096
    %2618 = vmatpush1.bf16.msra.mxu0 %v2095
    %2619 = vmatprep.subr.bf16.mxu0 %v2104
    %2620 = vmatpush1.bf16.msra.mxu0 %v2103
    %2621 = vmatprep.subr.bf16.mxu0 %v2112
    %2622 = vmatpush1.bf16.msra.mxu0 %v2111
    %2623 = vmatprep.subr.bf16.mxu0 %v2120
    %2624 = vmatpush1.bf16.msra.mxu0 %v2119
    %2625 = vmatprep.mubr.bf16.mxu0 %v584
    %2626 = vmatmul.mubr.bf16.gmra.mrb[0].mxu0 %v583
    %v2627 = vpop.f32.mrb[0].mxu0
    %v2628 = vadd.f32 %v2587, %v2627
    %v2629 = vpop.f32.mrb[0].mxu0
    %v2630 = vadd.f32 %v2589, %v2629
    %v2631 = vpop.f32.mrb[0].mxu0
    %v2632 = vpop.f32.mrb[0].mxu0
    %2633 = vdwg.mxu0
    %2634 = vmatprep.subr.bf16.mxu0 %v1746
    %2635 = vmatpush1.bf16.msra.mxu0 %v1745
    %2636 = vmatprep.subr.bf16.mxu0 %v1754
    %2637 = vmatpush1.bf16.msra.mxu0 %v1753
    %2638 = vmatprep.subr.bf16.mxu0 %v1762
    %2639 = vmatpush1.bf16.msra.mxu0 %v1761
    %2640 = vmatprep.subr.bf16.mxu0 %v1770
    %2641 = vmatpush1.bf16.msra.mxu0 %v1769
    %2642 = vmatprep.subr.bf16.mxu0 %v1778
    %2643 = vmatpush1.bf16.msra.mxu0 %v1777
    %2644 = vmatprep.subr.bf16.mxu0 %v1786
    %2645 = vmatpush1.bf16.msra.mxu0 %v1785
    %2646 = vmatprep.subr.bf16.mxu0 %v1794
    %2647 = vmatpush1.bf16.msra.mxu0 %v1793
    %2648 = vmatprep.subr.bf16.mxu0 %v1802
    %2649 = vmatpush1.bf16.msra.mxu0 %v1801
    %2650 = vmatprep.subr.bf16.mxu0 %v1810
    %2651 = vmatpush1.bf16.msra.mxu0 %v1809
    %2652 = vmatprep.subr.bf16.mxu0 %v1818
    %2653 = vmatpush1.bf16.msra.mxu0 %v1817
    %2654 = vmatprep.subr.bf16.mxu0 %v1826
    %2655 = vmatpush1.bf16.msra.mxu0 %v1825
    %2656 = vmatprep.subr.bf16.mxu0 %v1834
    %2657 = vmatpush1.bf16.msra.mxu0 %v1833
    %2658 = vmatprep.subr.bf16.mxu0 %v1842
    %2659 = vmatpush1.bf16.msra.mxu0 %v1841
    %2660 = vmatprep.subr.bf16.mxu0 %v1850
    %2661 = vmatpush1.bf16.msra.mxu0 %v1849
    %2662 = vmatprep.subr.bf16.mxu0 %v1858
    %2663 = vmatpush1.bf16.msra.mxu0 %v1857
    %2664 = vmatprep.subr.bf16.mxu0 %v1866
    %2665 = vmatpush1.bf16.msra.mxu0 %v1865
    %2666 = vmatprep.mubr.bf16.mxu0 %v580
    %2667 = vmatmul.mubr.bf16.gmra.mrb[0].mxu0 %v579
    %v2668 = vpop.f32.mrb[0].mxu0
    %v2669 = vadd.f32 0.0, %v2668
    %v2670 = vpop.f32.mrb[0].mxu0
    %v2671 = vadd.f32 0.0, %v2670
    %v2672 = vpop.f32.mrb[0].mxu0
    %v2673 = vpop.f32.mrb[0].mxu0
    %2674 = vdwg.mxu0
    %2675 = vmatprep.subr.bf16.mxu0 %v1874
    %2676 = vmatpush1.bf16.msra.mxu0 %v1873
    %2677 = vmatprep.subr.bf16.mxu0 %v1882
    %2678 = vmatpush1.bf16.msra.mxu0 %v1881
    %2679 = vmatprep.subr.bf16.mxu0 %v1890
    %2680 = vmatpush1.bf16.msra.mxu0 %v1889
    %2681 = vmatprep.subr.bf16.mxu0 %v1898
    %2682 = vmatpush1.bf16.msra.mxu0 %v1897
    %2683 = vmatprep.subr.bf16.mxu0 %v1906
    %2684 = vmatpush1.bf16.msra.mxu0 %v1905
    %2685 = vmatprep.subr.bf16.mxu0 %v1914
    %2686 = vmatpush1.bf16.msra.mxu0 %v1913
    %2687 = vmatprep.subr.bf16.mxu0 %v1922
    %2688 = vmatpush1.bf16.msra.mxu0 %v1921
    %2689 = vmatprep.subr.bf16.mxu0 %v1930
    %2690 = vmatpush1.bf16.msra.mxu0 %v1929
    %2691 = vmatprep.subr.bf16.mxu0 %v1938
    %2692 = vmatpush1.bf16.msra.mxu0 %v1937
    %2693 = vmatprep.subr.bf16.mxu0 %v1946
    %2694 = vmatpush1.bf16.msra.mxu0 %v1945
    %2695 = vmatprep.subr.bf16.mxu0 %v1954
    %2696 = vmatpush1.bf16.msra.mxu0 %v1953
    %2697 = vmatprep.subr.bf16.mxu0 %v1962
    %2698 = vmatpush1.bf16.msra.mxu0 %v1961
    %2699 = vmatprep.subr.bf16.mxu0 %v1970
    %2700 = vmatpush1.bf16.msra.mxu0 %v1969
    %2701 = vmatprep.subr.bf16.mxu0 %v1978
    %2702 = vmatpush1.bf16.msra.mxu0 %v1977
    %2703 = vmatprep.subr.bf16.mxu0 %v1986
    %2704 = vmatpush1.bf16.msra.mxu0 %v1985
    %2705 = vmatprep.subr.bf16.mxu0 %v1994
    %2706 = vmatpush1.bf16.msra.mxu0 %v1993
    %2707 = vmatprep.mubr.bf16.mxu0 %v582
    %2708 = vmatmul.mubr.bf16.gmra.mrb[0].mxu0 %v581
    %v2709 = vpop.f32.mrb[0].mxu0
    %v2710 = vadd.f32 %v2669, %v2709
    %v2711 = vpop.f32.mrb[0].mxu0
    %v2712 = vadd.f32 %v2671, %v2711
    %v2713 = vpop.f32.mrb[0].mxu0
    %v2714 = vpop.f32.mrb[0].mxu0
    %2715 = vdwg.mxu0
    %2716 = vmatprep.subr.bf16.mxu0 %v2002
    %2717 = vmatpush1.bf16.msra.mxu0 %v2001
    %2718 = vmatprep.subr.bf16.mxu0 %v2010
    %2719 = vmatpush1.bf16.msra.mxu0 %v2009
    %2720 = vmatprep.subr.bf16.mxu0 %v2018
    %2721 = vmatpush1.bf16.msra.mxu0 %v2017
    %2722 = vmatprep.subr.bf16.mxu0 %v2026
    %2723 = vmatpush1.bf16.msra.mxu0 %v2025
    %2724 = vmatprep.subr.bf16.mxu0 %v2034
    %2725 = vmatpush1.bf16.msra.mxu0 %v2033
    %2726 = vmatprep.subr.bf16.mxu0 %v2042
    %2727 = vmatpush1.bf16.msra.mxu0 %v2041
    %2728 = vmatprep.subr.bf16.mxu0 %v2050
    %2729 = vmatpush1.bf16.msra.mxu0 %v2049
    %2730 = vmatprep.subr.bf16.mxu0 %v2058
    %2731 = vmatpush1.bf16.msra.mxu0 %v2057
    %2732 = vmatprep.subr.bf16.mxu0 %v2066
    %2733 = vmatpush1.bf16.msra.mxu0 %v2065
    %2734 = vmatprep.subr.bf16.mxu0 %v2074
    %2735 = vmatpush1.bf16.msra.mxu0 %v2073
    %2736 = vmatprep.subr.bf16.mxu0 %v2082
    %2737 = vmatpush1.bf16.msra.mxu0 %v2081
    %2738 = vmatprep.subr.bf16.mxu0 %v2090
    %2739 = vmatpush1.bf16.msra.mxu0 %v2089
    %2740 = vmatprep.subr.bf16.mxu0 %v2098
    %2741 = vmatpush1.bf16.msra.mxu0 %v2097
    %2742 = vmatprep.subr.bf16.mxu0 %v2106
    %2743 = vmatpush1.bf16.msra.mxu0 %v2105
    %2744 = vmatprep.subr.bf16.mxu0 %v2114
    %2745 = vmatpush1.bf16.msra.mxu0 %v2113
    %2746 = vmatprep.subr.bf16.mxu0 %v2122
    %2747 = vmatpush1.bf16.msra.mxu0 %v2121
    %2748 = vmatprep.mubr.bf16.mxu0 %v584
    %2749 = vmatmul.mubr.bf16.gmra.mrb[0].mxu0 %v583
    %v2750 = vpop.f32.mrb[0].mxu0
    %v2751 = vadd.f32 %v2710, %v2750
    %v2752 = vpop.f32.mrb[0].mxu0
    %v2753 = vadd.f32 %v2712, %v2752
    %v2754 = vpop.f32.mrb[0].mxu0
    %v2755 = vpop.f32.mrb[0].mxu0
    %2756 = vdwg.mxu0
    %2757 = vmatprep.subr.bf16.mxu0 %v1748
    %2758 = vmatpush1.bf16.msra.mxu0 %v1747
    %2759 = vmatprep.subr.bf16.mxu0 %v1756
    %2760 = vmatpush1.bf16.msra.mxu0 %v1755
    %2761 = vmatprep.subr.bf16.mxu0 %v1764
    %2762 = vmatpush1.bf16.msra.mxu0 %v1763
    %2763 = vmatprep.subr.bf16.mxu0 %v1772
    %2764 = vmatpush1.bf16.msra.mxu0 %v1771
    %2765 = vmatprep.subr.bf16.mxu0 %v1780
    %2766 = vmatpush1.bf16.msra.mxu0 %v1779
    %2767 = vmatprep.subr.bf16.mxu0 %v1788
    %2768 = vmatpush1.bf16.msra.mxu0 %v1787
    %2769 = vmatprep.subr.bf16.mxu0 %v1796
    %2770 = vmatpush1.bf16.msra.mxu0 %v1795
    %2771 = vmatprep.subr.bf16.mxu0 %v1804
    %2772 = vmatpush1.bf16.msra.mxu0 %v1803
    %2773 = vmatprep.subr.bf16.mxu0 %v1812
    %2774 = vmatpush1.bf16.msra.mxu0 %v1811
    %2775 = vmatprep.subr.bf16.mxu0 %v1820
    %2776 = vmatpush1.bf16.msra.mxu0 %v1819
    %2777 = vmatprep.subr.bf16.mxu0 %v1828
    %2778 = vmatpush1.bf16.msra.mxu0 %v1827
    %2779 = vmatprep.subr.bf16.mxu0 %v1836
    %2780 = vmatpush1.bf16.msra.mxu0 %v1835
    %2781 = vmatprep.subr.bf16.mxu0 %v1844
    %2782 = vmatpush1.bf16.msra.mxu0 %v1843
    %2783 = vmatprep.subr.bf16.mxu0 %v1852
    %2784 = vmatpush1.bf16.msra.mxu0 %v1851
    %2785 = vmatprep.subr.bf16.mxu0 %v1860
    %2786 = vmatpush1.bf16.msra.mxu0 %v1859
    %2787 = vmatprep.subr.bf16.mxu0 %v1868
    %2788 = vmatpush1.bf16.msra.mxu0 %v1867
    %2789 = vmatprep.mubr.bf16.mxu0 %v580
    %2790 = vmatmul.mubr.bf16.gmra.mrb[0].mxu0 %v579
    %v2791 = vpop.f32.mrb[0].mxu0
    %v2792 = vadd.f32 0.0, %v2791
    %v2793 = vpop.f32.mrb[0].mxu0
    %v2794 = vadd.f32 0.0, %v2793
    %v2795 = vpop.f32.mrb[0].mxu0
    %v2796 = vpop.f32.mrb[0].mxu0
    %2797 = vdwg.mxu0
    %2798 = vmatprep.subr.bf16.mxu0 %v1876
    %2799 = vmatpush1.bf16.msra.mxu0 %v1875
    %2800 = vmatprep.subr.bf16.mxu0 %v1884
    %2801 = vmatpush1.bf16.msra.mxu0 %v1883
    %2802 = vmatprep.subr.bf16.mxu0 %v1892
    %2803 = vmatpush1.bf16.msra.mxu0 %v1891
    %2804 = vmatprep.subr.bf16.mxu0 %v1900
    %2805 = vmatpush1.bf16.msra.mxu0 %v1899
    %2806 = vmatprep.subr.bf16.mxu0 %v1908
    %2807 = vmatpush1.bf16.msra.mxu0 %v1907
    %2808 = vmatprep.subr.bf16.mxu0 %v1916
    %2809 = vmatpush1.bf16.msra.mxu0 %v1915
    %2810 = vmatprep.subr.bf16.mxu0 %v1924
    %2811 = vmatpush1.bf16.msra.mxu0 %v1923
    %2812 = vmatprep.subr.bf16.mxu0 %v1932
    %2813 = vmatpush1.bf16.msra.mxu0 %v1931
    %2814 = vmatprep.subr.bf16.mxu0 %v1940
    %2815 = vmatpush1.bf16.msra.mxu0 %v1939
    %2816 = vmatprep.subr.bf16.mxu0 %v1948
    %2817 = vmatpush1.bf16.msra.mxu0 %v1947
    %2818 = vmatprep.subr.bf16.mxu0 %v1956
    %2819 = vmatpush1.bf16.msra.mxu0 %v1955
    %2820 = vmatprep.subr.bf16.mxu0 %v1964
    %2821 = vmatpush1.bf16.msra.mxu0 %v1963
    %2822 = vmatprep.subr.bf16.mxu0 %v1972
    %2823 = vmatpush1.bf16.msra.mxu0 %v1971
    %2824 = vmatprep.subr.bf16.mxu0 %v1980
    %2825 = vmatpush1.bf16.msra.mxu0 %v1979
    %2826 = vmatprep.subr.bf16.mxu0 %v1988
    %2827 = vmatpush1.bf16.msra.mxu0 %v1987
    %2828 = vmatprep.subr.bf16.mxu0 %v1996
    %2829 = vmatpush1.bf16.msra.mxu0 %v1995
    %2830 = vmatprep.mubr.bf16.mxu0 %v582
    %2831 = vmatmul.mubr.bf16.gmra.mrb[0].mxu0 %v581
    %v2832 = vpop.f32.mrb[0].mxu0
    %v2833 = vadd.f32 %v2792, %v2832
    %v2834 = vpop.f32.mrb[0].mxu0
    %v2835 = vadd.f32 %v2794, %v2834
    %v2836 = vpop.f32.mrb[0].mxu0
    %v2837 = vpop.f32.mrb[0].mxu0
    %2838 = vdwg.mxu0
    %2839 = vmatprep.subr.bf16.mxu0 %v2004
    %2840 = vmatpush1.bf16.msra.mxu0 %v2003
    %2841 = vmatprep.subr.bf16.mxu0 %v2012
    %2842 = vmatpush1.bf16.msra.mxu0 %v2011
    %2843 = vmatprep.subr.bf16.mxu0 %v2020
    %2844 = vmatpush1.bf16.msra.mxu0 %v2019
    %2845 = vmatprep.subr.bf16.mxu0 %v2028
    %2846 = vmatpush1.bf16.msra.mxu0 %v2027
    %2847 = vmatprep.subr.bf16.mxu0 %v2036
    %2848 = vmatpush1.bf16.msra.mxu0 %v2035
    %2849 = vmatprep.subr.bf16.mxu0 %v2044
    %2850 = vmatpush1.bf16.msra.mxu0 %v2043
    %2851 = vmatprep.subr.bf16.mxu0 %v2052
    %2852 = vmatpush1.bf16.msra.mxu0 %v2051
    %2853 = vmatprep.subr.bf16.mxu0 %v2060
    %2854 = vmatpush1.bf16.msra.mxu0 %v2059
    %2855 = vmatprep.subr.bf16.mxu0 %v2068
    %2856 = vmatpush1.bf16.msra.mxu0 %v2067
    %2857 = vmatprep.subr.bf16.mxu0 %v2076
    %2858 = vmatpush1.bf16.msra.mxu0 %v2075
    %2859 = vmatprep.subr.bf16.mxu0 %v2084
    %2860 = vmatpush1.bf16.msra.mxu0 %v2083
    %2861 = vmatprep.subr.bf16.mxu0 %v2092
    %2862 = vmatpush1.bf16.msra.mxu0 %v2091
    %2863 = vmatprep.subr.bf16.mxu0 %v2100
    %2864 = vmatpush1.bf16.msra.mxu0 %v2099
    %2865 = vmatprep.subr.bf16.mxu0 %v2108
    %2866 = vmatpush1.bf16.msra.mxu0 %v2107
    %2867 = vmatprep.subr.bf16.mxu0 %v2116
    %2868 = vmatpush1.bf16.msra.mxu0 %v2115
    %2869 = vmatprep.subr.bf16.mxu0 %v2124
    %2870 = vmatpush1.bf16.msra.mxu0 %v2123
    %2871 = vmatprep.mubr.bf16.mxu0 %v584
    %2872 = vmatmul.mubr.bf16.gmra.mrb[0].mxu0 %v583
    %v2873 = vpop.f32.mrb[0].mxu0
    %v2874 = vadd.f32 %v2833, %v2873
    %v2875 = vpop.f32.mrb[0].mxu0
    %v2876 = vadd.f32 %v2835, %v2875
    %v2877 = vpop.f32.mrb[0].mxu0
    %v2878 = vpop.f32.mrb[0].mxu0
    %2879 = vdwg.mxu0
    %2880 = vmatprep.subr.bf16.mxu0 %v1750
    %2881 = vmatpush1.bf16.msra.mxu0 %v1749
    %2882 = vmatprep.subr.bf16.mxu0 %v1758
    %2883 = vmatpush1.bf16.msra.mxu0 %v1757
    %2884 = vmatprep.subr.bf16.mxu0 %v1766
    %2885 = vmatpush1.bf16.msra.mxu0 %v1765
    %2886 = vmatprep.subr.bf16.mxu0 %v1774
    %2887 = vmatpush1.bf16.msra.mxu0 %v1773
    %2888 = vmatprep.subr.bf16.mxu0 %v1782
    %2889 = vmatpush1.bf16.msra.mxu0 %v1781
    %2890 = vmatprep.subr.bf16.mxu0 %v1790
    %2891 = vmatpush1.bf16.msra.mxu0 %v1789
    %2892 = vmatprep.subr.bf16.mxu0 %v1798
    %2893 = vmatpush1.bf16.msra.mxu0 %v1797
    %2894 = vmatprep.subr.bf16.mxu0 %v1806
    %2895 = vmatpush1.bf16.msra.mxu0 %v1805
    %2896 = vmatprep.subr.bf16.mxu0 %v1814
    %2897 = vmatpush1.bf16.msra.mxu0 %v1813
    %2898 = vmatprep.subr.bf16.mxu0 %v1822
    %2899 = vmatpush1.bf16.msra.mxu0 %v1821
    %2900 = vmatprep.subr.bf16.mxu0 %v1830
    %2901 = vmatpush1.bf16.msra.mxu0 %v1829
    %2902 = vmatprep.subr.bf16.mxu0 %v1838
    %2903 = vmatpush1.bf16.msra.mxu0 %v1837
    %2904 = vmatprep.subr.bf16.mxu0 %v1846
    %2905 = vmatpush1.bf16.msra.mxu0 %v1845
    %2906 = vmatprep.subr.bf16.mxu0 %v1854
    %2907 = vmatpush1.bf16.msra.mxu0 %v1853
    %2908 = vmatprep.subr.bf16.mxu0 %v1862
    %2909 = vmatpush1.bf16.msra.mxu0 %v1861
    %2910 = vmatprep.subr.bf16.mxu0 %v1870
    %2911 = vmatpush1.bf16.msra.mxu0 %v1869
    %2912 = vmatprep.mubr.bf16.mxu0 %v580
    %2913 = vmatmul.mubr.bf16.gmra.mrb[0].mxu0 %v579
    %v2914 = vpop.f32.mrb[0].mxu0
    %v2915 = vadd.f32 0.0, %v2914
    %v2916 = vpop.f32.mrb[0].mxu0
    %v2917 = vadd.f32 0.0, %v2916
    %v2918 = vpop.f32.mrb[0].mxu0
    %v2919 = vpop.f32.mrb[0].mxu0
    %2920 = vdwg.mxu0
    %2921 = vmatprep.subr.bf16.mxu0 %v1878
    %2922 = vmatpush1.bf16.msra.mxu0 %v1877
    %2923 = vmatprep.subr.bf16.mxu0 %v1886
    %2924 = vmatpush1.bf16.msra.mxu0 %v1885
    %2925 = vmatprep.subr.bf16.mxu0 %v1894
    %2926 = vmatpush1.bf16.msra.mxu0 %v1893
    %2927 = vmatprep.subr.bf16.mxu0 %v1902
    %2928 = vmatpush1.bf16.msra.mxu0 %v1901
    %2929 = vmatprep.subr.bf16.mxu0 %v1910
    %2930 = vmatpush1.bf16.msra.mxu0 %v1909
    %2931 = vmatprep.subr.bf16.mxu0 %v1918
    %2932 = vmatpush1.bf16.msra.mxu0 %v1917
    %2933 = vmatprep.subr.bf16.mxu0 %v1926
    %2934 = vmatpush1.bf16.msra.mxu0 %v1925
    %2935 = vmatprep.subr.bf16.mxu0 %v1934
    %2936 = vmatpush1.bf16.msra.mxu0 %v1933
    %2937 = vmatprep.subr.bf16.mxu0 %v1942
    %2938 = vmatpush1.bf16.msra.mxu0 %v1941
    %2939 = vmatprep.subr.bf16.mxu0 %v1950
    %2940 = vmatpush1.bf16.msra.mxu0 %v1949
    %2941 = vmatprep.subr.bf16.mxu0 %v1958
    %2942 = vmatpush1.bf16.msra.mxu0 %v1957
    %2943 = vmatprep.subr.bf16.mxu0 %v1966
    %2944 = vmatpush1.bf16.msra.mxu0 %v1965
    %2945 = vmatprep.subr.bf16.mxu0 %v1974
    %2946 = vmatpush1.bf16.msra.mxu0 %v1973
    %2947 = vmatprep.subr.bf16.mxu0 %v1982
    %2948 = vmatpush1.bf16.msra.mxu0 %v1981
    %2949 = vmatprep.subr.bf16.mxu0 %v1990
    %2950 = vmatpush1.bf16.msra.mxu0 %v1989
    %2951 = vmatprep.subr.bf16.mxu0 %v1998
    %2952 = vmatpush1.bf16.msra.mxu0 %v1997
    %2953 = vmatprep.mubr.bf16.mxu0 %v582
    %2954 = vmatmul.mubr.bf16.gmra.mrb[0].mxu0 %v581
    %v2955 = vpop.f32.mrb[0].mxu0
    %v2956 = vadd.f32 %v2915, %v2955
    %v2957 = vpop.f32.mrb[0].mxu0
    %v2958 = vadd.f32 %v2917, %v2957
    %v2959 = vpop.f32.mrb[0].mxu0
    %v2960 = vpop.f32.mrb[0].mxu0
    %2961 = vdwg.mxu0
    %2962 = vmatprep.subr.bf16.mxu0 %v2006
    %2963 = vmatpush1.bf16.msra.mxu0 %v2005
    %2964 = vmatprep.subr.bf16.mxu0 %v2014
    %2965 = vmatpush1.bf16.msra.mxu0 %v2013
    %2966 = vmatprep.subr.bf16.mxu0 %v2022
    %2967 = vmatpush1.bf16.msra.mxu0 %v2021
    %2968 = vmatprep.subr.bf16.mxu0 %v2030
    %2969 = vmatpush1.bf16.msra.mxu0 %v2029
    %2970 = vmatprep.subr.bf16.mxu0 %v2038
    %2971 = vmatpush1.bf16.msra.mxu0 %v2037
    %2972 = vmatprep.subr.bf16.mxu0 %v2046
    %2973 = vmatpush1.bf16.msra.mxu0 %v2045
    %2974 = vmatprep.subr.bf16.mxu0 %v2054
    %2975 = vmatpush1.bf16.msra.mxu0 %v2053
    %2976 = vmatprep.subr.bf16.mxu0 %v2062
    %2977 = vmatpush1.bf16.msra.mxu0 %v2061
    %2978 = vmatprep.subr.bf16.mxu0 %v2070
    %2979 = vmatpush1.bf16.msra.mxu0 %v2069
    %2980 = vmatprep.subr.bf16.mxu0 %v2078
    %2981 = vmatpush1.bf16.msra.mxu0 %v2077
    %2982 = vmatprep.subr.bf16.mxu0 %v2086
    %2983 = vmatpush1.bf16.msra.mxu0 %v2085
    %2984 = vmatprep.subr.bf16.mxu0 %v2094
    %2985 = vmatpush1.bf16.msra.mxu0 %v2093
    %2986 = vmatprep.subr.bf16.mxu0 %v2102
    %2987 = vmatpush1.bf16.msra.mxu0 %v2101
    %2988 = vmatprep.subr.bf16.mxu0 %v2110
    %2989 = vmatpush1.bf16.msra.mxu0 %v2109
    %2990 = vmatprep.subr.bf16.mxu0 %v2118
    %2991 = vmatpush1.bf16.msra.mxu0 %v2117
    %2992 = vmatprep.subr.bf16.mxu0 %v2126
    %2993 = vmatpush1.bf16.msra.mxu0 %v2125
    %2994 = vmatprep.mubr.bf16.mxu0 %v584
    %2995 = vmatmul.mubr.bf16.gmra.mrb[0].mxu0 %v583
    %v2996 = vpop.f32.mrb[0].mxu0
    %v2997 = vadd.f32 %v2956, %v2996
    %v2998 = vpop.f32.mrb[0].mxu0
    %v2999 = vadd.f32 %v2958, %v2998
    %v3000 = vpop.f32.mrb[0].mxu0
    %v3001 = vpop.f32.mrb[0].mxu0
    %3002 = vdwg.mxu0
    %v3003 = vadd.f32 %v175, %v2628
    %v3004 = vadd.f32 %v176, %v2630
    %v3005 = vadd.f32 %v177, %v2751
    %v3006 = vadd.f32 %v178, %v2753
    %v3007 = vadd.f32 %v179, %v2874
    %v3008 = vadd.f32 %v180, %v2876
    %v3009 = vadd.f32 %v181, %v2997
    %v3010 = vadd.f32 %v182, %v2999
    %3011 = vst [vmem:[%s174] sm:$0xff] %v3003
    %3012 = vst [vmem:[%s174 + $0x8] sm:$0xff] %v3004
    %3013 = vst [vmem:[%s174 + $0x10] sm:$0xff] %v3005
    %3014 = vst [vmem:[%s174 + $0x18] sm:$0xff] %v3006
    %3015 = vst [vmem:[%s174 + $0x20] sm:$0xff] %v3007
    %3016 = vst [vmem:[%s174 + $0x28] sm:$0xff] %v3008
    %3017 = vst [vmem:[%s174 + $0x30] sm:$0xff] %v3009
    %3018 = vst [vmem:[%s174 + $0x38] sm:$0xff] %v3010
    // Predicated region
    $region62: #{tpu_custom_call.1} parent=1 // pred_check
      %p3019 = pneg %p115
    $region63: #{tpu_custom_call.1} parent=1 // pred_check_branch
      %3021 = sbr.rel (%p3019) target = $region65
    $region64: #{tpu_custom_call.1} parent=1 // pred_region
      %v3022 = vld [vmem:[%s174] sm:$0xff]
      %v3023 = vld [vmem:[%s174 + $0x8] sm:$0xff]
      %v3024 = vld [vmem:[%s174 + $0x10] sm:$0xff]
      %v3025 = vld [vmem:[%s174 + $0x18] sm:$0xff]
      %v3026 = vld [vmem:[%s174 + $0x20] sm:$0xff]
      %v3027 = vld [vmem:[%s174 + $0x28] sm:$0xff]
      %v3028 = vld [vmem:[%s174 + $0x30] sm:$0xff]
      %v3029 = vld [vmem:[%s174 + $0x38] sm:$0xff]
      %v3030 = vpack.c.bf16 %v3022, %v3022
      %v3031 = vpack.c.bf16 %v3023, %v3023
      %v3032 = vpack.c.bf16 %v3024, %v3024
      %v3033 = vpack.c.bf16 %v3025, %v3025
      %v3034 = vpack.c.bf16 %v3026, %v3026
      %v3035 = vpack.c.bf16 %v3027, %v3027
      %v3036 = vpack.c.bf16 %v3028, %v3028
      %v3037 = vpack.c.bf16 %v3029, %v3029
      %v3038 = vld [vmem:[#allocation9] sm:$0xff]
      %v3039 = vld [vmem:[#allocation9 + $0x8] sm:$0xff]
      %v3040 = vld [vmem:[#allocation9 + $0x10] sm:$0xff]
      %v3041 = vld [vmem:[#allocation9 + $0x18] sm:$0xff]
      %v3042 = vld [vmem:[#allocation9 + $0x20] sm:$0xff]
      %v3043 = vld [vmem:[#allocation9 + $0x28] sm:$0xff]
      %v3044 = vld [vmem:[#allocation9 + $0x30] sm:$0xff]
      %v3045 = vld [vmem:[#allocation9 + $0x38] sm:$0xff]
      %v3046 = vld [vmem:[#allocation9 + $0x40] sm:$0xff]
      %v3047 = vld [vmem:[#allocation9 + $0x48] sm:$0xff]
      %v3048 = vld [vmem:[#allocation9 + $0x50] sm:$0xff]
      %v3049 = vld [vmem:[#allocation9 + $0x58] sm:$0xff]
      %v3050 = vld [vmem:[#allocation9 + $0x60] sm:$0xff]
      %v3051 = vld [vmem:[#allocation9 + $0x68] sm:$0xff]
      %v3052 = vld [vmem:[#allocation9 + $0x70] sm:$0xff]
      %v3053 = vld [vmem:[#allocation9 + $0x78] sm:$0xff]
      %v3054 = vld [vmem:[#allocation9 + $0x80] sm:$0xff]
      %v3055 = vld [vmem:[#allocation9 + $0x88] sm:$0xff]
      %v3056 = vld [vmem:[#allocation9 + $0x90] sm:$0xff]
      %v3057 = vld [vmem:[#allocation9 + $0x98] sm:$0xff]
      %v3058 = vld [vmem:[#allocation9 + $0xa0] sm:$0xff]
      %v3059 = vld [vmem:[#allocation9 + $0xa8] sm:$0xff]
      %v3060 = vld [vmem:[#allocation9 + $0xb0] sm:$0xff]
      %v3061 = vld [vmem:[#allocation9 + $0xb8] sm:$0xff]
      %v3062 = vld [vmem:[#allocation9 + $0xc0] sm:$0xff]
      %v3063 = vld [vmem:[#allocation9 + $0xc8] sm:$0xff]
      %v3064 = vld [vmem:[#allocation9 + $0xd0] sm:$0xff]
      %v3065 = vld [vmem:[#allocation9 + $0xd8] sm:$0xff]
      %v3066 = vld [vmem:[#allocation9 + $0xe0] sm:$0xff]
      %v3067 = vld [vmem:[#allocation9 + $0xe8] sm:$0xff]
      %v3068 = vld [vmem:[#allocation9 + $0xf0] sm:$0xff]
      %v3069 = vld [vmem:[#allocation9 + $0xf8] sm:$0xff]
      %v3070 = vld [vmem:[#allocation9 + $0x100] sm:$0xff]
      %v3071 = vld [vmem:[#allocation9 + $0x108] sm:$0xff]
      %v3072 = vld [vmem:[#allocation9 + $0x110] sm:$0xff]
      %v3073 = vld [vmem:[#allocation9 + $0x118] sm:$0xff]
      %v3074 = vld [vmem:[#allocation9 + $0x120] sm:$0xff]
      %v3075 = vld [vmem:[#allocation9 + $0x128] sm:$0xff]
      %v3076 = vld [vmem:[#allocation9 + $0x130] sm:$0xff]
      %v3077 = vld [vmem:[#allocation9 + $0x138] sm:$0xff]
      %v3078 = vld [vmem:[#allocation9 + $0x140] sm:$0xff]
      %v3079 = vld [vmem:[#allocation9 + $0x148] sm:$0xff]
      %v3080 = vld [vmem:[#allocation9 + $0x150] sm:$0xff]
      %v3081 = vld [vmem:[#allocation9 + $0x158] sm:$0xff]
      %v3082 = vld [vmem:[#allocation9 + $0x160] sm:$0xff]
      %v3083 = vld [vmem:[#allocation9 + $0x168] sm:$0xff]
      %v3084 = vld [vmem:[#allocation9 + $0x170] sm:$0xff]
      %v3085 = vld [vmem:[#allocation9 + $0x178] sm:$0xff]
      %v3086 = vld [vmem:[#allocation9 + $0x180] sm:$0xff]
      %v3087 = vld [vmem:[#allocation9 + $0x188] sm:$0xff]
      %v3088 = vld [vmem:[#allocation9 + $0x190] sm:$0xff]
      %v3089 = vld [vmem:[#allocation9 + $0x198] sm:$0xff]
      %v3090 = vld [vmem:[#allocation9 + $0x1a0] sm:$0xff]
      %v3091 = vld [vmem:[#allocation9 + $0x1a8] sm:$0xff]
      %v3092 = vld [vmem:[#allocation9 + $0x1b0] sm:$0xff]
      %v3093 = vld [vmem:[#allocation9 + $0x1b8] sm:$0xff]
      %v3094 = vld [vmem:[#allocation9 + $0x1c0] sm:$0xff]
      %v3095 = vld [vmem:[#allocation9 + $0x1c8] sm:$0xff]
      %v3096 = vld [vmem:[#allocation9 + $0x1d0] sm:$0xff]
      %v3097 = vld [vmem:[#allocation9 + $0x1d8] sm:$0xff]
      %v3098 = vld [vmem:[#allocation9 + $0x1e0] sm:$0xff]
      %v3099 = vld [vmem:[#allocation9 + $0x1e8] sm:$0xff]
      %v3100 = vld [vmem:[#allocation9 + $0x1f0] sm:$0xff]
      %v3101 = vld [vmem:[#allocation9 + $0x1f8] sm:$0xff]
      %v3102 = vld [vmem:[#allocation9 + $0x200] sm:$0xff]
      %v3103 = vld [vmem:[#allocation9 + $0x208] sm:$0xff]
      %v3104 = vld [vmem:[#allocation9 + $0x210] sm:$0xff]
      %v3105 = vld [vmem:[#allocation9 + $0x218] sm:$0xff]
      %v3106 = vld [vmem:[#allocation9 + $0x220] sm:$0xff]
      %v3107 = vld [vmem:[#allocation9 + $0x228] sm:$0xff]
      %v3108 = vld [vmem:[#allocation9 + $0x230] sm:$0xff]
      %v3109 = vld [vmem:[#allocation9 + $0x238] sm:$0xff]
      %v3110 = vld [vmem:[#allocation9 + $0x240] sm:$0xff]
      %v3111 = vld [vmem:[#allocation9 + $0x248] sm:$0xff]
      %v3112 = vld [vmem:[#allocation9 + $0x250] sm:$0xff]
      %v3113 = vld [vmem:[#allocation9 + $0x258] sm:$0xff]
      %v3114 = vld [vmem:[#allocation9 + $0x260] sm:$0xff]
      %v3115 = vld [vmem:[#allocation9 + $0x268] sm:$0xff]
      %v3116 = vld [vmem:[#allocation9 + $0x270] sm:$0xff]
      %v3117 = vld [vmem:[#allocation9 + $0x278] sm:$0xff]
      %v3118 = vld [vmem:[#allocation9 + $0x280] sm:$0xff]
      %v3119 = vld [vmem:[#allocation9 + $0x288] sm:$0xff]
      %v3120 = vld [vmem:[#allocation9 + $0x290] sm:$0xff]
      %v3121 = vld [vmem:[#allocation9 + $0x298] sm:$0xff]
      %v3122 = vld [vmem:[#allocation9 + $0x2a0] sm:$0xff]
      %v3123 = vld [vmem:[#allocation9 + $0x2a8] sm:$0xff]
      %v3124 = vld [vmem:[#allocation9 + $0x2b0] sm:$0xff]
      %v3125 = vld [vmem:[#allocation9 + $0x2b8] sm:$0xff]
      %v3126 = vld [vmem:[#allocation9 + $0x2c0] sm:$0xff]
      %v3127 = vld [vmem:[#allocation9 + $0x2c8] sm:$0xff]
      %v3128 = vld [vmem:[#allocation9 + $0x2d0] sm:$0xff]
      %v3129 = vld [vmem:[#allocation9 + $0x2d8] sm:$0xff]
      %v3130 = vld [vmem:[#allocation9 + $0x2e0] sm:$0xff]
      %v3131 = vld [vmem:[#allocation9 + $0x2e8] sm:$0xff]
      %v3132 = vld [vmem:[#allocation9 + $0x2f0] sm:$0xff]
      %v3133 = vld [vmem:[#allocation9 + $0x2f8] sm:$0xff]
      %v3134 = vld [vmem:[#allocation9 + $0x300] sm:$0xff]
      %v3135 = vld [vmem:[#allocation9 + $0x308] sm:$0xff]
      %v3136 = vld [vmem:[#allocation9 + $0x310] sm:$0xff]
      %v3137 = vld [vmem:[#allocation9 + $0x318] sm:$0xff]
      %v3138 = vld [vmem:[#allocation9 + $0x320] sm:$0xff]
      %v3139 = vld [vmem:[#allocation9 + $0x328] sm:$0xff]
      %v3140 = vld [vmem:[#allocation9 + $0x330] sm:$0xff]
      %v3141 = vld [vmem:[#allocation9 + $0x338] sm:$0xff]
      %v3142 = vld [vmem:[#allocation9 + $0x340] sm:$0xff]
      %v3143 = vld [vmem:[#allocation9 + $0x348] sm:$0xff]
      %v3144 = vld [vmem:[#allocation9 + $0x350] sm:$0xff]
      %v3145 = vld [vmem:[#allocation9 + $0x358] sm:$0xff]
      %v3146 = vld [vmem:[#allocation9 + $0x360] sm:$0xff]
      %v3147 = vld [vmem:[#allocation9 + $0x368] sm:$0xff]
      %v3148 = vld [vmem:[#allocation9 + $0x370] sm:$0xff]
      %v3149 = vld [vmem:[#allocation9 + $0x378] sm:$0xff]
      %v3150 = vld [vmem:[#allocation9 + $0x380] sm:$0xff]
      %v3151 = vld [vmem:[#allocation9 + $0x388] sm:$0xff]
      %v3152 = vld [vmem:[#allocation9 + $0x390] sm:$0xff]
      %v3153 = vld [vmem:[#allocation9 + $0x398] sm:$0xff]
      %v3154 = vld [vmem:[#allocation9 + $0x3a0] sm:$0xff]
      %v3155 = vld [vmem:[#allocation9 + $0x3a8] sm:$0xff]
      %v3156 = vld [vmem:[#allocation9 + $0x3b0] sm:$0xff]
      %v3157 = vld [vmem:[#allocation9 + $0x3b8] sm:$0xff]
      %v3158 = vld [vmem:[#allocation9 + $0x3c0] sm:$0xff]
      %v3159 = vld [vmem:[#allocation9 + $0x3c8] sm:$0xff]
      %v3160 = vld [vmem:[#allocation9 + $0x3d0] sm:$0xff]
      %v3161 = vld [vmem:[#allocation9 + $0x3d8] sm:$0xff]
      %v3162 = vld [vmem:[#allocation9 + $0x3e0] sm:$0xff]
      %v3163 = vld [vmem:[#allocation9 + $0x3e8] sm:$0xff]
      %v3164 = vld [vmem:[#allocation9 + $0x3f0] sm:$0xff]
      %v3165 = vld [vmem:[#allocation9 + $0x3f8] sm:$0xff]
      %v3166 = vld [vmem:[#allocation9 + $0x400] sm:$0xff]
      %v3167 = vld [vmem:[#allocation9 + $0x408] sm:$0xff]
      %v3168 = vld [vmem:[#allocation9 + $0x410] sm:$0xff]
      %v3169 = vld [vmem:[#allocation9 + $0x418] sm:$0xff]
      %v3170 = vld [vmem:[#allocation9 + $0x420] sm:$0xff]
      %v3171 = vld [vmem:[#allocation9 + $0x428] sm:$0xff]
      %v3172 = vld [vmem:[#allocation9 + $0x430] sm:$0xff]
      %v3173 = vld [vmem:[#allocation9 + $0x438] sm:$0xff]
      %v3174 = vld [vmem:[#allocation9 + $0x440] sm:$0xff]
      %v3175 = vld [vmem:[#allocation9 + $0x448] sm:$0xff]
      %v3176 = vld [vmem:[#allocation9 + $0x450] sm:$0xff]
      %v3177 = vld [vmem:[#allocation9 + $0x458] sm:$0xff]
      %v3178 = vld [vmem:[#allocation9 + $0x460] sm:$0xff]
      %v3179 = vld [vmem:[#allocation9 + $0x468] sm:$0xff]
      %v3180 = vld [vmem:[#allocation9 + $0x470] sm:$0xff]
      %v3181 = vld [vmem:[#allocation9 + $0x478] sm:$0xff]
      %v3182 = vld [vmem:[#allocation9 + $0x480] sm:$0xff]
      %v3183 = vld [vmem:[#allocation9 + $0x488] sm:$0xff]
      %v3184 = vld [vmem:[#allocation9 + $0x490] sm:$0xff]
      %v3185 = vld [vmem:[#allocation9 + $0x498] sm:$0xff]
      %v3186 = vld [vmem:[#allocation9 + $0x4a0] sm:$0xff]
      %v3187 = vld [vmem:[#allocation9 + $0x4a8] sm:$0xff]
      %v3188 = vld [vmem:[#allocation9 + $0x4b0] sm:$0xff]
      %v3189 = vld [vmem:[#allocation9 + $0x4b8] sm:$0xff]
      %v3190 = vld [vmem:[#allocation9 + $0x4c0] sm:$0xff]
      %v3191 = vld [vmem:[#allocation9 + $0x4c8] sm:$0xff]
      %v3192 = vld [vmem:[#allocation9 + $0x4d0] sm:$0xff]
      %v3193 = vld [vmem:[#allocation9 + $0x4d8] sm:$0xff]
      %v3194 = vld [vmem:[#allocation9 + $0x4e0] sm:$0xff]
      %v3195 = vld [vmem:[#allocation9 + $0x4e8] sm:$0xff]
      %v3196 = vld [vmem:[#allocation9 + $0x4f0] sm:$0xff]
      %v3197 = vld [vmem:[#allocation9 + $0x4f8] sm:$0xff]
      %v3198 = vld [vmem:[#allocation9 + $0x500] sm:$0xff]
      %v3199 = vld [vmem:[#allocation9 + $0x508] sm:$0xff]
      %v3200 = vld [vmem:[#allocation9 + $0x510] sm:$0xff]
      %v3201 = vld [vmem:[#allocation9 + $0x518] sm:$0xff]
      %v3202 = vld [vmem:[#allocation9 + $0x520] sm:$0xff]
      %v3203 = vld [vmem:[#allocation9 + $0x528] sm:$0xff]
      %v3204 = vld [vmem:[#allocation9 + $0x530] sm:$0xff]
      %v3205 = vld [vmem:[#allocation9 + $0x538] sm:$0xff]
      %v3206 = vld [vmem:[#allocation9 + $0x540] sm:$0xff]
      %v3207 = vld [vmem:[#allocation9 + $0x548] sm:$0xff]
      %v3208 = vld [vmem:[#allocation9 + $0x550] sm:$0xff]
      %v3209 = vld [vmem:[#allocation9 + $0x558] sm:$0xff]
      %v3210 = vld [vmem:[#allocation9 + $0x560] sm:$0xff]
      %v3211 = vld [vmem:[#allocation9 + $0x568] sm:$0xff]
      %v3212 = vld [vmem:[#allocation9 + $0x570] sm:$0xff]
      %v3213 = vld [vmem:[#allocation9 + $0x578] sm:$0xff]
      %v3214 = vld [vmem:[#allocation9 + $0x580] sm:$0xff]
      %v3215 = vld [vmem:[#allocation9 + $0x588] sm:$0xff]
      %v3216 = vld [vmem:[#allocation9 + $0x590] sm:$0xff]
      %v3217 = vld [vmem:[#allocation9 + $0x598] sm:$0xff]
      %v3218 = vld [vmem:[#allocation9 + $0x5a0] sm:$0xff]
      %v3219 = vld [vmem:[#allocation9 + $0x5a8] sm:$0xff]
      %v3220 = vld [vmem:[#allocation9 + $0x5b0] sm:$0xff]
      %v3221 = vld [vmem:[#allocation9 + $0x5b8] sm:$0xff]
      %v3222 = vld [vmem:[#allocation9 + $0x5c0] sm:$0xff]
      %v3223 = vld [vmem:[#allocation9 + $0x5c8] sm:$0xff]
      %v3224 = vld [vmem:[#allocation9 + $0x5d0] sm:$0xff]
      %v3225 = vld [vmem:[#allocation9 + $0x5d8] sm:$0xff]
      %v3226 = vld [vmem:[#allocation9 + $0x5e0] sm:$0xff]
      %v3227 = vld [vmem:[#allocation9 + $0x5e8] sm:$0xff]
      %v3228 = vld [vmem:[#allocation9 + $0x5f0] sm:$0xff]
      %v3229 = vld [vmem:[#allocation9 + $0x5f8] sm:$0xff]
      %v3230 = vld [vmem:[#allocation9 + $0x600] sm:$0xff]
      %v3231 = vld [vmem:[#allocation9 + $0x608] sm:$0xff]
      %v3232 = vld [vmem:[#allocation9 + $0x610] sm:$0xff]
      %v3233 = vld [vmem:[#allocation9 + $0x618] sm:$0xff]
      %v3234 = vld [vmem:[#allocation9 + $0x620] sm:$0xff]
      %v3235 = vld [vmem:[#allocation9 + $0x628] sm:$0xff]
      %v3236 = vld [vmem:[#allocation9 + $0x630] sm:$0xff]
      %v3237 = vld [vmem:[#allocation9 + $0x638] sm:$0xff]
      %v3238 = vld [vmem:[#allocation9 + $0x640] sm:$0xff]
      %v3239 = vld [vmem:[#allocation9 + $0x648] sm:$0xff]
      %v3240 = vld [vmem:[#allocation9 + $0x650] sm:$0xff]
      %v3241 = vld [vmem:[#allocation9 + $0x658] sm:$0xff]
      %v3242 = vld [vmem:[#allocation9 + $0x660] sm:$0xff]
      %v3243 = vld [vmem:[#allocation9 + $0x668] sm:$0xff]
      %v3244 = vld [vmem:[#allocation9 + $0x670] sm:$0xff]
      %v3245 = vld [vmem:[#allocation9 + $0x678] sm:$0xff]
      %v3246 = vld [vmem:[#allocation9 + $0x680] sm:$0xff]
      %v3247 = vld [vmem:[#allocation9 + $0x688] sm:$0xff]
      %v3248 = vld [vmem:[#allocation9 + $0x690] sm:$0xff]
      %v3249 = vld [vmem:[#allocation9 + $0x698] sm:$0xff]
      %v3250 = vld [vmem:[#allocation9 + $0x6a0] sm:$0xff]
      %v3251 = vld [vmem:[#allocation9 + $0x6a8] sm:$0xff]
      %v3252 = vld [vmem:[#allocation9 + $0x6b0] sm:$0xff]
      %v3253 = vld [vmem:[#allocation9 + $0x6b8] sm:$0xff]
      %v3254 = vld [vmem:[#allocation9 + $0x6c0] sm:$0xff]
      %v3255 = vld [vmem:[#allocation9 + $0x6c8] sm:$0xff]
      %v3256 = vld [vmem:[#allocation9 + $0x6d0] sm:$0xff]
      %v3257 = vld [vmem:[#allocation9 + $0x6d8] sm:$0xff]
      %v3258 = vld [vmem:[#allocation9 + $0x6e0] sm:$0xff]
      %v3259 = vld [vmem:[#allocation9 + $0x6e8] sm:$0xff]
      %v3260 = vld [vmem:[#allocation9 + $0x6f0] sm:$0xff]
      %v3261 = vld [vmem:[#allocation9 + $0x6f8] sm:$0xff]
      %v3262 = vld [vmem:[#allocation9 + $0x700] sm:$0xff]
      %v3263 = vld [vmem:[#allocation9 + $0x708] sm:$0xff]
      %v3264 = vld [vmem:[#allocation9 + $0x710] sm:$0xff]
      %v3265 = vld [vmem:[#allocation9 + $0x718] sm:$0xff]
      %v3266 = vld [vmem:[#allocation9 + $0x720] sm:$0xff]
      %v3267 = vld [vmem:[#allocation9 + $0x728] sm:$0xff]
      %v3268 = vld [vmem:[#allocation9 + $0x730] sm:$0xff]
      %v3269 = vld [vmem:[#allocation9 + $0x738] sm:$0xff]
      %v3270 = vld [vmem:[#allocation9 + $0x740] sm:$0xff]
      %v3271 = vld [vmem:[#allocation9 + $0x748] sm:$0xff]
      %v3272 = vld [vmem:[#allocation9 + $0x750] sm:$0xff]
      %v3273 = vld [vmem:[#allocation9 + $0x758] sm:$0xff]
      %v3274 = vld [vmem:[#allocation9 + $0x760] sm:$0xff]
      %v3275 = vld [vmem:[#allocation9 + $0x768] sm:$0xff]
      %v3276 = vld [vmem:[#allocation9 + $0x770] sm:$0xff]
      %v3277 = vld [vmem:[#allocation9 + $0x778] sm:$0xff]
      %v3278 = vld [vmem:[#allocation9 + $0x780] sm:$0xff]
      %v3279 = vld [vmem:[#allocation9 + $0x788] sm:$0xff]
      %v3280 = vld [vmem:[#allocation9 + $0x790] sm:$0xff]
      %v3281 = vld [vmem:[#allocation9 + $0x798] sm:$0xff]
      %v3282 = vld [vmem:[#allocation9 + $0x7a0] sm:$0xff]
      %v3283 = vld [vmem:[#allocation9 + $0x7a8] sm:$0xff]
      %v3284 = vld [vmem:[#allocation9 + $0x7b0] sm:$0xff]
      %v3285 = vld [vmem:[#allocation9 + $0x7b8] sm:$0xff]
      %v3286 = vld [vmem:[#allocation9 + $0x7c0] sm:$0xff]
      %v3287 = vld [vmem:[#allocation9 + $0x7c8] sm:$0xff]
      %v3288 = vld [vmem:[#allocation9 + $0x7d0] sm:$0xff]
      %v3289 = vld [vmem:[#allocation9 + $0x7d8] sm:$0xff]
      %v3290 = vld [vmem:[#allocation9 + $0x7e0] sm:$0xff]
      %v3291 = vld [vmem:[#allocation9 + $0x7e8] sm:$0xff]
      %v3292 = vld [vmem:[#allocation9 + $0x7f0] sm:$0xff]
      %v3293 = vld [vmem:[#allocation9 + $0x7f8] sm:$0xff]
      %v3294 = vld [vmem:[#allocation11] sm:$0xf]
      %v3296 = vlaneseq
      %v3297 = vshrl.u32 %v3296, 7
      %v3298 = vsub.s32 0, %v3297
      %v3299 = vrot.slane %v3294, %v3298
      %v3300 = vlaneseq
      %v3301 = vshrl.u32 %v3300, 7
      %v3302 = vsub.s32 1, %v3301
      %v3303 = vrot.slane %v3294, %v3302
      %v3304 = vlaneseq
      %v3305 = vshrl.u32 %v3304, 7
      %v3306 = vsub.s32 2, %v3305
      %v3307 = vrot.slane %v3294, %v3306
      %v3308 = vlaneseq
      %v3309 = vshrl.u32 %v3308, 7
      %v3310 = vsub.s32 3, %v3309
      %v3311 = vrot.slane %v3294, %v3310
      %v3572 = vunpack.c.l.b16 %v3038
      %v3573 = vunpack.c.h.b16 %v3038
      %v3574 = vunpack.c.l.b16 %v3039
      %v3575 = vunpack.c.h.b16 %v3039
      %v3576 = vunpack.c.l.b16 %v3040
      %v3577 = vunpack.c.h.b16 %v3040
      %v3578 = vunpack.c.l.b16 %v3041
      %v3579 = vunpack.c.h.b16 %v3041
      %v3580 = vunpack.c.l.b16 %v3042
      %v3581 = vunpack.c.h.b16 %v3042
      %v3582 = vunpack.c.l.b16 %v3043
      %v3583 = vunpack.c.h.b16 %v3043
      %v3584 = vunpack.c.l.b16 %v3044
      %v3585 = vunpack.c.h.b16 %v3044
      %v3586 = vunpack.c.l.b16 %v3045
      %v3587 = vunpack.c.h.b16 %v3045
      %v3588 = vunpack.c.l.b16 %v3046
      %v3589 = vunpack.c.h.b16 %v3046
      %v3590 = vunpack.c.l.b16 %v3047
      %v3591 = vunpack.c.h.b16 %v3047
      %v3592 = vunpack.c.l.b16 %v3048
      %v3593 = vunpack.c.h.b16 %v3048
      %v3594 = vunpack.c.l.b16 %v3049
      %v3595 = vunpack.c.h.b16 %v3049
      %v3596 = vunpack.c.l.b16 %v3050
      %v3597 = vunpack.c.h.b16 %v3050
      %v3598 = vunpack.c.l.b16 %v3051
      %v3599 = vunpack.c.h.b16 %v3051
      %v3600 = vunpack.c.l.b16 %v3052
      %v3601 = vunpack.c.h.b16 %v3052
      %v3602 = vunpack.c.l.b16 %v3053
      %v3603 = vunpack.c.h.b16 %v3053
      %v3604 = vunpack.c.l.b16 %v3054
      %v3605 = vunpack.c.h.b16 %v3054
      %v3606 = vunpack.c.l.b16 %v3055
      %v3607 = vunpack.c.h.b16 %v3055
      %v3608 = vunpack.c.l.b16 %v3056
      %v3609 = vunpack.c.h.b16 %v3056
      %v3610 = vunpack.c.l.b16 %v3057
      %v3611 = vunpack.c.h.b16 %v3057
      %v3612 = vunpack.c.l.b16 %v3058
      %v3613 = vunpack.c.h.b16 %v3058
      %v3614 = vunpack.c.l.b16 %v3059
      %v3615 = vunpack.c.h.b16 %v3059
      %v3616 = vunpack.c.l.b16 %v3060
      %v3617 = vunpack.c.h.b16 %v3060
      %v3618 = vunpack.c.l.b16 %v3061
      %v3619 = vunpack.c.h.b16 %v3061
      %v3620 = vunpack.c.l.b16 %v3062
      %v3621 = vunpack.c.h.b16 %v3062
      %v3622 = vunpack.c.l.b16 %v3063
      %v3623 = vunpack.c.h.b16 %v3063
      %v3624 = vunpack.c.l.b16 %v3064
      %v3625 = vunpack.c.h.b16 %v3064
      %v3626 = vunpack.c.l.b16 %v3065
      %v3627 = vunpack.c.h.b16 %v3065
      %v3628 = vunpack.c.l.b16 %v3066
      %v3629 = vunpack.c.h.b16 %v3066
      %v3630 = vunpack.c.l.b16 %v3067
      %v3631 = vunpack.c.h.b16 %v3067
      %v3632 = vunpack.c.l.b16 %v3068
      %v3633 = vunpack.c.h.b16 %v3068
      %v3634 = vunpack.c.l.b16 %v3069
      %v3635 = vunpack.c.h.b16 %v3069
      %v3636 = vunpack.c.l.b16 %v3070
      %v3637 = vunpack.c.h.b16 %v3070
      %v3638 = vunpack.c.l.b16 %v3071
      %v3639 = vunpack.c.h.b16 %v3071
      %v3640 = vunpack.c.l.b16 %v3072
      %v3641 = vunpack.c.h.b16 %v3072
      %v3642 = vunpack.c.l.b16 %v3073
      %v3643 = vunpack.c.h.b16 %v3073
      %v3644 = vunpack.c.l.b16 %v3074
      %v3645 = vunpack.c.h.b16 %v3074
      %v3646 = vunpack.c.l.b16 %v3075
      %v3647 = vunpack.c.h.b16 %v3075
      %v3648 = vunpack.c.l.b16 %v3076
      %v3649 = vunpack.c.h.b16 %v3076
      %v3650 = vunpack.c.l.b16 %v3077
      %v3651 = vunpack.c.h.b16 %v3077
      %v3652 = vunpack.c.l.b16 %v3078
      %v3653 = vunpack.c.h.b16 %v3078
      %v3654 = vunpack.c.l.b16 %v3079
      %v3655 = vunpack.c.h.b16 %v3079
      %v3656 = vunpack.c.l.b16 %v3080
      %v3657 = vunpack.c.h.b16 %v3080
      %v3658 = vunpack.c.l.b16 %v3081
      %v3659 = vunpack.c.h.b16 %v3081
      %v3660 = vunpack.c.l.b16 %v3082
      %v3661 = vunpack.c.h.b16 %v3082
      %v3662 = vunpack.c.l.b16 %v3083
      %v3663 = vunpack.c.h.b16 %v3083
      %v3664 = vunpack.c.l.b16 %v3084
      %v3665 = vunpack.c.h.b16 %v3084
      %v3666 = vunpack.c.l.b16 %v3085
      %v3667 = vunpack.c.h.b16 %v3085
      %v3668 = vunpack.c.l.b16 %v3086
      %v3669 = vunpack.c.h.b16 %v3086
      %v3670 = vunpack.c.l.b16 %v3087
      %v3671 = vunpack.c.h.b16 %v3087
      %v3672 = vunpack.c.l.b16 %v3088
      %v3673 = vunpack.c.h.b16 %v3088
      %v3674 = vunpack.c.l.b16 %v3089
      %v3675 = vunpack.c.h.b16 %v3089
      %v3676 = vunpack.c.l.b16 %v3090
      %v3677 = vunpack.c.h.b16 %v3090
      %v3678 = vunpack.c.l.b16 %v3091
      %v3679 = vunpack.c.h.b16 %v3091
      %v3680 = vunpack.c.l.b16 %v3092
      %v3681 = vunpack.c.h.b16 %v3092
      %v3682 = vunpack.c.l.b16 %v3093
      %v3683 = vunpack.c.h.b16 %v3093
      %v3684 = vunpack.c.l.b16 %v3094
      %v3685 = vunpack.c.h.b16 %v3094
      %v3686 = vunpack.c.l.b16 %v3095
      %v3687 = vunpack.c.h.b16 %v3095
      %v3688 = vunpack.c.l.b16 %v3096
      %v3689 = vunpack.c.h.b16 %v3096
      %v3690 = vunpack.c.l.b16 %v3097
      %v3691 = vunpack.c.h.b16 %v3097
      %v3692 = vunpack.c.l.b16 %v3098
      %v3693 = vunpack.c.h.b16 %v3098
      %v3694 = vunpack.c.l.b16 %v3099
      %v3695 = vunpack.c.h.b16 %v3099
      %v3696 = vunpack.c.l.b16 %v3100
      %v3697 = vunpack.c.h.b16 %v3100
      %v3698 = vunpack.c.l.b16 %v3101
      %v3699 = vunpack.c.h.b16 %v3101
      %v3700 = vunpack.c.l.b16 %v3102
      %v3701 = vunpack.c.h.b16 %v3102
      %v3702 = vunpack.c.l.b16 %v3103
      %v3703 = vunpack.c.h.b16 %v3103
      %v3704 = vunpack.c.l.b16 %v3104
      %v3705 = vunpack.c.h.b16 %v3104
      %v3706 = vunpack.c.l.b16 %v3105
      %v3707 = vunpack.c.h.b16 %v3105
      %v3708 = vunpack.c.l.b16 %v3106
      %v3709 = vunpack.c.h.b16 %v3106
      %v3710 = vunpack.c.l.b16 %v3107
      %v3711 = vunpack.c.h.b16 %v3107
      %v3712 = vunpack.c.l.b16 %v3108
      %v3713 = vunpack.c.h.b16 %v3108
      %v3714 = vunpack.c.l.b16 %v3109
      %v3715 = vunpack.c.h.b16 %v3109
      %v3716 = vunpack.c.l.b16 %v3110
      %v3717 = vunpack.c.h.b16 %v3110
      %v3718 = vunpack.c.l.b16 %v3111
      %v3719 = vunpack.c.h.b16 %v3111
      %v3720 = vunpack.c.l.b16 %v3112
      %v3721 = vunpack.c.h.b16 %v3112
      %v3722 = vunpack.c.l.b16 %v3113
      %v3723 = vunpack.c.h.b16 %v3113
      %v3724 = vunpack.c.l.b16 %v3114
      %v3725 = vunpack.c.h.b16 %v3114
      %v3726 = vunpack.c.l.b16 %v3115
      %v3727 = vunpack.c.h.b16 %v3115
      %v3728 = vunpack.c.l.b16 %v3116
      %v3729 = vunpack.c.h.b16 %v3116
      %v3730 = vunpack.c.l.b16 %v3117
      %v3731 = vunpack.c.h.b16 %v3117
      %v3732 = vunpack.c.l.b16 %v3118
      %v3733 = vunpack.c.h.b16 %v3118
      %v3734 = vunpack.c.l.b16 %v3119
      %v3735 = vunpack.c.h.b16 %v3119
      %v3736 = vunpack.c.l.b16 %v3120
      %v3737 = vunpack.c.h.b16 %v3120
      %v3738 = vunpack.c.l.b16 %v3121
      %v3739 = vunpack.c.h.b16 %v3121
      %v3740 = vunpack.c.l.b16 %v3122
      %v3741 = vunpack.c.h.b16 %v3122
      %v3742 = vunpack.c.l.b16 %v3123
      %v3743 = vunpack.c.h.b16 %v3123
      %v3744 = vunpack.c.l.b16 %v3124
      %v3745 = vunpack.c.h.b16 %v3124
      %v3746 = vunpack.c.l.b16 %v3125
      %v3747 = vunpack.c.h.b16 %v3125
      %v3748 = vunpack.c.l.b16 %v3126
      %v3749 = vunpack.c.h.b16 %v3126
      %v3750 = vunpack.c.l.b16 %v3127
      %v3751 = vunpack.c.h.b16 %v3127
      %v3752 = vunpack.c.l.b16 %v3128
      %v3753 = vunpack.c.h.b16 %v3128
      %v3754 = vunpack.c.l.b16 %v3129
      %v3755 = vunpack.c.h.b16 %v3129
      %v3756 = vunpack.c.l.b16 %v3130
      %v3757 = vunpack.c.h.b16 %v3130
      %v3758 = vunpack.c.l.b16 %v3131
      %v3759 = vunpack.c.h.b16 %v3131
      %v3760 = vunpack.c.l.b16 %v3132
      %v3761 = vunpack.c.h.b16 %v3132
      %v3762 = vunpack.c.l.b16 %v3133
      %v3763 = vunpack.c.h.b16 %v3133
      %v3764 = vunpack.c.l.b16 %v3134
      %v3765 = vunpack.c.h.b16 %v3134
      %v3766 = vunpack.c.l.b16 %v3135
      %v3767 = vunpack.c.h.b16 %v3135
      %v3768 = vunpack.c.l.b16 %v3136
      %v3769 = vunpack.c.h.b16 %v3136
      %v3770 = vunpack.c.l.b16 %v3137
      %v3771 = vunpack.c.h.b16 %v3137
      %v3772 = vunpack.c.l.b16 %v3138
      %v3773 = vunpack.c.h.b16 %v3138
      %v3774 = vunpack.c.l.b16 %v3139
      %v3775 = vunpack.c.h.b16 %v3139
      %v3776 = vunpack.c.l.b16 %v3140
      %v3777 = vunpack.c.h.b16 %v3140
      %v3778 = vunpack.c.l.b16 %v3141
      %v3779 = vunpack.c.h.b16 %v3141
      %v3780 = vunpack.c.l.b16 %v3142
      %v3781 = vunpack.c.h.b16 %v3142
      %v3782 = vunpack.c.l.b16 %v3143
      %v3783 = vunpack.c.h.b16 %v3143
      %v3784 = vunpack.c.l.b16 %v3144
      %v3785 = vunpack.c.h.b16 %v3144
      %v3786 = vunpack.c.l.b16 %v3145
      %v3787 = vunpack.c.h.b16 %v3145
      %v3788 = vunpack.c.l.b16 %v3146
      %v3789 = vunpack.c.h.b16 %v3146
      %v3790 = vunpack.c.l.b16 %v3147
      %v3791 = vunpack.c.h.b16 %v3147
      %v3792 = vunpack.c.l.b16 %v3148
      %v3793 = vunpack.c.h.b16 %v3148
      %v3794 = vunpack.c.l.b16 %v3149
      %v3795 = vunpack.c.h.b16 %v3149
      %v3796 = vunpack.c.l.b16 %v3150
      %v3797 = vunpack.c.h.b16 %v3150
      %v3798 = vunpack.c.l.b16 %v3151
      %v3799 = vunpack.c.h.b16 %v3151
      %v3800 = vunpack.c.l.b16 %v3152
      %v3801 = vunpack.c.h.b16 %v3152
      %v3802 = vunpack.c.l.b16 %v3153
      %v3803 = vunpack.c.h.b16 %v3153
      %v3804 = vunpack.c.l.b16 %v3154
      %v3805 = vunpack.c.h.b16 %v3154
      %v3806 = vunpack.c.l.b16 %v3155
      %v3807 = vunpack.c.h.b16 %v3155
      %v3808 = vunpack.c.l.b16 %v3156
      %v3809 = vunpack.c.h.b16 %v3156
      %v3810 = vunpack.c.l.b16 %v3157
      %v3811 = vunpack.c.h.b16 %v3157
      %v3812 = vunpack.c.l.b16 %v3158
      %v3813 = vunpack.c.h.b16 %v3158
      %v3814 = vunpack.c.l.b16 %v3159
      %v3815 = vunpack.c.h.b16 %v3159
      %v3816 = vunpack.c.l.b16 %v3160
      %v3817 = vunpack.c.h.b16 %v3160
      %v3818 = vunpack.c.l.b16 %v3161
      %v3819 = vunpack.c.h.b16 %v3161
      %v3820 = vunpack.c.l.b16 %v3162
      %v3821 = vunpack.c.h.b16 %v3162
      %v3822 = vunpack.c.l.b16 %v3163
      %v3823 = vunpack.c.h.b16 %v3163
      %v3824 = vunpack.c.l.b16 %v3164
      %v3825 = vunpack.c.h.b16 %v3164
      %v3826 = vunpack.c.l.b16 %v3165
      %v3827 = vunpack.c.h.b16 %v3165
      %v3828 = vunpack.c.l.b16 %v3166
      %v3829 = vunpack.c.h.b16 %v3166
      %v3830 = vunpack.c.l.b16 %v3167
      %v3831 = vunpack.c.h.b16 %v3167
      %v3832 = vunpack.c.l.b16 %v3168
      %v3833 = vunpack.c.h.b16 %v3168
      %v3834 = vunpack.c.l.b16 %v3169
      %v3835 = vunpack.c.h.b16 %v3169
      %v3836 = vunpack.c.l.b16 %v3170
      %v3837 = vunpack.c.h.b16 %v3170
      %v3838 = vunpack.c.l.b16 %v3171
      %v3839 = vunpack.c.h.b16 %v3171
      %v3840 = vunpack.c.l.b16 %v3172
      %v3841 = vunpack.c.h.b16 %v3172
      %v3842 = vunpack.c.l.b16 %v3173
      %v3843 = vunpack.c.h.b16 %v3173
      %v3844 = vunpack.c.l.b16 %v3174
      %v3845 = vunpack.c.h.b16 %v3174
      %v3846 = vunpack.c.l.b16 %v3175
      %v3847 = vunpack.c.h.b16 %v3175
      %v3848 = vunpack.c.l.b16 %v3176
      %v3849 = vunpack.c.h.b16 %v3176
      %v3850 = vunpack.c.l.b16 %v3177
      %v3851 = vunpack.c.h.b16 %v3177
      %v3852 = vunpack.c.l.b16 %v3178
      %v3853 = vunpack.c.h.b16 %v3178
      %v3854 = vunpack.c.l.b16 %v3179
      %v3855 = vunpack.c.h.b16 %v3179
      %v3856 = vunpack.c.l.b16 %v3180
      %v3857 = vunpack.c.h.b16 %v3180
      %v3858 = vunpack.c.l.b16 %v3181
      %v3859 = vunpack.c.h.b16 %v3181
      %v3860 = vunpack.c.l.b16 %v3182
      %v3861 = vunpack.c.h.b16 %v3182
      %v3862 = vunpack.c.l.b16 %v3183
      %v3863 = vunpack.c.h.b16 %v3183
      %v3864 = vunpack.c.l.b16 %v3184
      %v3865 = vunpack.c.h.b16 %v3184
      %v3866 = vunpack.c.l.b16 %v3185
      %v3867 = vunpack.c.h.b16 %v3185
      %v3868 = vunpack.c.l.b16 %v3186
      %v3869 = vunpack.c.h.b16 %v3186
      %v3870 = vunpack.c.l.b16 %v3187
      %v3871 = vunpack.c.h.b16 %v3187
      %v3872 = vunpack.c.l.b16 %v3188
      %v3873 = vunpack.c.h.b16 %v3188
      %v3874 = vunpack.c.l.b16 %v3189
      %v3875 = vunpack.c.h.b16 %v3189
      %v3876 = vunpack.c.l.b16 %v3190
      %v3877 = vunpack.c.h.b16 %v3190
      %v3878 = vunpack.c.l.b16 %v3191
      %v3879 = vunpack.c.h.b16 %v3191
      %v3880 = vunpack.c.l.b16 %v3192
      %v3881 = vunpack.c.h.b16 %v3192
      %v3882 = vunpack.c.l.b16 %v3193
      %v3883 = vunpack.c.h.b16 %v3193
      %v3884 = vunpack.c.l.b16 %v3194
      %v3885 = vunpack.c.h.b16 %v3194
      %v3886 = vunpack.c.l.b16 %v3195
      %v3887 = vunpack.c.h.b16 %v3195
      %v3888 = vunpack.c.l.b16 %v3196
      %v3889 = vunpack.c.h.b16 %v3196
      %v3890 = vunpack.c.l.b16 %v3197
      %v3891 = vunpack.c.h.b16 %v3197
      %v3892 = vunpack.c.l.b16 %v3198
      %v3893 = vunpack.c.h.b16 %v3198
      %v3894 = vunpack.c.l.b16 %v3199
      %v3895 = vunpack.c.h.b16 %v3199
      %v3896 = vunpack.c.l.b16 %v3200
      %v3897 = vunpack.c.h.b16 %v3200
      %v3898 = vunpack.c.l.b16 %v3201
      %v3899 = vunpack.c.h.b16 %v3201
      %v3900 = vunpack.c.l.b16 %v3202
      %v3901 = vunpack.c.h.b16 %v3202
      %v3902 = vunpack.c.l.b16 %v3203
      %v3903 = vunpack.c.h.b16 %v3203
      %v3904 = vunpack.c.l.b16 %v3204
      %v3905 = vunpack.c.h.b16 %v3204
      %v3906 = vunpack.c.l.b16 %v3205
      %v3907 = vunpack.c.h.b16 %v3205
      %v3908 = vunpack.c.l.b16 %v3206
      %v3909 = vunpack.c.h.b16 %v3206
      %v3910 = vunpack.c.l.b16 %v3207
      %v3911 = vunpack.c.h.b16 %v3207
      %v3912 = vunpack.c.l.b16 %v3208
      %v3913 = vunpack.c.h.b16 %v3208
      %v3914 = vunpack.c.l.b16 %v3209
      %v3915 = vunpack.c.h.b16 %v3209
      %v3916 = vunpack.c.l.b16 %v3210
      %v3917 = vunpack.c.h.b16 %v3210
      %v3918 = vunpack.c.l.b16 %v3211
      %v3919 = vunpack.c.h.b16 %v3211
      %v3920 = vunpack.c.l.b16 %v3212
      %v3921 = vunpack.c.h.b16 %v3212
      %v3922 = vunpack.c.l.b16 %v3213
      %v3923 = vunpack.c.h.b16 %v3213
      %v3924 = vunpack.c.l.b16 %v3214
      %v3925 = vunpack.c.h.b16 %v3214
      %v3926 = vunpack.c.l.b16 %v3215
      %v3927 = vunpack.c.h.b16 %v3215
      %v3928 = vunpack.c.l.b16 %v3216
      %v3929 = vunpack.c.h.b16 %v3216
      %v3930 = vunpack.c.l.b16 %v3217
      %v3931 = vunpack.c.h.b16 %v3217
      %v3932 = vunpack.c.l.b16 %v3218
      %v3933 = vunpack.c.h.b16 %v3218
      %v3934 = vunpack.c.l.b16 %v3219
      %v3935 = vunpack.c.h.b16 %v3219
      %v3936 = vunpack.c.l.b16 %v3220
      %v3937 = vunpack.c.h.b16 %v3220
      %v3938 = vunpack.c.l.b16 %v3221
      %v3939 = vunpack.c.h.b16 %v3221
      %v3940 = vunpack.c.l.b16 %v3222
      %v3941 = vunpack.c.h.b16 %v3222
      %v3942 = vunpack.c.l.b16 %v3223
      %v3943 = vunpack.c.h.b16 %v3223
      %v3944 = vunpack.c.l.b16 %v3224
      %v3945 = vunpack.c.h.b16 %v3224
      %v3946 = vunpack.c.l.b16 %v3225
      %v3947 = vunpack.c.h.b16 %v3225
      %v3948 = vunpack.c.l.b16 %v3226
      %v3949 = vunpack.c.h.b16 %v3226
      %v3950 = vunpack.c.l.b16 %v3227
      %v3951 = vunpack.c.h.b16 %v3227
      %v3952 = vunpack.c.l.b16 %v3228
      %v3953 = vunpack.c.h.b16 %v3228
      %v3954 = vunpack.c.l.b16 %v3229
      %v3955 = vunpack.c.h.b16 %v3229
      %v3956 = vunpack.c.l.b16 %v3230
      %v3957 = vunpack.c.h.b16 %v3230
      %v3958 = vunpack.c.l.b16 %v3231
      %v3959 = vunpack.c.h.b16 %v3231
      %v3960 = vunpack.c.l.b16 %v3232
      %v3961 = vunpack.c.h.b16 %v3232
      %v3962 = vunpack.c.l.b16 %v3233
      %v3963 = vunpack.c.h.b16 %v3233
      %v3964 = vunpack.c.l.b16 %v3234
      %v3965 = vunpack.c.h.b16 %v3234
      %v3966 = vunpack.c.l.b16 %v3235
      %v3967 = vunpack.c.h.b16 %v3235
      %v3968 = vunpack.c.l.b16 %v3236
      %v3969 = vunpack.c.h.b16 %v3236
      %v3970 = vunpack.c.l.b16 %v3237
      %v3971 = vunpack.c.h.b16 %v3237
      %v3972 = vunpack.c.l.b16 %v3238
      %v3973 = vunpack.c.h.b16 %v3238
      %v3974 = vunpack.c.l.b16 %v3239
      %v3975 = vunpack.c.h.b16 %v3239
      %v3976 = vunpack.c.l.b16 %v3240
      %v3977 = vunpack.c.h.b16 %v3240
      %v3978 = vunpack.c.l.b16 %v3241
      %v3979 = vunpack.c.h.b16 %v3241
      %v3980 = vunpack.c.l.b16 %v3242
      %v3981 = vunpack.c.h.b16 %v3242
      %v3982 = vunpack.c.l.b16 %v3243
      %v3983 = vunpack.c.h.b16 %v3243
      %v3984 = vunpack.c.l.b16 %v3244
      %v3985 = vunpack.c.h.b16 %v3244
      %v3986 = vunpack.c.l.b16 %v3245
      %v3987 = vunpack.c.h.b16 %v3245
      %v3988 = vunpack.c.l.b16 %v3246
      %v3989 = vunpack.c.h.b16 %v3246
      %v3990 = vunpack.c.l.b16 %v3247
      %v3991 = vunpack.c.h.b16 %v3247
      %v3992 = vunpack.c.l.b16 %v3248
      %v3993 = vunpack.c.h.b16 %v3248
      %v3994 = vunpack.c.l.b16 %v3249
      %v3995 = vunpack.c.h.b16 %v3249
      %v3996 = vunpack.c.l.b16 %v3250
      %v3997 = vunpack.c.h.b16 %v3250
      %v3998 = vunpack.c.l.b16 %v3251
      %v3999 = vunpack.c.h.b16 %v3251
      %v4000 = vunpack.c.l.b16 %v3252
      %v4001 = vunpack.c.h.b16 %v3252
      %v4002 = vunpack.c.l.b16 %v3253
      %v4003 = vunpack.c.h.b16 %v3253
      %v4004 = vunpack.c.l.b16 %v3254
      %v4005 = vunpack.c.h.b16 %v3254
      %v4006 = vunpack.c.l.b16 %v3255
      %v4007 = vunpack.c.h.b16 %v3255
      %v4008 = vunpack.c.l.b16 %v3256
      %v4009 = vunpack.c.h.b16 %v3256
      %v4010 = vunpack.c.l.b16 %v3257
      %v4011 = vunpack.c.h.b16 %v3257
      %v4012 = vunpack.c.l.b16 %v3258
      %v4013 = vunpack.c.h.b16 %v3258
      %v4014 = vunpack.c.l.b16 %v3259
      %v4015 = vunpack.c.h.b16 %v3259
      %v4016 = vunpack.c.l.b16 %v3260
      %v4017 = vunpack.c.h.b16 %v3260
      %v4018 = vunpack.c.l.b16 %v3261
      %v4019 = vunpack.c.h.b16 %v3261
      %v4020 = vunpack.c.l.b16 %v3262
      %v4021 = vunpack.c.h.b16 %v3262
      %v4022 = vunpack.c.l.b16 %v3263
      %v4023 = vunpack.c.h.b16 %v3263
      %v4024 = vunpack.c.l.b16 %v3264
      %v4025 = vunpack.c.h.b16 %v3264
      %v4026 = vunpack.c.l.b16 %v3265
      %v4027 = vunpack.c.h.b16 %v3265
      %v4028 = vunpack.c.l.b16 %v3266
      %v4029 = vunpack.c.h.b16 %v3266
      %v4030 = vunpack.c.l.b16 %v3267
      %v4031 = vunpack.c.h.b16 %v3267
      %v4032 = vunpack.c.l.b16 %v3268
      %v4033 = vunpack.c.h.b16 %v3268
      %v4034 = vunpack.c.l.b16 %v3269
      %v4035 = vunpack.c.h.b16 %v3269
      %v4036 = vunpack.c.l.b16 %v3270
      %v4037 = vunpack.c.h.b16 %v3270
      %v4038 = vunpack.c.l.b16 %v3271
      %v4039 = vunpack.c.h.b16 %v3271
      %v4040 = vunpack.c.l.b16 %v3272
      %v4041 = vunpack.c.h.b16 %v3272
      %v4042 = vunpack.c.l.b16 %v3273
      %v4043 = vunpack.c.h.b16 %v3273
      %v4044 = vunpack.c.l.b16 %v3274
      %v4045 = vunpack.c.h.b16 %v3274
      %v4046 = vunpack.c.l.b16 %v3275
      %v4047 = vunpack.c.h.b16 %v3275
      %v4048 = vunpack.c.l.b16 %v3276
      %v4049 = vunpack.c.h.b16 %v3276
      %v4050 = vunpack.c.l.b16 %v3277
      %v4051 = vunpack.c.h.b16 %v3277
      %v4052 = vunpack.c.l.b16 %v3278
      %v4053 = vunpack.c.h.b16 %v3278
      %v4054 = vunpack.c.l.b16 %v3279
      %v4055 = vunpack.c.h.b16 %v3279
      %v4056 = vunpack.c.l.b16 %v3280
      %v4057 = vunpack.c.h.b16 %v3280
      %v4058 = vunpack.c.l.b16 %v3281
      %v4059 = vunpack.c.h.b16 %v3281
      %v4060 = vunpack.c.l.b16 %v3282
      %v4061 = vunpack.c.h.b16 %v3282
      %v4062 = vunpack.c.l.b16 %v3283
      %v4063 = vunpack.c.h.b16 %v3283
      %v4064 = vunpack.c.l.b16 %v3284
      %v4065 = vunpack.c.h.b16 %v3284
      %v4066 = vunpack.c.l.b16 %v3285
      %v4067 = vunpack.c.h.b16 %v3285
      %v4068 = vunpack.c.l.b16 %v3286
      %v4069 = vunpack.c.h.b16 %v3286
      %v4070 = vunpack.c.l.b16 %v3287
      %v4071 = vunpack.c.h.b16 %v3287
      %v4072 = vunpack.c.l.b16 %v3288
      %v4073 = vunpack.c.h.b16 %v3288
      %v4074 = vunpack.c.l.b16 %v3289
      %v4075 = vunpack.c.h.b16 %v3289
      %v4076 = vunpack.c.l.b16 %v3290
      %v4077 = vunpack.c.h.b16 %v3290
      %v4078 = vunpack.c.l.b16 %v3291
      %v4079 = vunpack.c.h.b16 %v3291
      %v4080 = vunpack.c.l.b16 %v3292
      %v4081 = vunpack.c.h.b16 %v3292
      %v4082 = vunpack.c.l.b16 %v3293
      %v4083 = vunpack.c.h.b16 %v3293
      %v4084 = vpack.c.b16 %v3576, %v3572
      %v4085 = vpack.c.b16 %v3577, %v3573
      %v4086 = vpack.c.b16 %v3578, %v3574
      %v4087 = vpack.c.b16 %v3579, %v3575
      %v4088 = vpack.c.b16 %v3584, %v3580
      %v4089 = vpack.c.b16 %v3585, %v3581
      %v4090 = vpack.c.b16 %v3586, %v3582
      %v4091 = vpack.c.b16 %v3587, %v3583
      %v4092 = vpack.c.b16 %v3592, %v3588
      %v4093 = vpack.c.b16 %v3593, %v3589
      %v4094 = vpack.c.b16 %v3594, %v3590
      %v4095 = vpack.c.b16 %v3595, %v3591
      %v4096 = vpack.c.b16 %v3600, %v3596
      %v4097 = vpack.c.b16 %v3601, %v3597
      %v4098 = vpack.c.b16 %v3602, %v3598
      %v4099 = vpack.c.b16 %v3603, %v3599
      %v4100 = vpack.c.b16 %v3608, %v3604
      %v4101 = vpack.c.b16 %v3609, %v3605
      %v4102 = vpack.c.b16 %v3610, %v3606
      %v4103 = vpack.c.b16 %v3611, %v3607
      %v4104 = vpack.c.b16 %v3616, %v3612
      %v4105 = vpack.c.b16 %v3617, %v3613
      %v4106 = vpack.c.b16 %v3618, %v3614
      %v4107 = vpack.c.b16 %v3619, %v3615
      %v4108 = vpack.c.b16 %v3624, %v3620
      %v4109 = vpack.c.b16 %v3625, %v3621
      %v4110 = vpack.c.b16 %v3626, %v3622
      %v4111 = vpack.c.b16 %v3627, %v3623
      %v4112 = vpack.c.b16 %v3632, %v3628
      %v4113 = vpack.c.b16 %v3633, %v3629
      %v4114 = vpack.c.b16 %v3634, %v3630
      %v4115 = vpack.c.b16 %v3635, %v3631
      %v4116 = vpack.c.b16 %v3640, %v3636
      %v4117 = vpack.c.b16 %v3641, %v3637
      %v4118 = vpack.c.b16 %v3642, %v3638
      %v4119 = vpack.c.b16 %v3643, %v3639
      %v4120 = vpack.c.b16 %v3648, %v3644
      %v4121 = vpack.c.b16 %v3649, %v3645
      %v4122 = vpack.c.b16 %v3650, %v3646
      %v4123 = vpack.c.b16 %v3651, %v3647
      %v4124 = vpack.c.b16 %v3656, %v3652
      %v4125 = vpack.c.b16 %v3657, %v3653
      %v4126 = vpack.c.b16 %v3658, %v3654
      %v4127 = vpack.c.b16 %v3659, %v3655
      %v4128 = vpack.c.b16 %v3664, %v3660
      %v4129 = vpack.c.b16 %v3665, %v3661
      %v4130 = vpack.c.b16 %v3666, %v3662
      %v4131 = vpack.c.b16 %v3667, %v3663
      %v4132 = vpack.c.b16 %v3672, %v3668
      %v4133 = vpack.c.b16 %v3673, %v3669
      %v4134 = vpack.c.b16 %v3674, %v3670
      %v4135 = vpack.c.b16 %v3675, %v3671
      %v4136 = vpack.c.b16 %v3680, %v3676
      %v4137 = vpack.c.b16 %v3681, %v3677
      %v4138 = vpack.c.b16 %v3682, %v3678
      %v4139 = vpack.c.b16 %v3683, %v3679
      %v4140 = vpack.c.b16 %v3688, %v3684
      %v4141 = vpack.c.b16 %v3689, %v3685
      %v4142 = vpack.c.b16 %v3690, %v3686
      %v4143 = vpack.c.b16 %v3691, %v3687
      %v4144 = vpack.c.b16 %v3696, %v3692
      %v4145 = vpack.c.b16 %v3697, %v3693
      %v4146 = vpack.c.b16 %v3698, %v3694
      %v4147 = vpack.c.b16 %v3699, %v3695
      %v4148 = vpack.c.b16 %v3704, %v3700
      %v4149 = vpack.c.b16 %v3705, %v3701
      %v4150 = vpack.c.b16 %v3706, %v3702
      %v4151 = vpack.c.b16 %v3707, %v3703
      %v4152 = vpack.c.b16 %v3712, %v3708
      %v4153 = vpack.c.b16 %v3713, %v3709
      %v4154 = vpack.c.b16 %v3714, %v3710
      %v4155 = vpack.c.b16 %v3715, %v3711
      %v4156 = vpack.c.b16 %v3720, %v3716
      %v4157 = vpack.c.b16 %v3721, %v3717
      %v4158 = vpack.c.b16 %v3722, %v3718
      %v4159 = vpack.c.b16 %v3723, %v3719
      %v4160 = vpack.c.b16 %v3728, %v3724
      %v4161 = vpack.c.b16 %v3729, %v3725
      %v4162 = vpack.c.b16 %v3730, %v3726
      %v4163 = vpack.c.b16 %v3731, %v3727
      %v4164 = vpack.c.b16 %v3736, %v3732
      %v4165 = vpack.c.b16 %v3737, %v3733
      %v4166 = vpack.c.b16 %v3738, %v3734
      %v4167 = vpack.c.b16 %v3739, %v3735
      %v4168 = vpack.c.b16 %v3744, %v3740
      %v4169 = vpack.c.b16 %v3745, %v3741
      %v4170 = vpack.c.b16 %v3746, %v3742
      %v4171 = vpack.c.b16 %v3747, %v3743
      %v4172 = vpack.c.b16 %v3752, %v3748
      %v4173 = vpack.c.b16 %v3753, %v3749
      %v4174 = vpack.c.b16 %v3754, %v3750
      %v4175 = vpack.c.b16 %v3755, %v3751
      %v4176 = vpack.c.b16 %v3760, %v3756
      %v4177 = vpack.c.b16 %v3761, %v3757
      %v4178 = vpack.c.b16 %v3762, %v3758
      %v4179 = vpack.c.b16 %v3763, %v3759
      %v4180 = vpack.c.b16 %v3768, %v3764
      %v4181 = vpack.c.b16 %v3769, %v3765
      %v4182 = vpack.c.b16 %v3770, %v3766
      %v4183 = vpack.c.b16 %v3771, %v3767
      %v4184 = vpack.c.b16 %v3776, %v3772
      %v4185 = vpack.c.b16 %v3777, %v3773
      %v4186 = vpack.c.b16 %v3778, %v3774
      %v4187 = vpack.c.b16 %v3779, %v3775
      %v4188 = vpack.c.b16 %v3784, %v3780
      %v4189 = vpack.c.b16 %v3785, %v3781
      %v4190 = vpack.c.b16 %v3786, %v3782
      %v4191 = vpack.c.b16 %v3787, %v3783
      %v4192 = vpack.c.b16 %v3792, %v3788
      %v4193 = vpack.c.b16 %v3793, %v3789
      %v4194 = vpack.c.b16 %v3794, %v3790
      %v4195 = vpack.c.b16 %v3795, %v3791
      %v4196 = vpack.c.b16 %v3800, %v3796
      %v4197 = vpack.c.b16 %v3801, %v3797
      %v4198 = vpack.c.b16 %v3802, %v3798
      %v4199 = vpack.c.b16 %v3803, %v3799
      %v4200 = vpack.c.b16 %v3808, %v3804
      %v4201 = vpack.c.b16 %v3809, %v3805
      %v4202 = vpack.c.b16 %v3810, %v3806
      %v4203 = vpack.c.b16 %v3811, %v3807
      %v4204 = vpack.c.b16 %v3816, %v3812
      %v4205 = vpack.c.b16 %v3817, %v3813
      %v4206 = vpack.c.b16 %v3818, %v3814
      %v4207 = vpack.c.b16 %v3819, %v3815
      %v4208 = vpack.c.b16 %v3824, %v3820
      %v4209 = vpack.c.b16 %v3825, %v3821
      %v4210 = vpack.c.b16 %v3826, %v3822
      %v4211 = vpack.c.b16 %v3827, %v3823
      %v4212 = vpack.c.b16 %v3832, %v3828
      %v4213 = vpack.c.b16 %v3833, %v3829
      %v4214 = vpack.c.b16 %v3834, %v3830
      %v4215 = vpack.c.b16 %v3835, %v3831
      %v4216 = vpack.c.b16 %v3840, %v3836
      %v4217 = vpack.c.b16 %v3841, %v3837
      %v4218 = vpack.c.b16 %v3842, %v3838
      %v4219 = vpack.c.b16 %v3843, %v3839
      %v4220 = vpack.c.b16 %v3848, %v3844
      %v4221 = vpack.c.b16 %v3849, %v3845
      %v4222 = vpack.c.b16 %v3850, %v3846
      %v4223 = vpack.c.b16 %v3851, %v3847
      %v4224 = vpack.c.b16 %v3856, %v3852
      %v4225 = vpack.c.b16 %v3857, %v3853
      %v4226 = vpack.c.b16 %v3858, %v3854
      %v4227 = vpack.c.b16 %v3859, %v3855
      %v4228 = vpack.c.b16 %v3864, %v3860
      %v4229 = vpack.c.b16 %v3865, %v3861
      %v4230 = vpack.c.b16 %v3866, %v3862
      %v4231 = vpack.c.b16 %v3867, %v3863
      %v4232 = vpack.c.b16 %v3872, %v3868
      %v4233 = vpack.c.b16 %v3873, %v3869
      %v4234 = vpack.c.b16 %v3874, %v3870
      %v4235 = vpack.c.b16 %v3875, %v3871
      %v4236 = vpack.c.b16 %v3880, %v3876
      %v4237 = vpack.c.b16 %v3881, %v3877
      %v4238 = vpack.c.b16 %v3882, %v3878
      %v4239 = vpack.c.b16 %v3883, %v3879
      %v4240 = vpack.c.b16 %v3888, %v3884
      %v4241 = vpack.c.b16 %v3889, %v3885
      %v4242 = vpack.c.b16 %v3890, %v3886
      %v4243 = vpack.c.b16 %v3891, %v3887
      %v4244 = vpack.c.b16 %v3896, %v3892
      %v4245 = vpack.c.b16 %v3897, %v3893
      %v4246 = vpack.c.b16 %v3898, %v3894
      %v4247 = vpack.c.b16 %v3899, %v3895
      %v4248 = vpack.c.b16 %v3904, %v3900
      %v4249 = vpack.c.b16 %v3905, %v3901
      %v4250 = vpack.c.b16 %v3906, %v3902
      %v4251 = vpack.c.b16 %v3907, %v3903
      %v4252 = vpack.c.b16 %v3912, %v3908
      %v4253 = vpack.c.b16 %v3913, %v3909
      %v4254 = vpack.c.b16 %v3914, %v3910
      %v4255 = vpack.c.b16 %v3915, %v3911
      %v4256 = vpack.c.b16 %v3920, %v3916
      %v4257 = vpack.c.b16 %v3921, %v3917
      %v4258 = vpack.c.b16 %v3922, %v3918
      %v4259 = vpack.c.b16 %v3923, %v3919
      %v4260 = vpack.c.b16 %v3928, %v3924
      %v4261 = vpack.c.b16 %v3929, %v3925
      %v4262 = vpack.c.b16 %v3930, %v3926
      %v4263 = vpack.c.b16 %v3931, %v3927
      %v4264 = vpack.c.b16 %v3936, %v3932
      %v4265 = vpack.c.b16 %v3937, %v3933
      %v4266 = vpack.c.b16 %v3938, %v3934
      %v4267 = vpack.c.b16 %v3939, %v3935
      %v4268 = vpack.c.b16 %v3944, %v3940
      %v4269 = vpack.c.b16 %v3945, %v3941
      %v4270 = vpack.c.b16 %v3946, %v3942
      %v4271 = vpack.c.b16 %v3947, %v3943
      %v4272 = vpack.c.b16 %v3952, %v3948
      %v4273 = vpack.c.b16 %v3953, %v3949
      %v4274 = vpack.c.b16 %v3954, %v3950
      %v4275 = vpack.c.b16 %v3955, %v3951
      %v4276 = vpack.c.b16 %v3960, %v3956
      %v4277 = vpack.c.b16 %v3961, %v3957
      %v4278 = vpack.c.b16 %v3962, %v3958
      %v4279 = vpack.c.b16 %v3963, %v3959
      %v4280 = vpack.c.b16 %v3968, %v3964
      %v4281 = vpack.c.b16 %v3969, %v3965
      %v4282 = vpack.c.b16 %v3970, %v3966
      %v4283 = vpack.c.b16 %v3971, %v3967
      %v4284 = vpack.c.b16 %v3976, %v3972
      %v4285 = vpack.c.b16 %v3977, %v3973
      %v4286 = vpack.c.b16 %v3978, %v3974
      %v4287 = vpack.c.b16 %v3979, %v3975
      %v4288 = vpack.c.b16 %v3984, %v3980
      %v4289 = vpack.c.b16 %v3985, %v3981
      %v4290 = vpack.c.b16 %v3986, %v3982
      %v4291 = vpack.c.b16 %v3987, %v3983
      %v4292 = vpack.c.b16 %v3992, %v3988
      %v4293 = vpack.c.b16 %v3993, %v3989
      %v4294 = vpack.c.b16 %v3994, %v3990
      %v4295 = vpack.c.b16 %v3995, %v3991
      %v4296 = vpack.c.b16 %v4000, %v3996
      %v4297 = vpack.c.b16 %v4001, %v3997
      %v4298 = vpack.c.b16 %v4002, %v3998
      %v4299 = vpack.c.b16 %v4003, %v3999
      %v4300 = vpack.c.b16 %v4008, %v4004
      %v4301 = vpack.c.b16 %v4009, %v4005
      %v4302 = vpack.c.b16 %v4010, %v4006
      %v4303 = vpack.c.b16 %v4011, %v4007
      %v4304 = vpack.c.b16 %v4016, %v4012
      %v4305 = vpack.c.b16 %v4017, %v4013
      %v4306 = vpack.c.b16 %v4018, %v4014
      %v4307 = vpack.c.b16 %v4019, %v4015
      %v4308 = vpack.c.b16 %v4024, %v4020
      %v4309 = vpack.c.b16 %v4025, %v4021
      %v4310 = vpack.c.b16 %v4026, %v4022
      %v4311 = vpack.c.b16 %v4027, %v4023
      %v4312 = vpack.c.b16 %v4032, %v4028
      %v4313 = vpack.c.b16 %v4033, %v4029
      %v4314 = vpack.c.b16 %v4034, %v4030
      %v4315 = vpack.c.b16 %v4035, %v4031
      %v4316 = vpack.c.b16 %v4040, %v4036
      %v4317 = vpack.c.b16 %v4041, %v4037
      %v4318 = vpack.c.b16 %v4042, %v4038
      %v4319 = vpack.c.b16 %v4043, %v4039
      %v4320 = vpack.c.b16 %v4048, %v4044
      %v4321 = vpack.c.b16 %v4049, %v4045
      %v4322 = vpack.c.b16 %v4050, %v4046
      %v4323 = vpack.c.b16 %v4051, %v4047
      %v4324 = vpack.c.b16 %v4056, %v4052
      %v4325 = vpack.c.b16 %v4057, %v4053
      %v4326 = vpack.c.b16 %v4058, %v4054
      %v4327 = vpack.c.b16 %v4059, %v4055
      %v4328 = vpack.c.b16 %v4064, %v4060
      %v4329 = vpack.c.b16 %v4065, %v4061
      %v4330 = vpack.c.b16 %v4066, %v4062
      %v4331 = vpack.c.b16 %v4067, %v4063
      %v4332 = vpack.c.b16 %v4072, %v4068
      %v4333 = vpack.c.b16 %v4073, %v4069
      %v4334 = vpack.c.b16 %v4074, %v4070
      %v4335 = vpack.c.b16 %v4075, %v4071
      %v4336 = vpack.c.b16 %v4080, %v4076
      %v4337 = vpack.c.b16 %v4081, %v4077
      %v4338 = vpack.c.b16 %v4082, %v4078
      %v4339 = vpack.c.b16 %v4083, %v4079
      %4596 = vmatprep.subr.bf16.mxu0 %v4085
      %4597 = vmatpush1.bf16.msra.mxu0 %v4084
      %4598 = vmatprep.subr.bf16.mxu0 %v4089
      %4599 = vmatpush1.bf16.msra.mxu0 %v4088
      %4600 = vmatprep.subr.bf16.mxu0 %v4093
      %4601 = vmatpush1.bf16.msra.mxu0 %v4092
      %4602 = vmatprep.subr.bf16.mxu0 %v4097
      %4603 = vmatpush1.bf16.msra.mxu0 %v4096
      %4604 = vmatprep.subr.bf16.mxu0 %v4101
      %4605 = vmatpush1.bf16.msra.mxu0 %v4100
      %4606 = vmatprep.subr.bf16.mxu0 %v4105
      %4607 = vmatpush1.bf16.msra.mxu0 %v4104
      %4608 = vmatprep.subr.bf16.mxu0 %v4109
      %4609 = vmatpush1.bf16.msra.mxu0 %v4108
      %4610 = vmatprep.subr.bf16.mxu0 %v4113
      %4611 = vmatpush1.bf16.msra.mxu0 %v4112
      %4612 = vmatprep.subr.bf16.mxu0 %v4117
      %4613 = vmatpush1.bf16.msra.mxu0 %v4116
      %4614 = vmatprep.subr.bf16.mxu0 %v4121
      %4615 = vmatpush1.bf16.msra.mxu0 %v4120
      %4616 = vmatprep.subr.bf16.mxu0 %v4125
      %4617 = vmatpush1.bf16.msra.mxu0 %v4124
      %4618 = vmatprep.subr.bf16.mxu0 %v4129
      %4619 = vmatpush1.bf16.msra.mxu0 %v4128
      %4620 = vmatprep.subr.bf16.mxu0 %v4133
      %4621 = vmatpush1.bf16.msra.mxu0 %v4132
      %4622 = vmatprep.subr.bf16.mxu0 %v4137
      %4623 = vmatpush1.bf16.msra.mxu0 %v4136
      %4624 = vmatprep.subr.bf16.mxu0 %v4141
      %4625 = vmatpush1.bf16.msra.mxu0 %v4140
      %4626 = vmatprep.subr.bf16.mxu0 %v4145
      %4627 = vmatpush1.bf16.msra.mxu0 %v4144
      %4628 = vmatprep.mubr.bf16.mxu0 %v3031
      %4629 = vmatmul.mubr.bf16.gmra.mrb[0].mxu0 %v3030
      %v4630 = vpop.f32.mrb[0].mxu0
      %v4631 = vadd.f32 %v3299, %v4630
      %v4632 = vpop.f32.mrb[0].mxu0
      %v4633 = vadd.f32 %v3303, %v4632
      %v4634 = vpop.f32.mrb[0].mxu0
      %v4635 = vpop.f32.mrb[0].mxu0
      %4636 = vdwg.mxu0
      %4637 = vmatprep.subr.bf16.mxu0 %v4149
      %4638 = vmatpush1.bf16.msra.mxu0 %v4148
      %4639 = vmatprep.subr.bf16.mxu0 %v4153
      %4640 = vmatpush1.bf16.msra.mxu0 %v4152
      %4641 = vmatprep.subr.bf16.mxu0 %v4157
      %4642 = vmatpush1.bf16.msra.mxu0 %v4156
      %4643 = vmatprep.subr.bf16.mxu0 %v4161
      %4644 = vmatpush1.bf16.msra.mxu0 %v4160
      %4645 = vmatprep.subr.bf16.mxu0 %v4165
      %4646 = vmatpush1.bf16.msra.mxu0 %v4164
      %4647 = vmatprep.subr.bf16.mxu0 %v4169
      %4648 = vmatpush1.bf16.msra.mxu0 %v4168
      %4649 = vmatprep.subr.bf16.mxu0 %v4173
      %4650 = vmatpush1.bf16.msra.mxu0 %v4172
      %4651 = vmatprep.subr.bf16.mxu0 %v4177
      %4652 = vmatpush1.bf16.msra.mxu0 %v4176
      %4653 = vmatprep.subr.bf16.mxu0 %v4181
      %4654 = vmatpush1.bf16.msra.mxu0 %v4180
      %4655 = vmatprep.subr.bf16.mxu0 %v4185
      %4656 = vmatpush1.bf16.msra.mxu0 %v4184
      %4657 = vmatprep.subr.bf16.mxu0 %v4189
      %4658 = vmatpush1.bf16.msra.mxu0 %v4188
      %4659 = vmatprep.subr.bf16.mxu0 %v4193
      %4660 = vmatpush1.bf16.msra.mxu0 %v4192
      %4661 = vmatprep.subr.bf16.mxu0 %v4197
      %4662 = vmatpush1.bf16.msra.mxu0 %v4196
      %4663 = vmatprep.subr.bf16.mxu0 %v4201
      %4664 = vmatpush1.bf16.msra.mxu0 %v4200
      %4665 = vmatprep.subr.bf16.mxu0 %v4205
      %4666 = vmatpush1.bf16.msra.mxu0 %v4204
      %4667 = vmatprep.subr.bf16.mxu0 %v4209
      %4668 = vmatpush1.bf16.msra.mxu0 %v4208
      %4669 = vmatprep.mubr.bf16.mxu0 %v3033
      %4670 = vmatmul.mubr.bf16.gmra.mrb[0].mxu0 %v3032
      %v4671 = vpop.f32.mrb[0].mxu0
      %v4672 = vadd.f32 %v4631, %v4671
      %v4673 = vpop.f32.mrb[0].mxu0
      %v4674 = vadd.f32 %v4633, %v4673
      %v4675 = vpop.f32.mrb[0].mxu0
      %v4676 = vpop.f32.mrb[0].mxu0
      %4677 = vdwg.mxu0
      %4678 = vmatprep.subr.bf16.mxu0 %v4213
      %4679 = vmatpush1.bf16.msra.mxu0 %v4212
      %4680 = vmatprep.subr.bf16.mxu0 %v4217
      %4681 = vmatpush1.bf16.msra.mxu0 %v4216
      %4682 = vmatprep.subr.bf16.mxu0 %v4221
      %4683 = vmatpush1.bf16.msra.mxu0 %v4220
      %4684 = vmatprep.subr.bf16.mxu0 %v4225
      %4685 = vmatpush1.bf16.msra.mxu0 %v4224
      %4686 = vmatprep.subr.bf16.mxu0 %v4229
      %4687 = vmatpush1.bf16.msra.mxu0 %v4228
      %4688 = vmatprep.subr.bf16.mxu0 %v4233
      %4689 = vmatpush1.bf16.msra.mxu0 %v4232
      %4690 = vmatprep.subr.bf16.mxu0 %v4237
      %4691 = vmatpush1.bf16.msra.mxu0 %v4236
      %4692 = vmatprep.subr.bf16.mxu0 %v4241
      %4693 = vmatpush1.bf16.msra.mxu0 %v4240
      %4694 = vmatprep.subr.bf16.mxu0 %v4245
      %4695 = vmatpush1.bf16.msra.mxu0 %v4244
      %4696 = vmatprep.subr.bf16.mxu0 %v4249
      %4697 = vmatpush1.bf16.msra.mxu0 %v4248
      %4698 = vmatprep.subr.bf16.mxu0 %v4253
      %4699 = vmatpush1.bf16.msra.mxu0 %v4252
      %4700 = vmatprep.subr.bf16.mxu0 %v4257
      %4701 = vmatpush1.bf16.msra.mxu0 %v4256
      %4702 = vmatprep.subr.bf16.mxu0 %v4261
      %4703 = vmatpush1.bf16.msra.mxu0 %v4260
      %4704 = vmatprep.subr.bf16.mxu0 %v4265
      %4705 = vmatpush1.bf16.msra.mxu0 %v4264
      %4706 = vmatprep.subr.bf16.mxu0 %v4269
      %4707 = vmatpush1.bf16.msra.mxu0 %v4268
      %4708 = vmatprep.subr.bf16.mxu0 %v4273
      %4709 = vmatpush1.bf16.msra.mxu0 %v4272
      %4710 = vmatprep.mubr.bf16.mxu0 %v3035
      %4711 = vmatmul.mubr.bf16.gmra.mrb[0].mxu0 %v3034
      %v4712 = vpop.f32.mrb[0].mxu0
      %v4713 = vadd.f32 %v4672, %v4712
      %v4714 = vpop.f32.mrb[0].mxu0
      %v4715 = vadd.f32 %v4674, %v4714
      %v4716 = vpop.f32.mrb[0].mxu0
      %v4717 = vpop.f32.mrb[0].mxu0
      %4718 = vdwg.mxu0
      %4719 = vmatprep.subr.bf16.mxu0 %v4277
      %4720 = vmatpush1.bf16.msra.mxu0 %v4276
      %4721 = vmatprep.subr.bf16.mxu0 %v4281
      %4722 = vmatpush1.bf16.msra.mxu0 %v4280
      %4723 = vmatprep.subr.bf16.mxu0 %v4285
      %4724 = vmatpush1.bf16.msra.mxu0 %v4284
      %4725 = vmatprep.subr.bf16.mxu0 %v4289
      %4726 = vmatpush1.bf16.msra.mxu0 %v4288
      %4727 = vmatprep.subr.bf16.mxu0 %v4293
      %4728 = vmatpush1.bf16.msra.mxu0 %v4292
      %4729 = vmatprep.subr.bf16.mxu0 %v4297
      %4730 = vmatpush1.bf16.msra.mxu0 %v4296
      %4731 = vmatprep.subr.bf16.mxu0 %v4301
      %4732 = vmatpush1.bf16.msra.mxu0 %v4300
      %4733 = vmatprep.subr.bf16.mxu0 %v4305
      %4734 = vmatpush1.bf16.msra.mxu0 %v4304
      %4735 = vmatprep.subr.bf16.mxu0 %v4309
      %4736 = vmatpush1.bf16.msra.mxu0 %v4308
      %4737 = vmatprep.subr.bf16.mxu0 %v4313
      %4738 = vmatpush1.bf16.msra.mxu0 %v4312
      %4739 = vmatprep.subr.bf16.mxu0 %v4317
      %4740 = vmatpush1.bf16.msra.mxu0 %v4316
      %4741 = vmatprep.subr.bf16.mxu0 %v4321
      %4742 = vmatpush1.bf16.msra.mxu0 %v4320
      %4743 = vmatprep.subr.bf16.mxu0 %v4325
      %4744 = vmatpush1.bf16.msra.mxu0 %v4324
      %4745 = vmatprep.subr.bf16.mxu0 %v4329
      %4746 = vmatpush1.bf16.msra.mxu0 %v4328
      %4747 = vmatprep.subr.bf16.mxu0 %v4333
      %4748 = vmatpush1.bf16.msra.mxu0 %v4332
      %4749 = vmatprep.subr.bf16.mxu0 %v4337
      %4750 = vmatpush1.bf16.msra.mxu0 %v4336
      %4751 = vmatprep.mubr.bf16.mxu0 %v3037
      %4752 = vmatmul.mubr.bf16.gmra.mrb[0].mxu0 %v3036
      %v4753 = vpop.f32.mrb[0].mxu0
      %v4754 = vadd.f32 %v4713, %v4753
      %v4755 = vpop.f32.mrb[0].mxu0
      %v4756 = vadd.f32 %v4715, %v4755
      %v4757 = vpop.f32.mrb[0].mxu0
      %v4758 = vpop.f32.mrb[0].mxu0
      %4759 = vdwg.mxu0
      %4760 = vmatprep.subr.bf16.mxu0 %v4087
      %4761 = vmatpush1.bf16.msra.mxu0 %v4086
      %4762 = vmatprep.subr.bf16.mxu0 %v4091
      %4763 = vmatpush1.bf16.msra.mxu0 %v4090
      %4764 = vmatprep.subr.bf16.mxu0 %v4095
      %4765 = vmatpush1.bf16.msra.mxu0 %v4094
      %4766 = vmatprep.subr.bf16.mxu0 %v4099
      %4767 = vmatpush1.bf16.msra.mxu0 %v4098
      %4768 = vmatprep.subr.bf16.mxu0 %v4103
      %4769 = vmatpush1.bf16.msra.mxu0 %v4102
      %4770 = vmatprep.subr.bf16.mxu0 %v4107
      %4771 = vmatpush1.bf16.msra.mxu0 %v4106
      %4772 = vmatprep.subr.bf16.mxu0 %v4111
      %4773 = vmatpush1.bf16.msra.mxu0 %v4110
      %4774 = vmatprep.subr.bf16.mxu0 %v4115
      %4775 = vmatpush1.bf16.msra.mxu0 %v4114
      %4776 = vmatprep.subr.bf16.mxu0 %v4119
      %4777 = vmatpush1.bf16.msra.mxu0 %v4118
      %4778 = vmatprep.subr.bf16.mxu0 %v4123
      %4779 = vmatpush1.bf16.msra.mxu0 %v4122
      %4780 = vmatprep.subr.bf16.mxu0 %v4127
      %4781 = vmatpush1.bf16.msra.mxu0 %v4126
      %4782 = vmatprep.subr.bf16.mxu0 %v4131
      %4783 = vmatpush1.bf16.msra.mxu0 %v4130
      %4784 = vmatprep.subr.bf16.mxu0 %v4135
      %4785 = vmatpush1.bf16.msra.mxu0 %v4134
      %4786 = vmatprep.subr.bf16.mxu0 %v4139
      %4787 = vmatpush1.bf16.msra.mxu0 %v4138
      %4788 = vmatprep.subr.bf16.mxu0 %v4143
      %4789 = vmatpush1.bf16.msra.mxu0 %v4142
      %4790 = vmatprep.subr.bf16.mxu0 %v4147
      %4791 = vmatpush1.bf16.msra.mxu0 %v4146
      %4792 = vmatprep.mubr.bf16.mxu0 %v3031
      %4793 = vmatmul.mubr.bf16.gmra.mrb[0].mxu0 %v3030
      %v4794 = vpop.f32.mrb[0].mxu0
      %v4795 = vadd.f32 %v3307, %v4794
      %v4796 = vpop.f32.mrb[0].mxu0
      %v4797 = vadd.f32 %v3311, %v4796
      %v4798 = vpop.f32.mrb[0].mxu0
      %v4799 = vpop.f32.mrb[0].mxu0
      %4800 = vdwg.mxu0
      %4801 = vmatprep.subr.bf16.mxu0 %v4151
      %4802 = vmatpush1.bf16.msra.mxu0 %v4150
      %4803 = vmatprep.subr.bf16.mxu0 %v4155
      %4804 = vmatpush1.bf16.msra.mxu0 %v4154
      %4805 = vmatprep.subr.bf16.mxu0 %v4159
      %4806 = vmatpush1.bf16.msra.mxu0 %v4158
      %4807 = vmatprep.subr.bf16.mxu0 %v4163
      %4808 = vmatpush1.bf16.msra.mxu0 %v4162
      %4809 = vmatprep.subr.bf16.mxu0 %v4167
      %4810 = vmatpush1.bf16.msra.mxu0 %v4166
      %4811 = vmatprep.subr.bf16.mxu0 %v4171
      %4812 = vmatpush1.bf16.msra.mxu0 %v4170
      %4813 = vmatprep.subr.bf16.mxu0 %v4175
      %4814 = vmatpush1.bf16.msra.mxu0 %v4174
      %4815 = vmatprep.subr.bf16.mxu0 %v4179
      %4816 = vmatpush1.bf16.msra.mxu0 %v4178
      %4817 = vmatprep.subr.bf16.mxu0 %v4183
      %4818 = vmatpush1.bf16.msra.mxu0 %v4182
      %4819 = vmatprep.subr.bf16.mxu0 %v4187
      %4820 = vmatpush1.bf16.msra.mxu0 %v4186
      %4821 = vmatprep.subr.bf16.mxu0 %v4191
      %4822 = vmatpush1.bf16.msra.mxu0 %v4190
      %4823 = vmatprep.subr.bf16.mxu0 %v4195
      %4824 = vmatpush1.bf16.msra.mxu0 %v4194
      %4825 = vmatprep.subr.bf16.mxu0 %v4199
      %4826 = vmatpush1.bf16.msra.mxu0 %v4198
      %4827 = vmatprep.subr.bf16.mxu0 %v4203
      %4828 = vmatpush1.bf16.msra.mxu0 %v4202
      %4829 = vmatprep.subr.bf16.mxu0 %v4207
      %4830 = vmatpush1.bf16.msra.mxu0 %v4206
      %4831 = vmatprep.subr.bf16.mxu0 %v4211
      %4832 = vmatpush1.bf16.msra.mxu0 %v4210
      %4833 = vmatprep.mubr.bf16.mxu0 %v3033
      %4834 = vmatmul.mubr.bf16.gmra.mrb[0].mxu0 %v3032
      %v4835 = vpop.f32.mrb[0].mxu0
      %v4836 = vadd.f32 %v4795, %v4835
      %v4837 = vpop.f32.mrb[0].mxu0
      %v4838 = vadd.f32 %v4797, %v4837
      %v4839 = vpop.f32.mrb[0].mxu0
      %v4840 = vpop.f32.mrb[0].mxu0
      %4841 = vdwg.mxu0
      %4842 = vmatprep.subr.bf16.mxu0 %v4215
      %4843 = vmatpush1.bf16.msra.mxu0 %v4214
      %4844 = vmatprep.subr.bf16.mxu0 %v4219
      %4845 = vmatpush1.bf16.msra.mxu0 %v4218
      %4846 = vmatprep.subr.bf16.mxu0 %v4223
      %4847 = vmatpush1.bf16.msra.mxu0 %v4222
      %4848 = vmatprep.subr.bf16.mxu0 %v4227
      %4849 = vmatpush1.bf16.msra.mxu0 %v4226
      %4850 = vmatprep.subr.bf16.mxu0 %v4231
      %4851 = vmatpush1.bf16.msra.mxu0 %v4230
      %4852 = vmatprep.subr.bf16.mxu0 %v4235
      %4853 = vmatpush1.bf16.msra.mxu0 %v4234
      %4854 = vmatprep.subr.bf16.mxu0 %v4239
      %4855 = vmatpush1.bf16.msra.mxu0 %v4238
      %4856 = vmatprep.subr.bf16.mxu0 %v4243
      %4857 = vmatpush1.bf16.msra.mxu0 %v4242
      %4858 = vmatprep.subr.bf16.mxu0 %v4247
      %4859 = vmatpush1.bf16.msra.mxu0 %v4246
      %4860 = vmatprep.subr.bf16.mxu0 %v4251
      %4861 = vmatpush1.bf16.msra.mxu0 %v4250
      %4862 = vmatprep.subr.bf16.mxu0 %v4255
      %4863 = vmatpush1.bf16.msra.mxu0 %v4254
      %4864 = vmatprep.subr.bf16.mxu0 %v4259
      %4865 = vmatpush1.bf16.msra.mxu0 %v4258
      %4866 = vmatprep.subr.bf16.mxu0 %v4263
      %4867 = vmatpush1.bf16.msra.mxu0 %v4262
      %4868 = vmatprep.subr.bf16.mxu0 %v4267
      %4869 = vmatpush1.bf16.msra.mxu0 %v4266
      %4870 = vmatprep.subr.bf16.mxu0 %v4271
      %4871 = vmatpush1.bf16.msra.mxu0 %v4270
      %4872 = vmatprep.subr.bf16.mxu0 %v4275
      %4873 = vmatpush1.bf16.msra.mxu0 %v4274
      %4874 = vmatprep.mubr.bf16.mxu0 %v3035
      %4875 = vmatmul.mubr.bf16.gmra.mrb[0].mxu0 %v3034
      %v4876 = vpop.f32.mrb[0].mxu0
      %v4877 = vadd.f32 %v4836, %v4876
      %v4878 = vpop.f32.mrb[0].mxu0
      %v4879 = vadd.f32 %v4838, %v4878
      %v4880 = vpop.f32.mrb[0].mxu0
      %v4881 = vpop.f32.mrb[0].mxu0
      %4882 = vdwg.mxu0
      %4883 = vmatprep.subr.bf16.mxu0 %v4279
      %4884 = vmatpush1.bf16.msra.mxu0 %v4278
      %4885 = vmatprep.subr.bf16.mxu0 %v4283
      %4886 = vmatpush1.bf16.msra.mxu0 %v4282
      %4887 = vmatprep.subr.bf16.mxu0 %v4287
      %4888 = vmatpush1.bf16.msra.mxu0 %v4286
      %4889 = vmatprep.subr.bf16.mxu0 %v4291
      %4890 = vmatpush1.bf16.msra.mxu0 %v4290
      %4891 = vmatprep.subr.bf16.mxu0 %v4295
      %4892 = vmatpush1.bf16.msra.mxu0 %v4294
      %4893 = vmatprep.subr.bf16.mxu0 %v4299
      %4894 = vmatpush1.bf16.msra.mxu0 %v4298
      %4895 = vmatprep.subr.bf16.mxu0 %v4303
      %4896 = vmatpush1.bf16.msra.mxu0 %v4302
      %4897 = vmatprep.subr.bf16.mxu0 %v4307
      %4898 = vmatpush1.bf16.msra.mxu0 %v4306
      %4899 = vmatprep.subr.bf16.mxu0 %v4311
      %4900 = vmatpush1.bf16.msra.mxu0 %v4310
      %4901 = vmatprep.subr.bf16.mxu0 %v4315
      %4902 = vmatpush1.bf16.msra.mxu0 %v4314
      %4903 = vmatprep.subr.bf16.mxu0 %v4319
      %4904 = vmatpush1.bf16.msra.mxu0 %v4318
      %4905 = vmatprep.subr.bf16.mxu0 %v4323
      %4906 = vmatpush1.bf16.msra.mxu0 %v4322
      %4907 = vmatprep.subr.bf16.mxu0 %v4327
      %4908 = vmatpush1.bf16.msra.mxu0 %v4326
      %4909 = vmatprep.subr.bf16.mxu0 %v4331
      %4910 = vmatpush1.bf16.msra.mxu0 %v4330
      %4911 = vmatprep.subr.bf16.mxu0 %v4335
      %4912 = vmatpush1.bf16.msra.mxu0 %v4334
      %4913 = vmatprep.subr.bf16.mxu0 %v4339
      %4914 = vmatpush1.bf16.msra.mxu0 %v4338
      %4915 = vmatprep.mubr.bf16.mxu0 %v3037
      %4916 = vmatmul.mubr.bf16.gmra.mrb[0].mxu0 %v3036
      %v4917 = vpop.f32.mrb[0].mxu0
      %v4918 = vadd.f32 %v4877, %v4917
      %v4919 = vpop.f32.mrb[0].mxu0
      %v4920 = vadd.f32 %v4879, %v4919
      %v4921 = vpop.f32.mrb[0].mxu0
      %v4922 = vpop.f32.mrb[0].mxu0
      %4923 = vdwg.mxu0
      %v4924 = vmax.f32 %v4754, 0.0
      %v4925 = vmax.f32 %v4756, 0.0
      %v4926 = vmax.f32 %v4918, 0.0
      %v4927 = vmax.f32 %v4920, 0.0
      %v4928 = vpack.c.bf16 %v4924, %v4924
      %v4929 = vpack.c.bf16 %v4925, %v4925
      %v4930 = vpack.c.bf16 %v4926, %v4926
      %v4931 = vpack.c.bf16 %v4927, %v4927
      %v4932 = vld [vmem:[#allocation12] sm:$0xf]
      %v4933 = vld [vmem:[#allocation12 + $0x4] sm:$0xf]
      %v4934 = vld [vmem:[#allocation12 + $0x8] sm:$0xf]
      %v4935 = vld [vmem:[#allocation12 + $0xc] sm:$0xf]
      %v4936 = vld [vmem:[#allocation12 + $0x10] sm:$0xf]
      %v4937 = vld [vmem:[#allocation12 + $0x14] sm:$0xf]
      %v4938 = vld [vmem:[#allocation12 + $0x18] sm:$0xf]
      %v4939 = vld [vmem:[#allocation12 + $0x1c] sm:$0xf]
      %v4940 = vld [vmem:[#allocation12 + $0x20] sm:$0xf]
      %v4941 = vld [vmem:[#allocation12 + $0x24] sm:$0xf]
      %v4942 = vld [vmem:[#allocation12 + $0x28] sm:$0xf]
      %v4943 = vld [vmem:[#allocation12 + $0x2c] sm:$0xf]
      %v4944 = vld [vmem:[#allocation12 + $0x30] sm:$0xf]
      %v4945 = vld [vmem:[#allocation12 + $0x34] sm:$0xf]
      %v4946 = vld [vmem:[#allocation12 + $0x38] sm:$0xf]
      %v4947 = vld [vmem:[#allocation12 + $0x3c] sm:$0xf]
      %v4948 = vld [vmem:[#allocation12 + $0x40] sm:$0xf]
      %v4949 = vld [vmem:[#allocation12 + $0x44] sm:$0xf]
      %v4950 = vld [vmem:[#allocation12 + $0x48] sm:$0xf]
      %v4951 = vld [vmem:[#allocation12 + $0x4c] sm:$0xf]
      %v4952 = vld [vmem:[#allocation12 + $0x50] sm:$0xf]
      %v4953 = vld [vmem:[#allocation12 + $0x54] sm:$0xf]
      %v4954 = vld [vmem:[#allocation12 + $0x58] sm:$0xf]
      %v4955 = vld [vmem:[#allocation12 + $0x5c] sm:$0xf]
      %v4956 = vld [vmem:[#allocation12 + $0x60] sm:$0xf]
      %v4957 = vld [vmem:[#allocation12 + $0x64] sm:$0xf]
      %v4958 = vld [vmem:[#allocation12 + $0x68] sm:$0xf]
      %v4959 = vld [vmem:[#allocation12 + $0x6c] sm:$0xf]
      %v4960 = vld [vmem:[#allocation12 + $0x70] sm:$0xf]
      %v4961 = vld [vmem:[#allocation12 + $0x74] sm:$0xf]
      %v4962 = vld [vmem:[#allocation12 + $0x78] sm:$0xf]
      %v4963 = vld [vmem:[#allocation12 + $0x7c] sm:$0xf]
      %v4964 = vld [vmem:[#allocation12 + $0x80] sm:$0xf]
      %v4965 = vld [vmem:[#allocation12 + $0x84] sm:$0xf]
      %v4966 = vld [vmem:[#allocation12 + $0x88] sm:$0xf]
      %v4967 = vld [vmem:[#allocation12 + $0x8c] sm:$0xf]
      %v4968 = vld [vmem:[#allocation12 + $0x90] sm:$0xf]
      %v4969 = vld [vmem:[#allocation12 + $0x94] sm:$0xf]
      %v4970 = vld [vmem:[#allocation12 + $0x98] sm:$0xf]
      %v4971 = vld [vmem:[#allocation12 + $0x9c] sm:$0xf]
      %v4972 = vld [vmem:[#allocation12 + $0xa0] sm:$0xf]
      %v4973 = vld [vmem:[#allocation12 + $0xa4] sm:$0xf]
      %v4974 = vld [vmem:[#allocation12 + $0xa8] sm:$0xf]
      %v4975 = vld [vmem:[#allocation12 + $0xac] sm:$0xf]
      %v4976 = vld [vmem:[#allocation12 + $0xb0] sm:$0xf]
      %v4977 = vld [vmem:[#allocation12 + $0xb4] sm:$0xf]
      %v4978 = vld [vmem:[#allocation12 + $0xb8] sm:$0xf]
      %v4979 = vld [vmem:[#allocation12 + $0xbc] sm:$0xf]
      %v4980 = vld [vmem:[#allocation12 + $0xc0] sm:$0xf]
      %v4981 = vld [vmem:[#allocation12 + $0xc4] sm:$0xf]
      %v4982 = vld [vmem:[#allocation12 + $0xc8] sm:$0xf]
      %v4983 = vld [vmem:[#allocation12 + $0xcc] sm:$0xf]
      %v4984 = vld [vmem:[#allocation12 + $0xd0] sm:$0xf]
      %v4985 = vld [vmem:[#allocation12 + $0xd4] sm:$0xf]
      %v4986 = vld [vmem:[#allocation12 + $0xd8] sm:$0xf]
      %v4987 = vld [vmem:[#allocation12 + $0xdc] sm:$0xf]
      %v4988 = vld [vmem:[#allocation12 + $0xe0] sm:$0xf]
      %v4989 = vld [vmem:[#allocation12 + $0xe4] sm:$0xf]
      %v4990 = vld [vmem:[#allocation12 + $0xe8] sm:$0xf]
      %v4991 = vld [vmem:[#allocation12 + $0xec] sm:$0xf]
      %v4992 = vld [vmem:[#allocation12 + $0xf0] sm:$0xf]
      %v4993 = vld [vmem:[#allocation12 + $0xf4] sm:$0xf]
      %v4994 = vld [vmem:[#allocation12 + $0xf8] sm:$0xf]
      %v4995 = vld [vmem:[#allocation12 + $0xfc] sm:$0xf]
      %v4996 = vld [vmem:[#allocation14] sm:$0x1]
      %v4998 = vlaneseq
      %v4999 = vshrl.u32 %v4998, 7
      %v5000 = vsub.s32 0, %v4999
      %v5001 = vrot.slane %v4996, %v5000
      %v5067 = vunpack.c.l.b16 %v4932
      %v5068 = vunpack.c.l.b16 %v4933
      %v5069 = vunpack.c.l.b16 %v4934
      %v5070 = vunpack.c.l.b16 %v4935
      %v5071 = vunpack.c.l.b16 %v4936
      %v5072 = vunpack.c.l.b16 %v4937
      %v5073 = vunpack.c.l.b16 %v4938
      %v5074 = vunpack.c.l.b16 %v4939
      %v5075 = vunpack.c.l.b16 %v4940
      %v5076 = vunpack.c.l.b16 %v4941
      %v5077 = vunpack.c.l.b16 %v4942
      %v5078 = vunpack.c.l.b16 %v4943
      %v5079 = vunpack.c.l.b16 %v4944
      %v5080 = vunpack.c.l.b16 %v4945
      %v5081 = vunpack.c.l.b16 %v4946
      %v5082 = vunpack.c.l.b16 %v4947
      %v5083 = vunpack.c.l.b16 %v4948
      %v5084 = vunpack.c.l.b16 %v4949
      %v5085 = vunpack.c.l.b16 %v4950
      %v5086 = vunpack.c.l.b16 %v4951
      %v5087 = vunpack.c.l.b16 %v4952
      %v5088 = vunpack.c.l.b16 %v4953
      %v5089 = vunpack.c.l.b16 %v4954
      %v5090 = vunpack.c.l.b16 %v4955
      %v5091 = vunpack.c.l.b16 %v4956
      %v5092 = vunpack.c.l.b16 %v4957
      %v5093 = vunpack.c.l.b16 %v4958
      %v5094 = vunpack.c.l.b16 %v4959
      %v5095 = vunpack.c.l.b16 %v4960
      %v5096 = vunpack.c.l.b16 %v4961
      %v5097 = vunpack.c.l.b16 %v4962
      %v5098 = vunpack.c.l.b16 %v4963
      %v5099 = vunpack.c.l.b16 %v4964
      %v5100 = vunpack.c.l.b16 %v4965
      %v5101 = vunpack.c.l.b16 %v4966
      %v5102 = vunpack.c.l.b16 %v4967
      %v5103 = vunpack.c.l.b16 %v4968
      %v5104 = vunpack.c.l.b16 %v4969
      %v5105 = vunpack.c.l.b16 %v4970
      %v5106 = vunpack.c.l.b16 %v4971
      %v5107 = vunpack.c.l.b16 %v4972
      %v5108 = vunpack.c.l.b16 %v4973
      %v5109 = vunpack.c.l.b16 %v4974
      %v5110 = vunpack.c.l.b16 %v4975
      %v5111 = vunpack.c.l.b16 %v4976
      %v5112 = vunpack.c.l.b16 %v4977
      %v5113 = vunpack.c.l.b16 %v4978
      %v5114 = vunpack.c.l.b16 %v4979
      %v5115 = vunpack.c.l.b16 %v4980
      %v5116 = vunpack.c.l.b16 %v4981
      %v5117 = vunpack.c.l.b16 %v4982
      %v5118 = vunpack.c.l.b16 %v4983
      %v5119 = vunpack.c.l.b16 %v4984
      %v5120 = vunpack.c.l.b16 %v4985
      %v5121 = vunpack.c.l.b16 %v4986
      %v5122 = vunpack.c.l.b16 %v4987
      %v5123 = vunpack.c.l.b16 %v4988
      %v5124 = vunpack.c.l.b16 %v4989
      %v5125 = vunpack.c.l.b16 %v4990
      %v5126 = vunpack.c.l.b16 %v4991
      %v5127 = vunpack.c.l.b16 %v4992
      %v5128 = vunpack.c.l.b16 %v4993
      %v5129 = vunpack.c.l.b16 %v4994
      %v5130 = vunpack.c.l.b16 %v4995
      %v5131 = vpack.c.b16 %v5068, %v5067
      %v5132 = vpack.c.b16 %v5070, %v5069
      %v5133 = vpack.c.b16 %v5072, %v5071
      %v5134 = vpack.c.b16 %v5074, %v5073
      %v5135 = vpack.c.b16 %v5076, %v5075
      %v5136 = vpack.c.b16 %v5078, %v5077
      %v5137 = vpack.c.b16 %v5080, %v5079
      %v5138 = vpack.c.b16 %v5082, %v5081
      %v5139 = vpack.c.b16 %v5084, %v5083
      %v5140 = vpack.c.b16 %v5086, %v5085
      %v5141 = vpack.c.b16 %v5088, %v5087
      %v5142 = vpack.c.b16 %v5090, %v5089
      %v5143 = vpack.c.b16 %v5092, %v5091
      %v5144 = vpack.c.b16 %v5094, %v5093
      %v5145 = vpack.c.b16 %v5096, %v5095
      %v5146 = vpack.c.b16 %v5098, %v5097
      %v5147 = vpack.c.b16 %v5100, %v5099
      %v5148 = vpack.c.b16 %v5102, %v5101
      %v5149 = vpack.c.b16 %v5104, %v5103
      %v5150 = vpack.c.b16 %v5106, %v5105
      %v5151 = vpack.c.b16 %v5108, %v5107
      %v5152 = vpack.c.b16 %v5110, %v5109
      %v5153 = vpack.c.b16 %v5112, %v5111
      %v5154 = vpack.c.b16 %v5114, %v5113
      %v5155 = vpack.c.b16 %v5116, %v5115
      %v5156 = vpack.c.b16 %v5118, %v5117
      %v5157 = vpack.c.b16 %v5120, %v5119
      %v5158 = vpack.c.b16 %v5122, %v5121
      %v5159 = vpack.c.b16 %v5124, %v5123
      %v5160 = vpack.c.b16 %v5126, %v5125
      %v5161 = vpack.c.b16 %v5128, %v5127
      %v5162 = vpack.c.b16 %v5130, %v5129
      %5195 = vmatprep.subr.bf16.mxu0 0
      %5196 = vmatpush1.bf16.msra.mxu0 %v5131
      %5197 = vmatprep.subr.bf16.mxu0 0
      %5198 = vmatpush1.bf16.msra.mxu0 %v5132
      %5199 = vmatprep.subr.bf16.mxu0 0
      %5200 = vmatpush1.bf16.msra.mxu0 %v5133
      %5201 = vmatprep.subr.bf16.mxu0 0
      %5202 = vmatpush1.bf16.msra.mxu0 %v5134
      %5203 = vmatprep.subr.bf16.mxu0 0
      %5204 = vmatpush1.bf16.msra.mxu0 %v5135
      %5205 = vmatprep.subr.bf16.mxu0 0
      %5206 = vmatpush1.bf16.msra.mxu0 %v5136
      %5207 = vmatprep.subr.bf16.mxu0 0
      %5208 = vmatpush1.bf16.msra.mxu0 %v5137
      %5209 = vmatprep.subr.bf16.mxu0 0
      %5210 = vmatpush1.bf16.msra.mxu0 %v5138
      %5211 = vmatprep.subr.bf16.mxu0 0
      %5212 = vmatpush1.bf16.msra.mxu0 %v5139
      %5213 = vmatprep.subr.bf16.mxu0 0
      %5214 = vmatpush1.bf16.msra.mxu0 %v5140
      %5215 = vmatprep.subr.bf16.mxu0 0
      %5216 = vmatpush1.bf16.msra.mxu0 %v5141
      %5217 = vmatprep.subr.bf16.mxu0 0
      %5218 = vmatpush1.bf16.msra.mxu0 %v5142
      %5219 = vmatprep.subr.bf16.mxu0 0
      %5220 = vmatpush1.bf16.msra.mxu0 %v5143
      %5221 = vmatprep.subr.bf16.mxu0 0
      %5222 = vmatpush1.bf16.msra.mxu0 %v5144
      %5223 = vmatprep.subr.bf16.mxu0 0
      %5224 = vmatpush1.bf16.msra.mxu0 %v5145
      %5225 = vmatprep.subr.bf16.mxu0 0
      %5226 = vmatpush1.bf16.msra.mxu0 %v5146
      %5227 = vmatprep.mubr.bf16.mxu0 %v4929
      %5228 = vmatmul.mubr.bf16.gmra.mrb[0].mxu0 %v4928
      %v5229 = vpop.f32.mrb[0].mxu0
      %v5230 = vadd.f32 %v5001, %v5229
      %v5231 = vpop.f32.mrb[0].mxu0
      %v5232 = vpop.f32.mrb[0].mxu0
      %v5233 = vpop.f32.mrb[0].mxu0
      %5234 = vdwg.mxu0
      %5235 = vmatprep.subr.bf16.mxu0 0
      %5236 = vmatpush1.bf16.msra.mxu0 %v5147
      %5237 = vmatprep.subr.bf16.mxu0 0
      %5238 = vmatpush1.bf16.msra.mxu0 %v5148
      %5239 = vmatprep.subr.bf16.mxu0 0
      %5240 = vmatpush1.bf16.msra.mxu0 %v5149
      %5241 = vmatprep.subr.bf16.mxu0 0
      %5242 = vmatpush1.bf16.msra.mxu0 %v5150
      %5243 = vmatprep.subr.bf16.mxu0 0
      %5244 = vmatpush1.bf16.msra.mxu0 %v5151
      %5245 = vmatprep.subr.bf16.mxu0 0
      %5246 = vmatpush1.bf16.msra.mxu0 %v5152
      %5247 = vmatprep.subr.bf16.mxu0 0
      %5248 = vmatpush1.bf16.msra.mxu0 %v5153
      %5249 = vmatprep.subr.bf16.mxu0 0
      %5250 = vmatpush1.bf16.msra.mxu0 %v5154
      %5251 = vmatprep.subr.bf16.mxu0 0
      %5252 = vmatpush1.bf16.msra.mxu0 %v5155
      %5253 = vmatprep.subr.bf16.mxu0 0
      %5254 = vmatpush1.bf16.msra.mxu0 %v5156
      %5255 = vmatprep.subr.bf16.mxu0 0
      %5256 = vmatpush1.bf16.msra.mxu0 %v5157
      %5257 = vmatprep.subr.bf16.mxu0 0
      %5258 = vmatpush1.bf16.msra.mxu0 %v5158
      %5259 = vmatprep.subr.bf16.mxu0 0
      %5260 = vmatpush1.bf16.msra.mxu0 %v5159
      %5261 = vmatprep.subr.bf16.mxu0 0
      %5262 = vmatpush1.bf16.msra.mxu0 %v5160
      %5263 = vmatprep.subr.bf16.mxu0 0
      %5264 = vmatpush1.bf16.msra.mxu0 %v5161
      %5265 = vmatprep.subr.bf16.mxu0 0
      %5266 = vmatpush1.bf16.msra.mxu0 %v5162
      %5267 = vmatprep.mubr.bf16.mxu0 %v4931
      %5268 = vmatmul.mubr.bf16.gmra.mrb[0].mxu0 %v4930
      %v5269 = vpop.f32.mrb[0].mxu0
      %v5270 = vadd.f32 %v5230, %v5269
      %v5271 = vpop.f32.mrb[0].mxu0
      %v5272 = vpop.f32.mrb[0].mxu0
      %v5273 = vpop.f32.mrb[0].mxu0
      %5274 = vdwg.mxu0
      %v5275 = vlaneseq
      %v5276 = vand.u32 %v5275, 127
      %vm5277 = vcmp.lt.s32.totalorder %v5276, 4
      %v5278 = vsel %vm5277, %v5270, -1e+30
      %5279 = vmax.xlane.f32.xlu0 %v5278
      %v5280 = vpop.xlane.xlu0 %5279
      %v5281 = vsub.f32 %v5278, %v5280
      %v5282 = vmul.f32 %v5281, 1.442695
      %v5283 = vpow.pop %v5282
      %5284 = vadd.xlane.f32.xlu0 %v5283
      %v5285 = vpop.xlane.xlu0 %5284
      %v5286 = vrcp.pop %v5285
      %v5287 = vmul.f32 %v5283, %v5286
      %5288 = vst [vmem:[#allocation15] sm:$0xff] %v5287
    $region65: #{tpu_custom_call.1} parent=1 // pred_fallthru
      _
    // Predicated region
    $region66: #{tpu_custom_call.1} parent=1 // pred_check
      _
    $region67: #{tpu_custom_call.1} parent=1 // pred_check_branch
      %5290 = sbr.rel (0) target = $region69
    $region68: #{tpu_custom_call.1} parent=1 // pred_region
      %s5292 = ssub.s32 128, 128
      %5293 = vsyncadd [#allocation5], %s5292
      %s5295 = sshll.u32 [#allocation15], 4
      %s5296 = int_to_ptr.vmem [resolvable:$true] %s5295
      %5298 = dma.vmem_to_hbm [thread:$0]  %s5296, 128, %s7, [#allocation5]
    $region69: #{tpu_custom_call.1} parent=1 // pred_fallthru
      _
    // Predicated region
    $region70: #{tpu_custom_call.1} parent=1 // pred_check
      _
    $region71: #{tpu_custom_call.1} parent=1 // pred_check_branch
      %5300 = sbr.rel (0) target = $region73
    $region72: #{tpu_custom_call.1} parent=1 // pred_region
      %5301 = dma.done [#allocation5], 128
    $region73: #{tpu_custom_call.1} parent=1 // pred_fallthru
      _
    %5302 = vsyncpa [#allocation4], 1
    %5303 = vsyncpa [#allocation7], 1
    %5304 = vsyncpa [#allocation10], 1
    %5305 = vsyncpa [#allocation13], 1
    %5306 = vsyncpa [#allocation5], 1

</llo_original>
